<compile_context>
chip_gen: v7x
topology: tpu7x:2x2x1
jax: 0.10.0
libtpu: 0.0.40
codegen_flags: <defaults>
</compile_context>

<pallas_src>
import jax
import jax.numpy as jnp
from jax.experimental import pallas as pl
from jax.experimental.pallas import tpu as pltpu


def make_relative_position_index(wh, ww):
    """Same construction as the PyTorch module's registered buffer."""
    coords_h = jnp.arange(wh)
    coords_w = jnp.arange(ww)
    coords = jnp.stack(jnp.meshgrid(coords_h, coords_w, indexing="ij"))  # (2,wh,ww)
    coords_flat = coords.reshape(2, -1)                                   # (2,N)
    rel = coords_flat[:, :, None] - coords_flat[:, None, :]               # (2,N,N)
    rel = jnp.transpose(rel, (1, 2, 0))                                   # (N,N,2)
    rel = rel.at[:, :, 0].add(wh - 1)
    rel = rel.at[:, :, 1].add(ww - 1)
    rel = rel.at[:, :, 0].multiply(2 * ww - 1)
    return rel.sum(-1)                                                    # (N,N)


def window_attention(x, w_qkv, b_qkv, w_proj, b_proj, rel_bias_table,
                     rel_pos_index, num_heads, mask=None, qk_scale=None,
                     batch_tile=None):
    """x: (B_, N, C).  w_qkv: (C, 3C) (= torch weight.T, 3C axis = (3, nH, hd)).
    w_proj: (C, C) (= torch weight.T).  mask: (nW, N, N) or None."""
    B_, N, C = x.shape
    hd = C // num_heads
    scale = qk_scale if qk_scale is not None else hd ** (-0.5)

    # Relative position bias gathered once in the wrapper: (nH, N, N).
    rel_bias = rel_bias_table[rel_pos_index.reshape(-1)]
    rel_bias = rel_bias.reshape(N, N, num_heads)
    rel_bias = jnp.transpose(rel_bias, (2, 0, 1)).astype(jnp.float32)

    # Per-window additive mask broadcast to the flattened (B * nW) batch.
    if mask is None:
        mask_full = jnp.zeros((B_, N, N), jnp.float32)
    else:
        nW = mask.shape[0]
        mask_full = jnp.tile(mask.astype(jnp.float32), (B_ // nW, 1, 1))

    # Batch tile: amortize per-grid-step overhead while keeping >= 2 grid steps
    # so the "parallel" batch axis can be sharded across TensorCores (v7x).
    if batch_tile is None:
        batch_tile = max((t for t in range(1, B_ + 1)
                          if B_ % t == 0 and B_ // t >= 2), default=B_)
    TB = batch_tile
    if (TB * N) % 8 != 0:      # keep the sublane dim (8,128)-rule friendly
        TB = B_                # full-extent block is always legal
    grid = (B_ // TB,)

    def kernel(x_ref, wqkv_ref, bqkv_ref, wproj_ref, bproj_ref,
               bias_ref, mask_ref, o_ref):
        x2 = x_ref[...]                                    # (TB*N, C) lane-dense slab
        # Fused q/k/v projection: one MXU matmul for all three.
        qkv = jnp.dot(x2, wqkv_ref[...],
                      preferred_element_type=jnp.float32) + bqkv_ref[...]
        bias = bias_ref[...]                               # (nH, N, N)
        msk = mask_ref[...]                                # (TB, N, N)

        head_outs = []
        for h in range(num_heads):                         # static unrolled loop
            qh = qkv[:, h * hd:(h + 1) * hd].reshape(TB, N, hd) * scale
            kh = qkv[:, C + h * hd:C + (h + 1) * hd].reshape(TB, N, hd)
            vh = qkv[:, 2 * C + h * hd:2 * C + (h + 1) * hd].reshape(TB, N, hd)

            a = jnp.einsum("bnd,bmd->bnm", qh, kh,
                           preferred_element_type=jnp.float32)   # (TB, N, N)
            a = a + bias[h] + msk
            a = a - jnp.max(a, axis=-1, keepdims=True)           # stable softmax
            p = jnp.exp(a)
            p = p / jnp.sum(p, axis=-1, keepdims=True)
            oh = jnp.einsum("bnm,bmd->bnd", p, vh,
                            preferred_element_type=jnp.float32)  # (TB, N, hd)
            head_outs.append(oh.reshape(TB * N, hd))

        ctx = jnp.concatenate(head_outs, axis=-1)          # (TB*N, C)
        out = jnp.dot(ctx, wproj_ref[...],
                      preferred_element_type=jnp.float32) + bproj_ref[...]
        o_ref[...] = out.astype(o_ref.dtype)

    x2 = x.reshape(B_ * N, C).astype(jnp.float32)
    wq = w_qkv.astype(jnp.float32)
    bq = b_qkv.reshape(1, 3 * C).astype(jnp.float32)
    wp = w_proj.astype(jnp.float32)
    bp = b_proj.reshape(1, C).astype(jnp.float32)

    out2 = pl.pallas_call(
        kernel,
        out_shape=jax.ShapeDtypeStruct((B_ * N, C), jnp.float32),
        grid_spec=pltpu.PrefetchScalarGridSpec(
            num_scalar_prefetch=0,
            grid=grid,
            in_specs=[
                pl.BlockSpec((TB * N, C), lambda i: (i, 0)),          # x slab
                pl.BlockSpec((C, 3 * C), lambda i: (0, 0)),           # w_qkv
                pl.BlockSpec((1, 3 * C), lambda i: (0, 0)),           # b_qkv
                pl.BlockSpec((C, C), lambda i: (0, 0)),               # w_proj
                pl.BlockSpec((1, C), lambda i: (0, 0)),               # b_proj
                pl.BlockSpec((num_heads, N, N), lambda i: (0, 0, 0)), # rel bias
                pl.BlockSpec((TB, N, N), lambda i: (i, 0, 0)),        # mask
            ],
            out_specs=pl.BlockSpec((TB * N, C), lambda i: (i, 0)),
        ),
        compiler_params=pltpu.CompilerParams(
            dimension_semantics=("parallel",)),
    )(x2, wq, bq, wp, bp, rel_bias, mask_full)

    return out2.reshape(B_, N, C)


def window_attention_ref(x, w_qkv, b_qkv, w_proj, b_proj, rel_bias_table,
                         rel_pos_index, num_heads, mask=None, qk_scale=None):
    """Pure-JAX reference matching the PyTorch forward semantics."""
    B_, N, C = x.shape
    hd = C // num_heads
    scale = qk_scale if qk_scale is not None else hd ** (-0.5)

    qkv = (x @ w_qkv + b_qkv).reshape(B_, N, 3, num_heads, hd)
    qkv = jnp.transpose(qkv, (2, 0, 3, 1, 4))
    q, k, v = qkv[0] * scale, qkv[1], qkv[2]

    attn = jnp.einsum("bhnd,bhmd->bhnm", q, k)
    rel_bias = rel_bias_table[rel_pos_index.reshape(-1)].reshape(N, N, num_heads)
    attn = attn + jnp.transpose(rel_bias, (2, 0, 1))[None]
    if mask is not None:
        nW = mask.shape[0]
        attn = attn.reshape(B_ // nW, nW, num_heads, N, N) + mask[None, :, None]
        attn = attn.reshape(B_, num_heads, N, N)
    attn = jax.nn.softmax(attn, axis=-1)

    out = jnp.einsum("bhnm,bhmd->bhnd", attn, v)
    out = jnp.transpose(out, (0, 2, 1, 3)).reshape(B_, N, C)
    return out @ w_proj + b_proj


if __name__ == "__main__":
    # Small shapes implied by the forward: windows of 4x4 (N=16), dim=32,
    # 4 heads, batch=2 images x 4 windows -> B_ = 8.
    B, nW = 2, 4
    Wh, Ww = 4, 4
    N = Wh * Ww
    C = 32
    num_heads = 4
    B_ = B * nW

    key = jax.random.PRNGKey(0)
    kx, kwq, kbq, kwp, kbp, ktab, kmsk = jax.random.split(key, 7)

    x = jax.random.normal(kx, (B_, N, C), jnp.float32)
    w_qkv = jax.random.normal(kwq, (C, 3 * C), jnp.float32) * (C ** -0.5)
    b_qkv = jax.random.normal(kbq, (3 * C,), jnp.float32) * 0.02
    w_proj = jax.random.normal(kwp, (C, C), jnp.float32) * (C ** -0.5)
    b_proj = jax.random.normal(kbp, (C,), jnp.float32) * 0.02
    table = jax.random.normal(
        ktab, ((2 * Wh - 1) * (2 * Ww - 1), num_heads), jnp.float32) * 0.02

    rel_idx = make_relative_position_index(Wh, Ww)

    # Swin-style 0 / -100 shifted-window mask (per-window group pattern).
    group = jax.random.randint(kmsk, (nW, N), 0, 3)
    mask = jnp.where(group[:, :, None] == group[:, None, :], 0.0, -100.0)
    mask = mask.astype(jnp.float32)

    # --- no-mask path ---
    out0 = jax.block_until_ready(window_attention(
        x, w_qkv, b_qkv, w_proj, b_proj, table, rel_idx, num_heads, mask=None))
    ref0 = jax.block_until_ready(window_attention_ref(
        x, w_qkv, b_qkv, w_proj, b_proj, table, rel_idx, num_heads, mask=None))
    assert out0.shape == (B_, N, C)
    assert jnp.allclose(out0, ref0, rtol=2e-3, atol=2e-3), "mismatch (no mask)"

    # --- masked (shifted-window) path ---
    out1 = jax.block_until_ready(window_attention(
        x, w_qkv, b_qkv, w_proj, b_proj, table, rel_idx, num_heads, mask=mask))
    ref1 = jax.block_until_ready(window_attention_ref(
        x, w_qkv, b_qkv, w_proj, b_proj, table, rel_idx, num_heads, mask=mask))
    assert jnp.allclose(out1, ref1, rtol=2e-3, atol=2e-3), "mismatch (masked)"

    print("KERNEL_OK")
</pallas_src>

<mosaic_0001>
module attributes {stable_mosaic.version = 11 : i64} {
  func.func @kernel(%arg0: i32, %arg1: memref<64x32xf32, #tpu.memory_space<vmem>>, %arg2: memref<32x96xf32, #tpu.memory_space<vmem>>, %arg3: memref<1x96xf32, #tpu.memory_space<vmem>>, %arg4: memref<32x32xf32, #tpu.memory_space<vmem>>, %arg5: memref<1x32xf32, #tpu.memory_space<vmem>>, %arg6: memref<4x16x16xf32, #tpu.memory_space<vmem>>, %arg7: memref<4x16x16xf32, #tpu.memory_space<vmem>>, %arg8: memref<64x32xf32, #tpu.memory_space<vmem>>) attributes {dimension_semantics = [#tpu.dimension_semantics<parallel>], iteration_bounds = array<i64: 2>, scalar_prefetch = 0 : i64, scratch_operands = 0 : i64, tpu.core_type = #tpu.core_type<tc>, window_params = [{transform_indices = @transform_0, window_bounds = array<i64: 64, 32>}, {pipeline_mode = #tpu.pipeline_mode<synchronous>, transform_indices = @transform_1, window_bounds = array<i64: 32, 96>}, {pipeline_mode = #tpu.pipeline_mode<synchronous>, transform_indices = @transform_2, window_bounds = array<i64: 1, 96>}, {pipeline_mode = #tpu.pipeline_mode<synchronous>, transform_indices = @transform_3, window_bounds = array<i64: 32, 32>}, {pipeline_mode = #tpu.pipeline_mode<synchronous>, transform_indices = @transform_4, window_bounds = array<i64: 1, 32>}, {pipeline_mode = #tpu.pipeline_mode<synchronous>, transform_indices = @transform_5, window_bounds = array<i64: 4, 16, 16>}, {transform_indices = @transform_6, window_bounds = array<i64: 4, 16, 16>}, {transform_indices = @transform_7, window_bounds = array<i64: 64, 32>}]} {
    %c0 = arith.constant 0 : index
    %c0_0 = arith.constant 0 : index
    %0 = vector.load %arg1[%c0, %c0_0] : memref<64x32xf32, #tpu.memory_space<vmem>>, vector<64x32xf32>
    %c0_1 = arith.constant 0 : index
    %c0_2 = arith.constant 0 : index
    %1 = vector.load %arg2[%c0_1, %c0_2] : memref<32x96xf32, #tpu.memory_space<vmem>>, vector<32x96xf32>
    %cst = arith.constant dense<0.000000e+00> : vector<64x96xf32>
    %2 = tpu.matmul %0, %1, %cst {dimension_numbers = #tpu.dot_dimension_numbers<[1], [0], [0], [1], [0, 0, 1, 1], [], []>} : vector<64x32xf32>, vector<32x96xf32>, vector<64x96xf32> -> vector<64x96xf32>
    %c0_3 = arith.constant 0 : index
    %c0_4 = arith.constant 0 : index
    %3 = vector.load %arg3[%c0_3, %c0_4] : memref<1x96xf32, #tpu.memory_space<vmem>>, vector<1x96xf32>
    %4 = vector.broadcast %3 : vector<1x96xf32> to vector<64x96xf32>
    %5 = arith.addf %2, %4 : vector<64x96xf32>
    %c0_5 = arith.constant 0 : index
    %c0_6 = arith.constant 0 : index
    %c0_7 = arith.constant 0 : index
    %6 = vector.load %arg6[%c0_5, %c0_6, %c0_7] : memref<4x16x16xf32, #tpu.memory_space<vmem>>, vector<4x16x16xf32>
    %c0_8 = arith.constant 0 : index
    %c0_9 = arith.constant 0 : index
    %c0_10 = arith.constant 0 : index
    %7 = vector.load %arg7[%c0_8, %c0_9, %c0_10] : memref<4x16x16xf32, #tpu.memory_space<vmem>>, vector<4x16x16xf32>
    %8 = vector.extract_strided_slice %5 {offsets = [0, 0], sizes = [64, 8], strides = [1, 1]} : vector<64x96xf32> to vector<64x8xf32>
    %9 = vector.shape_cast %8 : vector<64x8xf32> to vector<4x16x8xf32>
    %cst_11 = arith.constant 0.353553385 : f32
    %10 = vector.broadcast %cst_11 : f32 to vector<4x16x8xf32>
    %11 = arith.mulf %9, %10 : vector<4x16x8xf32>
    %12 = vector.extract_strided_slice %5 {offsets = [0, 32], sizes = [64, 8], strides = [1, 1]} : vector<64x96xf32> to vector<64x8xf32>
    %13 = vector.shape_cast %12 : vector<64x8xf32> to vector<4x16x8xf32>
    %14 = vector.extract_strided_slice %5 {offsets = [0, 64], sizes = [64, 8], strides = [1, 1]} : vector<64x96xf32> to vector<64x8xf32>
    %15 = vector.shape_cast %14 : vector<64x8xf32> to vector<4x16x8xf32>
    "tpu.trace_start"() <{level = 10 : i32, message = "bnd,bmd->bnm"}> : () -> ()
    %cst_12 = arith.constant dense<0.000000e+00> : vector<4x16x16xf32>
    %16 = tpu.matmul %11, %13, %cst_12 {dimension_numbers = #tpu.dot_dimension_numbers<[2], [2], [1], [1], [0, 0, 0, 1, 1, 1], [0], [0]>} : vector<4x16x8xf32>, vector<4x16x8xf32>, vector<4x16x16xf32> -> vector<4x16x16xf32>
    "tpu.trace_stop"() : () -> ()
    %17 = vector.extract_strided_slice %6 {offsets = [0, 0, 0], sizes = [1, 16, 16], strides = [1, 1, 1]} : vector<4x16x16xf32> to vector<1x16x16xf32>
    %18 = vector.shape_cast %17 : vector<1x16x16xf32> to vector<16x16xf32>
    %19 = vector.shape_cast %18 : vector<16x16xf32> to vector<1x16x16xf32>
    %20 = vector.broadcast %19 : vector<1x16x16xf32> to vector<4x16x16xf32>
    %21 = arith.addf %16, %20 : vector<4x16x16xf32>
    %22 = arith.addf %21, %7 : vector<4x16x16xf32>
    %cst_13 = arith.constant dense<0xFF800000> : vector<4x16xf32>
    %23 = vector.multi_reduction <maximumf>, %22, %cst_13 [2] : vector<4x16x16xf32> to vector<4x16xf32>
    %24 = vector.shape_cast %23 : vector<4x16xf32> to vector<4x16x1xf32>
    %25 = vector.broadcast %24 : vector<4x16x1xf32> to vector<4x16x16xf32>
    %26 = arith.subf %22, %25 : vector<4x16x16xf32>
    %27 = math.exp %26 : vector<4x16x16xf32>
    %cst_14 = arith.constant dense<0.000000e+00> : vector<4x16xf32>
    %28 = vector.multi_reduction <add>, %27, %cst_14 [2] : vector<4x16x16xf32> to vector<4x16xf32>
    %29 = vector.shape_cast %28 : vector<4x16xf32> to vector<4x16x1xf32>
    %30 = vector.broadcast %29 : vector<4x16x1xf32> to vector<4x16x16xf32>
    %31 = arith.divf %27, %30 : vector<4x16x16xf32>
    "tpu.trace_start"() <{level = 10 : i32, message = "bnm,bmd->bnd"}> : () -> ()
    %cst_15 = arith.constant dense<0.000000e+00> : vector<4x16x8xf32>
    %32 = tpu.matmul %31, %15, %cst_15 {dimension_numbers = #tpu.dot_dimension_numbers<[2], [1], [1], [2], [0, 0, 0, 1, 1, 2], [0], [0]>} : vector<4x16x16xf32>, vector<4x16x8xf32>, vector<4x16x8xf32> -> vector<4x16x8xf32>
    "tpu.trace_stop"() : () -> ()
    %33 = vector.shape_cast %32 : vector<4x16x8xf32> to vector<64x8xf32>
    %34 = vector.extract_strided_slice %5 {offsets = [0, 8], sizes = [64, 8], strides = [1, 1]} : vector<64x96xf32> to vector<64x8xf32>
    %35 = vector.shape_cast %34 : vector<64x8xf32> to vector<4x16x8xf32>
    %cst_16 = arith.constant 0.353553385 : f32
    %36 = vector.broadcast %cst_16 : f32 to vector<4x16x8xf32>
    %37 = arith.mulf %35, %36 : vector<4x16x8xf32>
    %38 = vector.extract_strided_slice %5 {offsets = [0, 40], sizes = [64, 8], strides = [1, 1]} : vector<64x96xf32> to vector<64x8xf32>
    %39 = vector.shape_cast %38 : vector<64x8xf32> to vector<4x16x8xf32>
    %40 = vector.extract_strided_slice %5 {offsets = [0, 72], sizes = [64, 8], strides = [1, 1]} : vector<64x96xf32> to vector<64x8xf32>
    %41 = vector.shape_cast %40 : vector<64x8xf32> to vector<4x16x8xf32>
    "tpu.trace_start"() <{level = 10 : i32, message = "bnd,bmd->bnm"}> : () -> ()
    %cst_17 = arith.constant dense<0.000000e+00> : vector<4x16x16xf32>
    %42 = tpu.matmul %37, %39, %cst_17 {dimension_numbers = #tpu.dot_dimension_numbers<[2], [2], [1], [1], [0, 0, 0, 1, 1, 1], [0], [0]>} : vector<4x16x8xf32>, vector<4x16x8xf32>, vector<4x16x16xf32> -> vector<4x16x16xf32>
    "tpu.trace_stop"() : () -> ()
    %43 = vector.extract_strided_slice %6 {offsets = [1, 0, 0], sizes = [1, 16, 16], strides = [1, 1, 1]} : vector<4x16x16xf32> to vector<1x16x16xf32>
    %44 = vector.shape_cast %43 : vector<1x16x16xf32> to vector<16x16xf32>
    %45 = vector.shape_cast %44 : vector<16x16xf32> to vector<1x16x16xf32>
    %46 = vector.broadcast %45 : vector<1x16x16xf32> to vector<4x16x16xf32>
    %47 = arith.addf %42, %46 : vector<4x16x16xf32>
    %48 = arith.addf %47, %7 : vector<4x16x16xf32>
    %cst_18 = arith.constant dense<0xFF800000> : vector<4x16xf32>
    %49 = vector.multi_reduction <maximumf>, %48, %cst_18 [2] : vector<4x16x16xf32> to vector<4x16xf32>
    %50 = vector.shape_cast %49 : vector<4x16xf32> to vector<4x16x1xf32>
    %51 = vector.broadcast %50 : vector<4x16x1xf32> to vector<4x16x16xf32>
    %52 = arith.subf %48, %51 : vector<4x16x16xf32>
    %53 = math.exp %52 : vector<4x16x16xf32>
    %cst_19 = arith.constant dense<0.000000e+00> : vector<4x16xf32>
    %54 = vector.multi_reduction <add>, %53, %cst_19 [2] : vector<4x16x16xf32> to vector<4x16xf32>
    %55 = vector.shape_cast %54 : vector<4x16xf32> to vector<4x16x1xf32>
    %56 = vector.broadcast %55 : vector<4x16x1xf32> to vector<4x16x16xf32>
    %57 = arith.divf %53, %56 : vector<4x16x16xf32>
    "tpu.trace_start"() <{level = 10 : i32, message = "bnm,bmd->bnd"}> : () -> ()
    %cst_20 = arith.constant dense<0.000000e+00> : vector<4x16x8xf32>
    %58 = tpu.matmul %57, %41, %cst_20 {dimension_numbers = #tpu.dot_dimension_numbers<[2], [1], [1], [2], [0, 0, 0, 1, 1, 2], [0], [0]>} : vector<4x16x16xf32>, vector<4x16x8xf32>, vector<4x16x8xf32> -> vector<4x16x8xf32>
    "tpu.trace_stop"() : () -> ()
    %59 = vector.shape_cast %58 : vector<4x16x8xf32> to vector<64x8xf32>
    %60 = vector.extract_strided_slice %5 {offsets = [0, 16], sizes = [64, 8], strides = [1, 1]} : vector<64x96xf32> to vector<64x8xf32>
    %61 = vector.shape_cast %60 : vector<64x8xf32> to vector<4x16x8xf32>
    %cst_21 = arith.constant 0.353553385 : f32
    %62 = vector.broadcast %cst_21 : f32 to vector<4x16x8xf32>
    %63 = arith.mulf %61, %62 : vector<4x16x8xf32>
    %64 = vector.extract_strided_slice %5 {offsets = [0, 48], sizes = [64, 8], strides = [1, 1]} : vector<64x96xf32> to vector<64x8xf32>
    %65 = vector.shape_cast %64 : vector<64x8xf32> to vector<4x16x8xf32>
    %66 = vector.extract_strided_slice %5 {offsets = [0, 80], sizes = [64, 8], strides = [1, 1]} : vector<64x96xf32> to vector<64x8xf32>
    %67 = vector.shape_cast %66 : vector<64x8xf32> to vector<4x16x8xf32>
    "tpu.trace_start"() <{level = 10 : i32, message = "bnd,bmd->bnm"}> : () -> ()
    %cst_22 = arith.constant dense<0.000000e+00> : vector<4x16x16xf32>
    %68 = tpu.matmul %63, %65, %cst_22 {dimension_numbers = #tpu.dot_dimension_numbers<[2], [2], [1], [1], [0, 0, 0, 1, 1, 1], [0], [0]>} : vector<4x16x8xf32>, vector<4x16x8xf32>, vector<4x16x16xf32> -> vector<4x16x16xf32>
    "tpu.trace_stop"() : () -> ()
    %69 = vector.extract_strided_slice %6 {offsets = [2, 0, 0], sizes = [1, 16, 16], strides = [1, 1, 1]} : vector<4x16x16xf32> to vector<1x16x16xf32>
    %70 = vector.shape_cast %69 : vector<1x16x16xf32> to vector<16x16xf32>
    %71 = vector.shape_cast %70 : vector<16x16xf32> to vector<1x16x16xf32>
    %72 = vector.broadcast %71 : vector<1x16x16xf32> to vector<4x16x16xf32>
    %73 = arith.addf %68, %72 : vector<4x16x16xf32>
    %74 = arith.addf %73, %7 : vector<4x16x16xf32>
    %cst_23 = arith.constant dense<0xFF800000> : vector<4x16xf32>
    %75 = vector.multi_reduction <maximumf>, %74, %cst_23 [2] : vector<4x16x16xf32> to vector<4x16xf32>
    %76 = vector.shape_cast %75 : vector<4x16xf32> to vector<4x16x1xf32>
    %77 = vector.broadcast %76 : vector<4x16x1xf32> to vector<4x16x16xf32>
    %78 = arith.subf %74, %77 : vector<4x16x16xf32>
    %79 = math.exp %78 : vector<4x16x16xf32>
    %cst_24 = arith.constant dense<0.000000e+00> : vector<4x16xf32>
    %80 = vector.multi_reduction <add>, %79, %cst_24 [2] : vector<4x16x16xf32> to vector<4x16xf32>
    %81 = vector.shape_cast %80 : vector<4x16xf32> to vector<4x16x1xf32>
    %82 = vector.broadcast %81 : vector<4x16x1xf32> to vector<4x16x16xf32>
    %83 = arith.divf %79, %82 : vector<4x16x16xf32>
    "tpu.trace_start"() <{level = 10 : i32, message = "bnm,bmd->bnd"}> : () -> ()
    %cst_25 = arith.constant dense<0.000000e+00> : vector<4x16x8xf32>
    %84 = tpu.matmul %83, %67, %cst_25 {dimension_numbers = #tpu.dot_dimension_numbers<[2], [1], [1], [2], [0, 0, 0, 1, 1, 2], [0], [0]>} : vector<4x16x16xf32>, vector<4x16x8xf32>, vector<4x16x8xf32> -> vector<4x16x8xf32>
    "tpu.trace_stop"() : () -> ()
    %85 = vector.shape_cast %84 : vector<4x16x8xf32> to vector<64x8xf32>
    %86 = vector.extract_strided_slice %5 {offsets = [0, 24], sizes = [64, 8], strides = [1, 1]} : vector<64x96xf32> to vector<64x8xf32>
    %87 = vector.shape_cast %86 : vector<64x8xf32> to vector<4x16x8xf32>
    %cst_26 = arith.constant 0.353553385 : f32
    %88 = vector.broadcast %cst_26 : f32 to vector<4x16x8xf32>
    %89 = arith.mulf %87, %88 : vector<4x16x8xf32>
    %90 = vector.extract_strided_slice %5 {offsets = [0, 56], sizes = [64, 8], strides = [1, 1]} : vector<64x96xf32> to vector<64x8xf32>
    %91 = vector.shape_cast %90 : vector<64x8xf32> to vector<4x16x8xf32>
    %92 = vector.extract_strided_slice %5 {offsets = [0, 88], sizes = [64, 8], strides = [1, 1]} : vector<64x96xf32> to vector<64x8xf32>
    %93 = vector.shape_cast %92 : vector<64x8xf32> to vector<4x16x8xf32>
    "tpu.trace_start"() <{level = 10 : i32, message = "bnd,bmd->bnm"}> : () -> ()
    %cst_27 = arith.constant dense<0.000000e+00> : vector<4x16x16xf32>
    %94 = tpu.matmul %89, %91, %cst_27 {dimension_numbers = #tpu.dot_dimension_numbers<[2], [2], [1], [1], [0, 0, 0, 1, 1, 1], [0], [0]>} : vector<4x16x8xf32>, vector<4x16x8xf32>, vector<4x16x16xf32> -> vector<4x16x16xf32>
    "tpu.trace_stop"() : () -> ()
    %95 = vector.extract_strided_slice %6 {offsets = [3, 0, 0], sizes = [1, 16, 16], strides = [1, 1, 1]} : vector<4x16x16xf32> to vector<1x16x16xf32>
    %96 = vector.shape_cast %95 : vector<1x16x16xf32> to vector<16x16xf32>
    %97 = vector.shape_cast %96 : vector<16x16xf32> to vector<1x16x16xf32>
    %98 = vector.broadcast %97 : vector<1x16x16xf32> to vector<4x16x16xf32>
    %99 = arith.addf %94, %98 : vector<4x16x16xf32>
    %100 = arith.addf %99, %7 : vector<4x16x16xf32>
    %cst_28 = arith.constant dense<0xFF800000> : vector<4x16xf32>
    %101 = vector.multi_reduction <maximumf>, %100, %cst_28 [2] : vector<4x16x16xf32> to vector<4x16xf32>
    %102 = vector.shape_cast %101 : vector<4x16xf32> to vector<4x16x1xf32>
    %103 = vector.broadcast %102 : vector<4x16x1xf32> to vector<4x16x16xf32>
    %104 = arith.subf %100, %103 : vector<4x16x16xf32>
    %105 = math.exp %104 : vector<4x16x16xf32>
    %cst_29 = arith.constant dense<0.000000e+00> : vector<4x16xf32>
    %106 = vector.multi_reduction <add>, %105, %cst_29 [2] : vector<4x16x16xf32> to vector<4x16xf32>
    %107 = vector.shape_cast %106 : vector<4x16xf32> to vector<4x16x1xf32>
    %108 = vector.broadcast %107 : vector<4x16x1xf32> to vector<4x16x16xf32>
    %109 = arith.divf %105, %108 : vector<4x16x16xf32>
    "tpu.trace_start"() <{level = 10 : i32, message = "bnm,bmd->bnd"}> : () -> ()
    %cst_30 = arith.constant dense<0.000000e+00> : vector<4x16x8xf32>
    %110 = tpu.matmul %109, %93, %cst_30 {dimension_numbers = #tpu.dot_dimension_numbers<[2], [1], [1], [2], [0, 0, 0, 1, 1, 2], [0], [0]>} : vector<4x16x16xf32>, vector<4x16x8xf32>, vector<4x16x8xf32> -> vector<4x16x8xf32>
    "tpu.trace_stop"() : () -> ()
    %111 = vector.shape_cast %110 : vector<4x16x8xf32> to vector<64x8xf32>
    %112 = tpu.concatenate %33, %59, %85, %111 in 1 : vector<64x8xf32>, vector<64x8xf32>, vector<64x8xf32>, vector<64x8xf32> -> vector<64x32xf32>
    %c0_31 = arith.constant 0 : index
    %c0_32 = arith.constant 0 : index
    %113 = vector.load %arg4[%c0_31, %c0_32] : memref<32x32xf32, #tpu.memory_space<vmem>>, vector<32x32xf32>
    %cst_33 = arith.constant dense<0.000000e+00> : vector<64x32xf32>
    %114 = tpu.matmul %112, %113, %cst_33 {dimension_numbers = #tpu.dot_dimension_numbers<[1], [0], [0], [1], [0, 0, 1, 1], [], []>} : vector<64x32xf32>, vector<32x32xf32>, vector<64x32xf32> -> vector<64x32xf32>
    %c0_34 = arith.constant 0 : index
    %c0_35 = arith.constant 0 : index
    %115 = vector.load %arg5[%c0_34, %c0_35] : memref<1x32xf32, #tpu.memory_space<vmem>>, vector<1x32xf32>
    %116 = vector.broadcast %115 : vector<1x32xf32> to vector<64x32xf32>
    %117 = arith.addf %114, %116 : vector<64x32xf32>
    %c0_36 = arith.constant 0 : index
    %c0_37 = arith.constant 0 : index
    %118 = vector.load %arg8[%c0_36, %c0_37] : memref<64x32xf32, #tpu.memory_space<vmem>>, vector<64x32xf32>
    tpu.vector_store %arg8[%c0_36, %c0_37], %117 {strides = array<i32>} : memref<64x32xf32, #tpu.memory_space<vmem>>, vector<64x32xf32>,
    return
  }
  func.func @transform_0(%arg0: i32) -> (i32, i32) {
    %c0_i32 = arith.constant 0 : i32
    %c0_i32_0 = arith.constant 0 : i32
    return %arg0, %c0_i32 : i32, i32
  }
  func.func @transform_1(%arg0: i32) -> (i32, i32) {
    %c0_i32 = arith.constant 0 : i32
    %c0_i32_0 = arith.constant 0 : i32
    %c0_i32_1 = arith.constant 0 : i32
    return %c0_i32, %c0_i32_0 : i32, i32
  }
  func.func @transform_2(%arg0: i32) -> (i32, i32) {
    %c0_i32 = arith.constant 0 : i32
    %c0_i32_0 = arith.constant 0 : i32
    %c0_i32_1 = arith.constant 0 : i32
    return %c0_i32, %c0_i32_0 : i32, i32
  }
  func.func @transform_3(%arg0: i32) -> (i32, i32) {
    %c0_i32 = arith.constant 0 : i32
    %c0_i32_0 = arith.constant 0 : i32
    %c0_i32_1 = arith.constant 0 : i32
    return %c0_i32, %c0_i32_0 : i32, i32
  }
  func.func @transform_4(%arg0: i32) -> (i32, i32) {
    %c0_i32 = arith.constant 0 : i32
    %c0_i32_0 = arith.constant 0 : i32
    %c0_i32_1 = arith.constant 0 : i32
    return %c0_i32, %c0_i32_0 : i32, i32
  }
  func.func @transform_5(%arg0: i32) -> (i32, i32, i32) {
    %c0_i32 = arith.constant 0 : i32
    %c0_i32_0 = arith.constant 0 : i32
    %c0_i32_1 = arith.constant 0 : i32
    %c0_i32_2 = arith.constant 0 : i32
    return %c0_i32, %c0_i32_0, %c0_i32_1 : i32, i32, i32
  }
  func.func @transform_6(%arg0: i32) -> (i32, i32, i32) {
    %c0_i32 = arith.constant 0 : i32
    %c0_i32_0 = arith.constant 0 : i32
    %c0_i32_1 = arith.constant 0 : i32
    return %arg0, %c0_i32, %c0_i32_0 : i32, i32, i32
  }
  func.func @transform_7(%arg0: i32) -> (i32, i32) {
    %c0_i32 = arith.constant 0 : i32
    %c0_i32_0 = arith.constant 0 : i32
    return %arg0, %c0_i32 : i32, i32
  }
}

</mosaic_0001>

<llo_original>
// kernel: tpu_custom_call.1
$region0: #{tpu_custom_call.1}
  #allocation0 [shape = 'u32[]', space=smem, size = 0x4, offset = 0x4, fixed_abs, tag = 'smem constant byte address 0x4 - core index']
  #allocation1 [shape = 'u32[144,128]{1,0:T(1,128)}', space=vmem, size = 0x12000, scoped, tag = 'internal scratch']
  %s0 = inlined_call_operand.vmem [shape: f32[128,32], index: 0, kind: input, shape index: {}]
  %s1 = inlined_call_operand.vmem [shape: f32[32,96], index: 1, kind: input, shape index: {}]
  %s2 = inlined_call_operand.vmem [shape: f32[1,96], index: 2, kind: input, shape index: {}]
  %s3 = inlined_call_operand.hbm [shape: f32[32,32], index: 3, kind: input, shape index: {}]
  %s4 = inlined_call_operand.vmem [shape: f32[1,32], index: 4, kind: input, shape index: {}]
  %s5 = inlined_call_operand.hbm [shape: f32[4,16,16], index: 5, kind: input, shape index: {}]
  %s6 = inlined_call_operand.vmem [shape: f32[8,16,16], index: 6, kind: input, shape index: {}]
  %s7 = inlined_call_operand.vmem [shape: f32[128,32], index: 7, kind: output, shape index: {}]
  %s8 = sld [smem:[#allocation0]]
  $region69: #{tpu_custom_call.1} parent=0
    _
  %s10 = ssub.s32 1, %s8
  %s11 = scalar_select 0, %s10, %s8
  $region1: #{tpu_custom_call.1} parent=0
    #allocation2 [shape = 'u8[16384]{0}', space=vmem, size = 0x4000, scoped, tag = 'input window, operand 3, single buffered']
    #allocation3 [shape = 's32[2]{0}', space=sflag, size = 0x8, scoped, tag = 'scoped memory for tpu_custom_call.1']
    #allocation4 [shape = 'u8[32768]{0}', space=vmem, size = 0x8000, scoped, tag = 'input window, operand 5, single buffered']
    #allocation5 [shape = 's32[1]{0}', space=sflag, size = 0x4, scoped, tag = 'scoped memory for tpu_custom_call.1']
    %12 = vsyncpa [#allocation3], 0
    %13 = vsyncpa [#allocation5], 0
    loop: start=0, step=1, limit=4
    $region2: #{tpu_custom_call.1} parent=1 // loop_pre_header
      _
    $region3: #{tpu_custom_call.1} parent=1 // loop_header
      %s15 = sphi 0, %s19
      %p16 = scmp.ge.s32.totalorder %s15, 4
      %s25 = sphi 0, %s27
      %s28 = sphi 0, %s25
      %s29 = sphi 0, %s28
      %s45 = sphi 0, %s29
      %s49 = sphi 0, %s49
      %s51 = sphi 0, %s49
      %s52 = sphi 0, %s51
      %s66 = sphi 0, %s52
      %s70 = sphi 0, %s70
      %s72 = sphi 0, %s70
      %s73 = sphi 0, %s72
      %s87 = sphi 0, %s73
      %s91 = sphi 0, %s91
      %s93 = sphi 0, %s91
      %s94 = sphi 0, %s93
      %s108 = sphi 0, %s94
      %s112 = sphi 0, %s112
      %s114 = sphi 0, %s112
      %s115 = sphi 0, %s114
      %s129 = sphi 0, %s115
      %s133 = sphi 0, %s133
      %s135 = sphi 0, %s133
      %s136 = sphi 0, %s135
      %s150 = sphi 0, %s136
      %s156 = sphi 0, %s158
      %s159 = sphi 0, %s156
      %s160 = sphi 0, %s159
      %s176 = sphi 0, %s160
      %s182 = sphi 0, %s184
      %s185 = sphi 0, %s182
      %s186 = sphi 0, %s185
      %s202 = sphi 0, %s186
    $region4: #{tpu_custom_call.1} parent=1 // loop_header_branch
      %18 = sbr.rel (%p16) target = $region8
    $region5: #{tpu_custom_call.1} parent=1 // loop_body
      %s20 = ssub.s32 %s15, 1
      %s21 = ssub.s32 %s15, 2
      %s22 = sadd.s32 %s15, 1
      %s23 = ssub.s32 %s15, %s22
      %p24 = scmp.eq.s32.totalorder %s23, 0
      %s26 = sadd.s32 %s25, 1
      %s27 = scalar_select %p24, %s25, %s26
      %p30 = pneg %p24
      %p31 = scmp.eq.s32.totalorder %s15, 1
      %p32 = por %p30, %p31
      %p33 = scmp.ne.s32.totalorder %s25, %s28
      %p34 = scmp.eq.s32.totalorder %s15, 0
      %p35 = por %p33, %p34
      %p36 = scmp.ne.s32.totalorder %s25, %s28
      %p37 = scmp.eq.s32.totalorder %s20, 1
      %p38 = por %p36, %p37
      %p39 = scmp.ne.s32.totalorder %s28, %s29
      %p40 = scmp.eq.s32.totalorder %s20, 0
      %p41 = por %p39, %p40
      %p42 = scmp.ne.s32.totalorder %s28, %s29
      %p43 = scmp.eq.s32.totalorder %s21, 1
      %p44 = por %p42, %p43
      %p46 = scmp.ne.s32.totalorder %s29, %s45
      %p47 = scmp.eq.s32.totalorder %s21, 0
      %p48 = por %p46, %p47
      %s50 = sadd.s32 %s49, 1
      %p53 = scmp.eq.s32.totalorder %s15, 1
      %p54 = scmp.ne.s32.totalorder %s49, %s51
      %p55 = scmp.eq.s32.totalorder %s15, 0
      %p56 = por %p54, %p55
      %p57 = scmp.ne.s32.totalorder %s49, %s51
      %p58 = scmp.eq.s32.totalorder %s20, 1
      %p59 = por %p57, %p58
      %p60 = scmp.ne.s32.totalorder %s51, %s52
      %p61 = scmp.eq.s32.totalorder %s20, 0
      %p62 = por %p60, %p61
      %p63 = scmp.ne.s32.totalorder %s51, %s52
      %p64 = scmp.eq.s32.totalorder %s21, 1
      %p65 = por %p63, %p64
      %p67 = scmp.ne.s32.totalorder %s52, %s66
      %p68 = scmp.eq.s32.totalorder %s21, 0
      %p69 = por %p67, %p68
      %s71 = sadd.s32 %s70, 1
      %p74 = scmp.eq.s32.totalorder %s15, 1
      %p75 = scmp.ne.s32.totalorder %s70, %s72
      %p76 = scmp.eq.s32.totalorder %s15, 0
      %p77 = por %p75, %p76
      %p78 = scmp.ne.s32.totalorder %s70, %s72
      %p79 = scmp.eq.s32.totalorder %s20, 1
      %p80 = por %p78, %p79
      %p81 = scmp.ne.s32.totalorder %s72, %s73
      %p82 = scmp.eq.s32.totalorder %s20, 0
      %p83 = por %p81, %p82
      %p84 = scmp.ne.s32.totalorder %s72, %s73
      %p85 = scmp.eq.s32.totalorder %s21, 1
      %p86 = por %p84, %p85
      %p88 = scmp.ne.s32.totalorder %s73, %s87
      %p89 = scmp.eq.s32.totalorder %s21, 0
      %p90 = por %p88, %p89
      %s92 = sadd.s32 %s91, 1
      %p95 = scmp.eq.s32.totalorder %s15, 1
      %p96 = scmp.ne.s32.totalorder %s91, %s93
      %p97 = scmp.eq.s32.totalorder %s15, 0
      %p98 = por %p96, %p97
      %p99 = scmp.ne.s32.totalorder %s91, %s93
      %p100 = scmp.eq.s32.totalorder %s20, 1
      %p101 = por %p99, %p100
      %p102 = scmp.ne.s32.totalorder %s93, %s94
      %p103 = scmp.eq.s32.totalorder %s20, 0
      %p104 = por %p102, %p103
      %p105 = scmp.ne.s32.totalorder %s93, %s94
      %p106 = scmp.eq.s32.totalorder %s21, 1
      %p107 = por %p105, %p106
      %p109 = scmp.ne.s32.totalorder %s94, %s108
      %p110 = scmp.eq.s32.totalorder %s21, 0
      %p111 = por %p109, %p110
      %s113 = sadd.s32 %s112, 1
      %p116 = scmp.eq.s32.totalorder %s15, 1
      %p117 = scmp.ne.s32.totalorder %s112, %s114
      %p118 = scmp.eq.s32.totalorder %s15, 0
      %p119 = por %p117, %p118
      %p120 = scmp.ne.s32.totalorder %s112, %s114
      %p121 = scmp.eq.s32.totalorder %s20, 1
      %p122 = por %p120, %p121
      %p123 = scmp.ne.s32.totalorder %s114, %s115
      %p124 = scmp.eq.s32.totalorder %s20, 0
      %p125 = por %p123, %p124
      %p126 = scmp.ne.s32.totalorder %s114, %s115
      %p127 = scmp.eq.s32.totalorder %s21, 1
      %p128 = por %p126, %p127
      %p130 = scmp.ne.s32.totalorder %s115, %s129
      %p131 = scmp.eq.s32.totalorder %s21, 0
      %p132 = por %p130, %p131
      %s134 = sadd.s32 %s133, 1
      %p137 = scmp.eq.s32.totalorder %s15, 1
      %p138 = scmp.ne.s32.totalorder %s133, %s135
      %p139 = scmp.eq.s32.totalorder %s15, 0
      %p140 = por %p138, %p139
      %p141 = scmp.ne.s32.totalorder %s133, %s135
      %p142 = scmp.eq.s32.totalorder %s20, 1
      %p143 = por %p141, %p142
      %p144 = scmp.ne.s32.totalorder %s135, %s136
      %p145 = scmp.eq.s32.totalorder %s20, 0
      %p146 = por %p144, %p145
      %p147 = scmp.ne.s32.totalorder %s135, %s136
      %p148 = scmp.eq.s32.totalorder %s21, 1
      %p149 = por %p147, %p148
      %p151 = scmp.ne.s32.totalorder %s136, %s150
      %p152 = scmp.eq.s32.totalorder %s21, 0
      %p153 = por %p151, %p152
      %s154 = ssub.s32 %s15, %s22
      %p155 = scmp.eq.s32.totalorder %s154, 0
      %s157 = sadd.s32 %s156, 1
      %s158 = scalar_select %p155, %s156, %s157
      %p161 = pneg %p155
      %p162 = scmp.eq.s32.totalorder %s15, 1
      %p163 = por %p161, %p162
      %p164 = scmp.ne.s32.totalorder %s156, %s159
      %p165 = scmp.eq.s32.totalorder %s15, 0
      %p166 = por %p164, %p165
      %p167 = scmp.ne.s32.totalorder %s156, %s159
      %p168 = scmp.eq.s32.totalorder %s20, 1
      %p169 = por %p167, %p168
      %p170 = scmp.ne.s32.totalorder %s159, %s160
      %p171 = scmp.eq.s32.totalorder %s20, 0
      %p172 = por %p170, %p171
      %p173 = scmp.ne.s32.totalorder %s159, %s160
      %p174 = scmp.eq.s32.totalorder %s21, 1
      %p175 = por %p173, %p174
      %p177 = scmp.ne.s32.totalorder %s160, %s176
      %p178 = scmp.eq.s32.totalorder %s21, 0
      %p179 = por %p177, %p178
      %s180 = ssub.s32 %s15, %s22
      %p181 = scmp.eq.s32.totalorder %s180, 0
      %s183 = sadd.s32 %s182, 1
      %s184 = scalar_select %p181, %s182, %s183
      %p187 = pneg %p181
      %p188 = scmp.eq.s32.totalorder %s15, 1
      %p189 = por %p187, %p188
      %p190 = scmp.ne.s32.totalorder %s182, %s185
      %p191 = scmp.eq.s32.totalorder %s15, 0
      %p192 = por %p190, %p191
      %p193 = scmp.ne.s32.totalorder %s182, %s185
      %p194 = scmp.eq.s32.totalorder %s20, 1
      %p195 = por %p193, %p194
      %p196 = scmp.ne.s32.totalorder %s185, %s186
      %p197 = scmp.eq.s32.totalorder %s20, 0
      %p198 = por %p196, %p197
      %p199 = scmp.ne.s32.totalorder %s185, %s186
      %p200 = scmp.eq.s32.totalorder %s21, 1
      %p201 = por %p199, %p200
      %p203 = scmp.ne.s32.totalorder %s186, %s202
      %p204 = scmp.eq.s32.totalorder %s21, 0
      %p205 = por %p203, %p204
      %p206 = scmp.le.s32.totalorder 1, %s15
      %p207 = scmp.lt.s32.totalorder %s15, 3
      %p208 = pnand %p206, %p207
      %p209 = pneg %p208
      // Predicated region
      $region9: #{tpu_custom_call.1} parent=5 // pred_check
        _
      $region10: #{tpu_custom_call.1} parent=5 // pred_check_branch
        %211 = sbr.rel (%p208) target = $region12
      $region11: #{tpu_custom_call.1} parent=5 // pred_region
        %s212 = ssub.s32 %s15, 1
        // Predicated region
        $region13: #{tpu_custom_call.1} parent=11 // pred_check
          %p213 = pneg %p62
        $region14: #{tpu_custom_call.1} parent=11 // pred_check_branch
          %215 = sbr.rel (%p213) target = $region16
        $region15: #{tpu_custom_call.1} parent=11 // pred_region
          _
        $region16: #{tpu_custom_call.1} parent=11 // pred_fallthru
          _
        // Predicated region
        $region17: #{tpu_custom_call.1} parent=11 // pred_check
          %p216 = pneg %p83
        $region18: #{tpu_custom_call.1} parent=11 // pred_check_branch
          %218 = sbr.rel (%p216) target = $region20
        $region19: #{tpu_custom_call.1} parent=11 // pred_region
          _
        $region20: #{tpu_custom_call.1} parent=11 // pred_fallthru
          _
        // Predicated region
        $region21: #{tpu_custom_call.1} parent=11 // pred_check
          %p219 = pneg %p104
        $region22: #{tpu_custom_call.1} parent=11 // pred_check_branch
          %221 = sbr.rel (%p219) target = $region24
        $region23: #{tpu_custom_call.1} parent=11 // pred_region
          %s223 = ssub.s32 512, 512
          %224 = vsyncadd [#allocation3], %s223
          %s225 = sshll.u32 [#allocation2], 4
          %s226 = int_to_ptr.vmem [resolvable:$true] %s225
          %231 = dma.hbm_to_vmem [thread:$0]  %s3, 512, %s226, [#allocation3], 128, 128, 8
        $region24: #{tpu_custom_call.1} parent=11 // pred_fallthru
          _
        // Predicated region
        $region25: #{tpu_custom_call.1} parent=11 // pred_check
          %p232 = pneg %p125
        $region26: #{tpu_custom_call.1} parent=11 // pred_check_branch
          %234 = sbr.rel (%p232) target = $region28
        $region27: #{tpu_custom_call.1} parent=11 // pred_region
          _
        $region28: #{tpu_custom_call.1} parent=11 // pred_fallthru
          _
        // Predicated region
        $region29: #{tpu_custom_call.1} parent=11 // pred_check
          %p235 = pneg %p146
        $region30: #{tpu_custom_call.1} parent=11 // pred_check_branch
          %237 = sbr.rel (%p235) target = $region32
        $region31: #{tpu_custom_call.1} parent=11 // pred_region
          %s239 = ssub.s32 1024, 1024
          %240 = vsyncadd [#allocation5], %s239
          %s241 = sshll.u32 [#allocation4], 4
          %s242 = int_to_ptr.vmem [resolvable:$true] %s241
          %247 = dma.hbm_to_vmem [thread:$0]  %s5, 1024, %s242, [#allocation5], 128, 128, 8
        $region32: #{tpu_custom_call.1} parent=11 // pred_fallthru
          _
      $region12: #{tpu_custom_call.1} parent=5 // pred_fallthru
        _
      %p248 = scmp.lt.s32.totalorder %s15, 2
      // Predicated region
      $region33: #{tpu_custom_call.1} parent=5 // pred_check
        %p249 = pneg %p248
      $region34: #{tpu_custom_call.1} parent=5 // pred_check_branch
        %251 = sbr.rel (%p249) target = $region36
      $region35: #{tpu_custom_call.1} parent=5 // pred_region
        // Predicated region
        $region37: #{tpu_custom_call.1} parent=35 // pred_check
          %p252 = pneg %p35
        $region38: #{tpu_custom_call.1} parent=35 // pred_check_branch
          %254 = sbr.rel (%p252) target = $region40
        $region39: #{tpu_custom_call.1} parent=35 // pred_region
          %s255 = smul.u32 8, %s15
          %p256 = scmp.lt.s32.totalorder %s255, 15
          %s257 = scalar_select %p256, %s255, 15
          %s258 = smul.addr %s257, 8
          %s259 = scalar_lea.vmem %s0, %s258
          %s260 = smul.u32 8, %s15
        $region40: #{tpu_custom_call.1} parent=35 // pred_fallthru
          _
        // Predicated region
        $region41: #{tpu_custom_call.1} parent=35 // pred_check
          %p261 = pneg %p166
        $region42: #{tpu_custom_call.1} parent=35 // pred_check_branch
          %263 = sbr.rel (%p261) target = $region44
        $region43: #{tpu_custom_call.1} parent=35 // pred_region
          %s264 = smul.u32 4, %s15
          %p265 = scmp.lt.s32.totalorder %s264, 7
          %s266 = scalar_select %p265, %s264, 7
          %s267 = smul.addr %s266, 2
          %s268 = smul.addr %s267, 8
          %s269 = scalar_lea.vmem %s6, %s268
          %s270 = smul.u32 4, %s15
        $region44: #{tpu_custom_call.1} parent=35 // pred_fallthru
          _
      $region36: #{tpu_custom_call.1} parent=5 // pred_fallthru
        _
      %p271 = scmp.le.s32.totalorder 1, %s15
      %p272 = scmp.lt.s32.totalorder %s15, 3
      %p273 = pnand %p271, %p272
      %p274 = pneg %p273
      // Predicated region
      $region45: #{tpu_custom_call.1} parent=5 // pred_check
        _
      $region46: #{tpu_custom_call.1} parent=5 // pred_check_branch
        %276 = sbr.rel (%p273) target = $region48
      $region47: #{tpu_custom_call.1} parent=5 // pred_region
        %s277 = ssub.s32 %s15, 1
        // Predicated region
        $region49: #{tpu_custom_call.1} parent=47 // pred_check
          %p278 = pneg %p104
        $region50: #{tpu_custom_call.1} parent=47 // pred_check_branch
          %280 = sbr.rel (%p278) target = $region52
        $region51: #{tpu_custom_call.1} parent=47 // pred_region
          %281 = dma.done [#allocation3], 512
        $region52: #{tpu_custom_call.1} parent=47 // pred_fallthru
          _
        // Predicated region
        $region53: #{tpu_custom_call.1} parent=47 // pred_check
          %p282 = pneg %p146
        $region54: #{tpu_custom_call.1} parent=47 // pred_check_branch
          %284 = sbr.rel (%p282) target = $region56
        $region55: #{tpu_custom_call.1} parent=47 // pred_region
          %285 = dma.done [#allocation5], 1024
        $region56: #{tpu_custom_call.1} parent=47 // pred_fallthru
          _
        %s286 = smul.u32 8, %s20
        %p287 = scmp.lt.s32.totalorder %s286, 15
        %s288 = scalar_select %p287, %s286, 15
        %s289 = smul.addr %s288, 8
        %s290 = scalar_lea.vmem %s0, %s289
        %p291 = pneg %p41
        %p292 = pneg %p38
        %p293 = pneg %p62
        %p294 = pneg %p59
        %p295 = pneg %p83
        %p296 = pneg %p80
        %p297 = pneg %p104
        %p298 = pneg %p101
        %p299 = pneg %p125
        %p300 = pneg %p122
        %p301 = pneg %p146
        %p302 = pneg %p143
        %s303 = smul.u32 4, %s20
        %p304 = scmp.lt.s32.totalorder %s303, 7
        %s305 = scalar_select %p304, %s303, 7
        %s306 = smul.addr %s305, 2
        %s307 = smul.addr %s306, 8
        %s308 = scalar_lea.vmem %s6, %s307
        %p309 = pneg %p172
        %p310 = pneg %p169
        %p311 = pneg %p198
        %p312 = pneg %p195
        %s313 = smul.u32 8, %s20
        %p314 = scmp.lt.s32.totalorder %s313, 15
        %s315 = scalar_select %p314, %s313, 15
        %s316 = smul.addr %s315, 8
        %s317 = scalar_lea.vmem %s7, %s316
        %s318 = smul.u32 8, %s20
        %p319 = scmp.lt.s32.totalorder %s318, 15
        %s320 = scalar_select %p319, %s318, 15
        %s321 = smul.addr %s320, 8
        %s322 = scalar_lea.vmem %s0, %s321
        %s323 = smul.u32 8, %s20
        %s324 = smul.u32 4, %s20
        %p325 = scmp.lt.s32.totalorder %s324, 7
        %s326 = scalar_select %p325, %s324, 7
        %s327 = smul.addr %s326, 2
        %s328 = smul.addr %s327, 8
        %s329 = scalar_lea.vmem %s6, %s328
        %s330 = smul.u32 4, %s20
        %s331 = smul.u32 8, %s20
        %p332 = scmp.lt.s32.totalorder %s331, 15
        %s333 = scalar_select %p332, %s331, 15
        %s334 = smul.addr %s333, 8
        %s335 = scalar_lea.vmem %s7, %s334
        %s336 = smul.u32 8, %s20
        %v337 = vld [vmem:[%s322] sm:$0xff]
        %v338 = vld [vmem:[%s322 + $0x8] sm:$0xff]
        %v339 = vld [vmem:[%s322 + $0x10] sm:$0xff]
        %v340 = vld [vmem:[%s322 + $0x18] sm:$0xff]
        %v341 = vld [vmem:[%s322 + $0x20] sm:$0xff]
        %v342 = vld [vmem:[%s322 + $0x28] sm:$0xff]
        %v343 = vld [vmem:[%s322 + $0x30] sm:$0xff]
        %v344 = vld [vmem:[%s322 + $0x38] sm:$0xff]
        %v345 = vld [vmem:[%s1] sm:$0xff]
        %v346 = vld [vmem:[%s1 + $0x8] sm:$0xff]
        %v347 = vld [vmem:[%s1 + $0x10] sm:$0xff]
        %v348 = vld [vmem:[%s1 + $0x18] sm:$0xff]
        %v349 = vld [vmem:[%s2] sm:$0x1]
        %v351 = vlaneseq
        %v352 = vshrl.u32 %v351, 7
        %v353 = vsub.s32 0, %v352
        %v354 = vrot.slane %v349, %v353
        %vm356 = vcmask 261120
        %v358 = vsel %vm356, %v337, 0
        %v361 = vsel %vm356, %v338, 0
        %v364 = vsel %vm356, %v339, 0
        %v367 = vsel %vm356, %v340, 0
        %v370 = vsel %vm356, %v341, 0
        %v373 = vsel %vm356, %v342, 0
        %v376 = vsel %vm356, %v343, 0
        %v379 = vsel %vm356, %v344, 0
        %381 = vmatprep.subr.mxu0 0.0
        %382 = vmatpush1.msra.mxu0 %v345
        %383 = vmatprep.subr.mxu0 0.0
        %384 = vmatpush1.msra.mxu0 %v346
        %385 = vmatprep.subr.mxu0 0.0
        %386 = vmatpush1.msra.mxu0 %v347
        %387 = vmatprep.subr.mxu0 0.0
        %388 = vmatpush1.msra.mxu0 %v348
        %389 = vmatprep.subr.mxu0 0.0
        %390 = vmatpush1.msra.mxu0 0.0
        %391 = vmatprep.subr.mxu0 0.0
        %392 = vmatpush1.msra.mxu0 0.0
        %393 = vmatprep.subr.mxu0 0.0
        %394 = vmatpush1.msra.mxu0 0.0
        %395 = vmatprep.subr.mxu0 0.0
        %396 = vmatpush1.msra.mxu0 0.0
        %397 = vmatprep.subr.mxu0 0.0
        %398 = vmatpush1.msra.mxu0 0.0
        %399 = vmatprep.subr.mxu0 0.0
        %400 = vmatpush1.msra.mxu0 0.0
        %401 = vmatprep.subr.mxu0 0.0
        %402 = vmatpush1.msra.mxu0 0.0
        %403 = vmatprep.subr.mxu0 0.0
        %404 = vmatpush1.msra.mxu0 0.0
        %405 = vmatprep.subr.mxu0 0.0
        %406 = vmatpush1.msra.mxu0 0.0
        %407 = vmatprep.subr.mxu0 0.0
        %408 = vmatpush1.msra.mxu0 0.0
        %409 = vmatprep.subr.mxu0 0.0
        %410 = vmatpush1.msra.mxu0 0.0
        %411 = vmatprep.subr.mxu0 0.0
        %412 = vmatpush1.msra.mxu0 0.0
        %413 = vmatprep.subr.mxu0 0.0
        %414 = vmatpush1.msra.mxu0 0.0
        %415 = vmatprep.subr.mxu0 0.0
        %416 = vmatpush1.msra.mxu0 0.0
        %417 = vmatprep.subr.mxu0 0.0
        %418 = vmatpush1.msra.mxu0 0.0
        %419 = vmatprep.subr.mxu0 0.0
        %420 = vmatpush1.msra.mxu0 0.0
        %421 = vmatprep.subr.mxu0 0.0
        %422 = vmatpush1.msra.mxu0 0.0
        %423 = vmatprep.subr.mxu0 0.0
        %424 = vmatpush1.msra.mxu0 0.0
        %425 = vmatprep.subr.mxu0 0.0
        %426 = vmatpush1.msra.mxu0 0.0
        %427 = vmatprep.subr.mxu0 0.0
        %428 = vmatpush1.msra.mxu0 0.0
        %429 = vmatprep.subr.mxu0 0.0
        %430 = vmatpush1.msra.mxu0 0.0
        %431 = vmatprep.subr.mxu0 0.0
        %432 = vmatpush1.msra.mxu0 0.0
        %433 = vmatprep.subr.mxu0 0.0
        %434 = vmatpush1.msra.mxu0 0.0
        %435 = vmatprep.subr.mxu0 0.0
        %436 = vmatpush1.msra.mxu0 0.0
        %437 = vmatprep.subr.mxu0 0.0
        %438 = vmatpush1.msra.mxu0 0.0
        %439 = vmatprep.subr.mxu0 0.0
        %440 = vmatpush1.msra.mxu0 0.0
        %441 = vmatprep.subr.mxu0 0.0
        %442 = vmatpush1.msra.mxu0 0.0
        %443 = vmatprep.subr.mxu0 0.0
        %444 = vmatpush1.msra.mxu0 0.0
        %445 = vmatprep.mubr.f32.mxu0 0.0
        %446 = vmatmul.mubr.f32.gmra.mrb[0].mxu0 %v358
        %v447 = vpop.f32.mrb[0].mxu0
        %v448 = vadd.f32 %v354, %v447
        %v449 = vpop.f32.mrb[0].mxu0
        %450 = vmatprep.mubr.f32.mxu0 0.0
        %451 = vmatmul.mubr.f32.gmra.mrb[0].mxu0 %v361
        %v452 = vpop.f32.mrb[0].mxu0
        %v453 = vadd.f32 %v354, %v452
        %v454 = vpop.f32.mrb[0].mxu0
        %455 = vmatprep.mubr.f32.mxu0 0.0
        %456 = vmatmul.mubr.f32.gmra.mrb[0].mxu0 %v364
        %v457 = vpop.f32.mrb[0].mxu0
        %v458 = vadd.f32 %v354, %v457
        %v459 = vpop.f32.mrb[0].mxu0
        %460 = vmatprep.mubr.f32.mxu0 0.0
        %461 = vmatmul.mubr.f32.gmra.mrb[0].mxu0 %v367
        %v462 = vpop.f32.mrb[0].mxu0
        %v463 = vadd.f32 %v354, %v462
        %v464 = vpop.f32.mrb[0].mxu0
        %465 = vmatprep.mubr.f32.mxu0 0.0
        %466 = vmatmul.mubr.f32.gmra.mrb[0].mxu0 %v370
        %v467 = vpop.f32.mrb[0].mxu0
        %v468 = vadd.f32 %v354, %v467
        %v469 = vpop.f32.mrb[0].mxu0
        %470 = vmatprep.mubr.f32.mxu0 0.0
        %471 = vmatmul.mubr.f32.gmra.mrb[0].mxu0 %v373
        %v472 = vpop.f32.mrb[0].mxu0
        %v473 = vadd.f32 %v354, %v472
        %v474 = vpop.f32.mrb[0].mxu0
        %475 = vmatprep.mubr.f32.mxu0 0.0
        %476 = vmatmul.mubr.f32.gmra.mrb[0].mxu0 %v376
        %v477 = vpop.f32.mrb[0].mxu0
        %v478 = vadd.f32 %v354, %v477
        %v479 = vpop.f32.mrb[0].mxu0
        %480 = vmatprep.mubr.f32.mxu0 0.0
        %481 = vmatmul.mubr.f32.gmra.mrb[0].mxu0 %v379
        %v482 = vpop.f32.mrb[0].mxu0
        %v483 = vadd.f32 %v354, %v482
        %v484 = vpop.f32.mrb[0].mxu0
        %485 = vdwg.mxu0
        %v486 = vld [vmem:[#allocation4] sm:$0xff]
        %v487 = vld [vmem:[#allocation4 + $0x8] sm:$0xff]
        %v488 = vld [vmem:[#allocation4 + $0x10] sm:$0xff]
        %v489 = vld [vmem:[#allocation4 + $0x18] sm:$0xff]
        %v490 = vld [vmem:[#allocation4 + $0x20] sm:$0xff]
        %v491 = vld [vmem:[#allocation4 + $0x28] sm:$0xff]
        %v492 = vld [vmem:[#allocation4 + $0x30] sm:$0xff]
        %v493 = vld [vmem:[#allocation4 + $0x38] sm:$0xff]
        %v494 = vld [vmem:[%s329] sm:$0xff]
        %v495 = vld [vmem:[%s329 + $0x8] sm:$0xff]
        %v496 = vld [vmem:[%s329 + $0x10] sm:$0xff]
        %v497 = vld [vmem:[%s329 + $0x18] sm:$0xff]
        %v498 = vld [vmem:[%s329 + $0x20] sm:$0xff]
        %v499 = vld [vmem:[%s329 + $0x28] sm:$0xff]
        %v500 = vld [vmem:[%s329 + $0x30] sm:$0xff]
        %v501 = vld [vmem:[%s329 + $0x38] sm:$0xff]
        %v502 = vmul.f32 %v448, 0.35355338
        %v503 = vmul.f32 %v453, 0.35355338
        %v504 = vmul.f32 %v458, 0.35355338
        %v505 = vmul.f32 %v463, 0.35355338
        %v506 = vmul.f32 %v468, 0.35355338
        %v507 = vmul.f32 %v473, 0.35355338
        %v508 = vmul.f32 %v478, 0.35355338
        %v509 = vmul.f32 %v483, 0.35355338
        %512 = vrot.lane.b32.xlu0 %v448, 96
        %v513 = vpop.permute.xlu0 %512
        %514 = vrot.lane.b32.xlu0 %v453, 96
        %v515 = vpop.permute.xlu0 %514
        %vm516 = vcmask 64512
        %v518 = vsel %vm516, %v502, 0
        %v521 = vsel %vm516, %v503, 0
        %v523 = vsel %vm516, %v513, 0
        %v525 = vsel %vm516, %v515, 0
        %527 = vmatprep.subr.mxu0 0.0
        %528 = vmatpush1.xpose.msra.mxu0 %v523
        %529 = vmatprep.subr.mxu0 0.0
        %530 = vmatpush1.xpose.msra.mxu0 %v525
        %531 = vmatprep.subr.mxu0 0.0
        %532 = vmatpush1.xpose.msra.mxu0 0.0
        %533 = vmatprep.subr.mxu0 0.0
        %534 = vmatpush1.xpose.msra.mxu0 0.0
        %535 = vmatprep.subr.mxu0 0.0
        %536 = vmatpush1.xpose.msra.mxu0 0.0
        %537 = vmatprep.subr.mxu0 0.0
        %538 = vmatpush1.xpose.msra.mxu0 0.0
        %539 = vmatprep.subr.mxu0 0.0
        %540 = vmatpush1.xpose.msra.mxu0 0.0
        %541 = vmatprep.subr.mxu0 0.0
        %542 = vmatpush1.xpose.msra.mxu0 0.0
        %543 = vmatprep.subr.mxu0 0.0
        %544 = vmatpush1.xpose.msra.mxu0 0.0
        %545 = vmatprep.subr.mxu0 0.0
        %546 = vmatpush1.xpose.msra.mxu0 0.0
        %547 = vmatprep.subr.mxu0 0.0
        %548 = vmatpush1.xpose.msra.mxu0 0.0
        %549 = vmatprep.subr.mxu0 0.0
        %550 = vmatpush1.xpose.msra.mxu0 0.0
        %551 = vmatprep.subr.mxu0 0.0
        %552 = vmatpush1.xpose.msra.mxu0 0.0
        %553 = vmatprep.subr.mxu0 0.0
        %554 = vmatpush1.xpose.msra.mxu0 0.0
        %555 = vmatprep.subr.mxu0 0.0
        %556 = vmatpush1.xpose.msra.mxu0 0.0
        %557 = vmatprep.subr.mxu0 0.0
        %558 = vmatpush1.xpose.msra.mxu0 0.0
        %559 = vmatprep.subr.mxu0 0.0
        %560 = vmatpush1.xpose.msra.mxu0 0.0
        %561 = vmatprep.subr.mxu0 0.0
        %562 = vmatpush1.xpose.msra.mxu0 0.0
        %563 = vmatprep.subr.mxu0 0.0
        %564 = vmatpush1.xpose.msra.mxu0 0.0
        %565 = vmatprep.subr.mxu0 0.0
        %566 = vmatpush1.xpose.msra.mxu0 0.0
        %567 = vmatprep.subr.mxu0 0.0
        %568 = vmatpush1.xpose.msra.mxu0 0.0
        %569 = vmatprep.subr.mxu0 0.0
        %570 = vmatpush1.xpose.msra.mxu0 0.0
        %571 = vmatprep.subr.mxu0 0.0
        %572 = vmatpush1.xpose.msra.mxu0 0.0
        %573 = vmatprep.subr.mxu0 0.0
        %574 = vmatpush1.xpose.msra.mxu0 0.0
        %575 = vmatprep.subr.mxu0 0.0
        %576 = vmatpush1.xpose.msra.mxu0 0.0
        %577 = vmatprep.subr.mxu0 0.0
        %578 = vmatpush1.xpose.msra.mxu0 0.0
        %579 = vmatprep.subr.mxu0 0.0
        %580 = vmatpush1.xpose.msra.mxu0 0.0
        %581 = vmatprep.subr.mxu0 0.0
        %582 = vmatpush1.xpose.msra.mxu0 0.0
        %583 = vmatprep.subr.mxu0 0.0
        %584 = vmatpush1.xpose.msra.mxu0 0.0
        %585 = vmatprep.subr.mxu0 0.0
        %586 = vmatpush1.xpose.msra.mxu0 0.0
        %587 = vmatprep.subr.mxu0 0.0
        %588 = vmatpush1.xpose.msra.mxu0 0.0
        %589 = vmatprep.subr.mxu0 0.0
        %590 = vmatpush1.xpose.msra.mxu0 0.0
        %591 = vmatprep.mubr.f32.mxu0 0.0
        %592 = vmatmul.mubr.f32.gmra.mrb[0].mxu0 %v518
        %v593 = vpop.f32.mrb[0].mxu0
        %v594 = vadd.f32 %v486, %v593
        %v595 = vpop.f32.mrb[0].mxu0
        %596 = vmatprep.mubr.f32.mxu0 0.0
        %597 = vmatmul.mubr.f32.gmra.mrb[0].mxu0 %v521
        %v598 = vpop.f32.mrb[0].mxu0
        %v599 = vadd.f32 %v487, %v598
        %v600 = vpop.f32.mrb[0].mxu0
        %601 = vdwg.mxu0
        %604 = vrot.lane.b32.xlu0 %v458, 96
        %v605 = vpop.permute.xlu0 %604
        %606 = vrot.lane.b32.xlu0 %v463, 96
        %v607 = vpop.permute.xlu0 %606
        %v609 = vsel %vm516, %v504, 0
        %v612 = vsel %vm516, %v505, 0
        %v614 = vsel %vm516, %v605, 0
        %v616 = vsel %vm516, %v607, 0
        %618 = vmatprep.subr.mxu0 0.0
        %619 = vmatpush1.xpose.msra.mxu0 %v614
        %620 = vmatprep.subr.mxu0 0.0
        %621 = vmatpush1.xpose.msra.mxu0 %v616
        %622 = vmatprep.subr.mxu0 0.0
        %623 = vmatpush1.xpose.msra.mxu0 0.0
        %624 = vmatprep.subr.mxu0 0.0
        %625 = vmatpush1.xpose.msra.mxu0 0.0
        %626 = vmatprep.subr.mxu0 0.0
        %627 = vmatpush1.xpose.msra.mxu0 0.0
        %628 = vmatprep.subr.mxu0 0.0
        %629 = vmatpush1.xpose.msra.mxu0 0.0
        %630 = vmatprep.subr.mxu0 0.0
        %631 = vmatpush1.xpose.msra.mxu0 0.0
        %632 = vmatprep.subr.mxu0 0.0
        %633 = vmatpush1.xpose.msra.mxu0 0.0
        %634 = vmatprep.subr.mxu0 0.0
        %635 = vmatpush1.xpose.msra.mxu0 0.0
        %636 = vmatprep.subr.mxu0 0.0
        %637 = vmatpush1.xpose.msra.mxu0 0.0
        %638 = vmatprep.subr.mxu0 0.0
        %639 = vmatpush1.xpose.msra.mxu0 0.0
        %640 = vmatprep.subr.mxu0 0.0
        %641 = vmatpush1.xpose.msra.mxu0 0.0
        %642 = vmatprep.subr.mxu0 0.0
        %643 = vmatpush1.xpose.msra.mxu0 0.0
        %644 = vmatprep.subr.mxu0 0.0
        %645 = vmatpush1.xpose.msra.mxu0 0.0
        %646 = vmatprep.subr.mxu0 0.0
        %647 = vmatpush1.xpose.msra.mxu0 0.0
        %648 = vmatprep.subr.mxu0 0.0
        %649 = vmatpush1.xpose.msra.mxu0 0.0
        %650 = vmatprep.subr.mxu0 0.0
        %651 = vmatpush1.xpose.msra.mxu0 0.0
        %652 = vmatprep.subr.mxu0 0.0
        %653 = vmatpush1.xpose.msra.mxu0 0.0
        %654 = vmatprep.subr.mxu0 0.0
        %655 = vmatpush1.xpose.msra.mxu0 0.0
        %656 = vmatprep.subr.mxu0 0.0
        %657 = vmatpush1.xpose.msra.mxu0 0.0
        %658 = vmatprep.subr.mxu0 0.0
        %659 = vmatpush1.xpose.msra.mxu0 0.0
        %660 = vmatprep.subr.mxu0 0.0
        %661 = vmatpush1.xpose.msra.mxu0 0.0
        %662 = vmatprep.subr.mxu0 0.0
        %663 = vmatpush1.xpose.msra.mxu0 0.0
        %664 = vmatprep.subr.mxu0 0.0
        %665 = vmatpush1.xpose.msra.mxu0 0.0
        %666 = vmatprep.subr.mxu0 0.0
        %667 = vmatpush1.xpose.msra.mxu0 0.0
        %668 = vmatprep.subr.mxu0 0.0
        %669 = vmatpush1.xpose.msra.mxu0 0.0
        %670 = vmatprep.subr.mxu0 0.0
        %671 = vmatpush1.xpose.msra.mxu0 0.0
        %672 = vmatprep.subr.mxu0 0.0
        %673 = vmatpush1.xpose.msra.mxu0 0.0
        %674 = vmatprep.subr.mxu0 0.0
        %675 = vmatpush1.xpose.msra.mxu0 0.0
        %676 = vmatprep.subr.mxu0 0.0
        %677 = vmatpush1.xpose.msra.mxu0 0.0
        %678 = vmatprep.subr.mxu0 0.0
        %679 = vmatpush1.xpose.msra.mxu0 0.0
        %680 = vmatprep.subr.mxu0 0.0
        %681 = vmatpush1.xpose.msra.mxu0 0.0
        %682 = vmatprep.mubr.f32.mxu0 0.0
        %683 = vmatmul.mubr.f32.gmra.mrb[0].mxu0 %v609
        %v684 = vpop.f32.mrb[0].mxu0
        %v685 = vadd.f32 %v486, %v684
        %v686 = vpop.f32.mrb[0].mxu0
        %687 = vmatprep.mubr.f32.mxu0 0.0
        %688 = vmatmul.mubr.f32.gmra.mrb[0].mxu0 %v612
        %v689 = vpop.f32.mrb[0].mxu0
        %v690 = vadd.f32 %v487, %v689
        %v691 = vpop.f32.mrb[0].mxu0
        %692 = vdwg.mxu0
        %695 = vrot.lane.b32.xlu0 %v468, 96
        %v696 = vpop.permute.xlu0 %695
        %697 = vrot.lane.b32.xlu0 %v473, 96
        %v698 = vpop.permute.xlu0 %697
        %v700 = vsel %vm516, %v506, 0
        %v703 = vsel %vm516, %v507, 0
        %v705 = vsel %vm516, %v696, 0
        %v707 = vsel %vm516, %v698, 0
        %709 = vmatprep.subr.mxu0 0.0
        %710 = vmatpush1.xpose.msra.mxu0 %v705
        %711 = vmatprep.subr.mxu0 0.0
        %712 = vmatpush1.xpose.msra.mxu0 %v707
        %713 = vmatprep.subr.mxu0 0.0
        %714 = vmatpush1.xpose.msra.mxu0 0.0
        %715 = vmatprep.subr.mxu0 0.0
        %716 = vmatpush1.xpose.msra.mxu0 0.0
        %717 = vmatprep.subr.mxu0 0.0
        %718 = vmatpush1.xpose.msra.mxu0 0.0
        %719 = vmatprep.subr.mxu0 0.0
        %720 = vmatpush1.xpose.msra.mxu0 0.0
        %721 = vmatprep.subr.mxu0 0.0
        %722 = vmatpush1.xpose.msra.mxu0 0.0
        %723 = vmatprep.subr.mxu0 0.0
        %724 = vmatpush1.xpose.msra.mxu0 0.0
        %725 = vmatprep.subr.mxu0 0.0
        %726 = vmatpush1.xpose.msra.mxu0 0.0
        %727 = vmatprep.subr.mxu0 0.0
        %728 = vmatpush1.xpose.msra.mxu0 0.0
        %729 = vmatprep.subr.mxu0 0.0
        %730 = vmatpush1.xpose.msra.mxu0 0.0
        %731 = vmatprep.subr.mxu0 0.0
        %732 = vmatpush1.xpose.msra.mxu0 0.0
        %733 = vmatprep.subr.mxu0 0.0
        %734 = vmatpush1.xpose.msra.mxu0 0.0
        %735 = vmatprep.subr.mxu0 0.0
        %736 = vmatpush1.xpose.msra.mxu0 0.0
        %737 = vmatprep.subr.mxu0 0.0
        %738 = vmatpush1.xpose.msra.mxu0 0.0
        %739 = vmatprep.subr.mxu0 0.0
        %740 = vmatpush1.xpose.msra.mxu0 0.0
        %741 = vmatprep.subr.mxu0 0.0
        %742 = vmatpush1.xpose.msra.mxu0 0.0
        %743 = vmatprep.subr.mxu0 0.0
        %744 = vmatpush1.xpose.msra.mxu0 0.0
        %745 = vmatprep.subr.mxu0 0.0
        %746 = vmatpush1.xpose.msra.mxu0 0.0
        %747 = vmatprep.subr.mxu0 0.0
        %748 = vmatpush1.xpose.msra.mxu0 0.0
        %749 = vmatprep.subr.mxu0 0.0
        %750 = vmatpush1.xpose.msra.mxu0 0.0
        %751 = vmatprep.subr.mxu0 0.0
        %752 = vmatpush1.xpose.msra.mxu0 0.0
        %753 = vmatprep.subr.mxu0 0.0
        %754 = vmatpush1.xpose.msra.mxu0 0.0
        %755 = vmatprep.subr.mxu0 0.0
        %756 = vmatpush1.xpose.msra.mxu0 0.0
        %757 = vmatprep.subr.mxu0 0.0
        %758 = vmatpush1.xpose.msra.mxu0 0.0
        %759 = vmatprep.subr.mxu0 0.0
        %760 = vmatpush1.xpose.msra.mxu0 0.0
        %761 = vmatprep.subr.mxu0 0.0
        %762 = vmatpush1.xpose.msra.mxu0 0.0
        %763 = vmatprep.subr.mxu0 0.0
        %764 = vmatpush1.xpose.msra.mxu0 0.0
        %765 = vmatprep.subr.mxu0 0.0
        %766 = vmatpush1.xpose.msra.mxu0 0.0
        %767 = vmatprep.subr.mxu0 0.0
        %768 = vmatpush1.xpose.msra.mxu0 0.0
        %769 = vmatprep.subr.mxu0 0.0
        %770 = vmatpush1.xpose.msra.mxu0 0.0
        %771 = vmatprep.subr.mxu0 0.0
        %772 = vmatpush1.xpose.msra.mxu0 0.0
        %773 = vmatprep.mubr.f32.mxu0 0.0
        %774 = vmatmul.mubr.f32.gmra.mrb[0].mxu0 %v700
        %v775 = vpop.f32.mrb[0].mxu0
        %v776 = vadd.f32 %v486, %v775
        %v777 = vpop.f32.mrb[0].mxu0
        %778 = vmatprep.mubr.f32.mxu0 0.0
        %779 = vmatmul.mubr.f32.gmra.mrb[0].mxu0 %v703
        %v780 = vpop.f32.mrb[0].mxu0
        %v781 = vadd.f32 %v487, %v780
        %v782 = vpop.f32.mrb[0].mxu0
        %783 = vdwg.mxu0
        %786 = vrot.lane.b32.xlu0 %v478, 96
        %v787 = vpop.permute.xlu0 %786
        %788 = vrot.lane.b32.xlu0 %v483, 96
        %v789 = vpop.permute.xlu0 %788
        %v791 = vsel %vm516, %v508, 0
        %v794 = vsel %vm516, %v509, 0
        %v796 = vsel %vm516, %v787, 0
        %v798 = vsel %vm516, %v789, 0
        %800 = vmatprep.subr.mxu0 0.0
        %801 = vmatpush1.xpose.msra.mxu0 %v796
        %802 = vmatprep.subr.mxu0 0.0
        %803 = vmatpush1.xpose.msra.mxu0 %v798
        %804 = vmatprep.subr.mxu0 0.0
        %805 = vmatpush1.xpose.msra.mxu0 0.0
        %806 = vmatprep.subr.mxu0 0.0
        %807 = vmatpush1.xpose.msra.mxu0 0.0
        %808 = vmatprep.subr.mxu0 0.0
        %809 = vmatpush1.xpose.msra.mxu0 0.0
        %810 = vmatprep.subr.mxu0 0.0
        %811 = vmatpush1.xpose.msra.mxu0 0.0
        %812 = vmatprep.subr.mxu0 0.0
        %813 = vmatpush1.xpose.msra.mxu0 0.0
        %814 = vmatprep.subr.mxu0 0.0
        %815 = vmatpush1.xpose.msra.mxu0 0.0
        %816 = vmatprep.subr.mxu0 0.0
        %817 = vmatpush1.xpose.msra.mxu0 0.0
        %818 = vmatprep.subr.mxu0 0.0
        %819 = vmatpush1.xpose.msra.mxu0 0.0
        %820 = vmatprep.subr.mxu0 0.0
        %821 = vmatpush1.xpose.msra.mxu0 0.0
        %822 = vmatprep.subr.mxu0 0.0
        %823 = vmatpush1.xpose.msra.mxu0 0.0
        %824 = vmatprep.subr.mxu0 0.0
        %825 = vmatpush1.xpose.msra.mxu0 0.0
        %826 = vmatprep.subr.mxu0 0.0
        %827 = vmatpush1.xpose.msra.mxu0 0.0
        %828 = vmatprep.subr.mxu0 0.0
        %829 = vmatpush1.xpose.msra.mxu0 0.0
        %830 = vmatprep.subr.mxu0 0.0
        %831 = vmatpush1.xpose.msra.mxu0 0.0
        %832 = vmatprep.subr.mxu0 0.0
        %833 = vmatpush1.xpose.msra.mxu0 0.0
        %834 = vmatprep.subr.mxu0 0.0
        %835 = vmatpush1.xpose.msra.mxu0 0.0
        %836 = vmatprep.subr.mxu0 0.0
        %837 = vmatpush1.xpose.msra.mxu0 0.0
        %838 = vmatprep.subr.mxu0 0.0
        %839 = vmatpush1.xpose.msra.mxu0 0.0
        %840 = vmatprep.subr.mxu0 0.0
        %841 = vmatpush1.xpose.msra.mxu0 0.0
        %842 = vmatprep.subr.mxu0 0.0
        %843 = vmatpush1.xpose.msra.mxu0 0.0
        %844 = vmatprep.subr.mxu0 0.0
        %845 = vmatpush1.xpose.msra.mxu0 0.0
        %846 = vmatprep.subr.mxu0 0.0
        %847 = vmatpush1.xpose.msra.mxu0 0.0
        %848 = vmatprep.subr.mxu0 0.0
        %849 = vmatpush1.xpose.msra.mxu0 0.0
        %850 = vmatprep.subr.mxu0 0.0
        %851 = vmatpush1.xpose.msra.mxu0 0.0
        %852 = vmatprep.subr.mxu0 0.0
        %853 = vmatpush1.xpose.msra.mxu0 0.0
        %854 = vmatprep.subr.mxu0 0.0
        %855 = vmatpush1.xpose.msra.mxu0 0.0
        %856 = vmatprep.subr.mxu0 0.0
        %857 = vmatpush1.xpose.msra.mxu0 0.0
        %858 = vmatprep.subr.mxu0 0.0
        %859 = vmatpush1.xpose.msra.mxu0 0.0
        %860 = vmatprep.subr.mxu0 0.0
        %861 = vmatpush1.xpose.msra.mxu0 0.0
        %862 = vmatprep.subr.mxu0 0.0
        %863 = vmatpush1.xpose.msra.mxu0 0.0
        %864 = vmatprep.mubr.f32.mxu0 0.0
        %865 = vmatmul.mubr.f32.gmra.mrb[0].mxu0 %v791
        %v866 = vpop.f32.mrb[0].mxu0
        %v867 = vadd.f32 %v486, %v866
        %v868 = vpop.f32.mrb[0].mxu0
        %869 = vmatprep.mubr.f32.mxu0 0.0
        %870 = vmatmul.mubr.f32.gmra.mrb[0].mxu0 %v794
        %v871 = vpop.f32.mrb[0].mxu0
        %v872 = vadd.f32 %v487, %v871
        %v873 = vpop.f32.mrb[0].mxu0
        %874 = vdwg.mxu0
        %v875 = vadd.f32 %v594, %v494
        %v876 = vadd.f32 %v599, %v495
        %v877 = vadd.f32 %v685, %v496
        %v878 = vadd.f32 %v690, %v497
        %v879 = vadd.f32 %v776, %v498
        %v880 = vadd.f32 %v781, %v499
        %v881 = vadd.f32 %v867, %v500
        %v882 = vadd.f32 %v872, %v501
        %vm883 = vcmask 130048
        %v884 = vsel %vm883, %v875, -inf
        %885 = vmax.xlane.f32.xlu0 %v884
        %v886 = vpop.xlane.xlu0 %885
        %v887 = vsel %vm883, %v876, -inf
        %888 = vmax.xlane.f32.xlu0 %v887
        %v889 = vpop.xlane.xlu0 %888
        %v890 = vsel %vm883, %v877, -inf
        %891 = vmax.xlane.f32.xlu0 %v890
        %v892 = vpop.xlane.xlu0 %891
        %v893 = vsel %vm883, %v878, -inf
        %894 = vmax.xlane.f32.xlu0 %v893
        %v895 = vpop.xlane.xlu0 %894
        %v896 = vsel %vm883, %v879, -inf
        %897 = vmax.xlane.f32.xlu0 %v896
        %v898 = vpop.xlane.xlu0 %897
        %v899 = vsel %vm883, %v880, -inf
        %900 = vmax.xlane.f32.xlu0 %v899
        %v901 = vpop.xlane.xlu0 %900
        %v902 = vsel %vm883, %v881, -inf
        %903 = vmax.xlane.f32.xlu0 %v902
        %v904 = vpop.xlane.xlu0 %903
        %v905 = vsel %vm883, %v882, -inf
        %906 = vmax.xlane.f32.xlu0 %v905
        %v907 = vpop.xlane.xlu0 %906
        %v908 = vsub.f32 %v875, %v886
        %v909 = vsub.f32 %v876, %v889
        %v910 = vsub.f32 %v877, %v892
        %v911 = vsub.f32 %v878, %v895
        %v912 = vsub.f32 %v879, %v898
        %v913 = vsub.f32 %v880, %v901
        %v914 = vsub.f32 %v881, %v904
        %v915 = vsub.f32 %v882, %v907
        %v916 = vmul.f32 %v908, 1.442695
        %v917 = vpow.pop %v916
        %v918 = vmul.f32 %v909, 1.442695
        %v919 = vpow.pop %v918
        %v920 = vmul.f32 %v910, 1.442695
        %v921 = vpow.pop %v920
        %v922 = vmul.f32 %v911, 1.442695
        %v923 = vpow.pop %v922
        %v924 = vmul.f32 %v912, 1.442695
        %v925 = vpow.pop %v924
        %v926 = vmul.f32 %v913, 1.442695
        %v927 = vpow.pop %v926
        %v928 = vmul.f32 %v914, 1.442695
        %v929 = vpow.pop %v928
        %v930 = vmul.f32 %v915, 1.442695
        %v931 = vpow.pop %v930
        %v932 = vsel %vm883, %v917, 0.0
        %933 = vadd.xlane.f32.xlu0 %v932
        %v934 = vpop.xlane.xlu0 %933
        %v935 = vsel %vm883, %v919, 0.0
        %936 = vadd.xlane.f32.xlu0 %v935
        %v937 = vpop.xlane.xlu0 %936
        %v938 = vsel %vm883, %v921, 0.0
        %939 = vadd.xlane.f32.xlu0 %v938
        %v940 = vpop.xlane.xlu0 %939
        %v941 = vsel %vm883, %v923, 0.0
        %942 = vadd.xlane.f32.xlu0 %v941
        %v943 = vpop.xlane.xlu0 %942
        %v944 = vsel %vm883, %v925, 0.0
        %945 = vadd.xlane.f32.xlu0 %v944
        %v946 = vpop.xlane.xlu0 %945
        %v947 = vsel %vm883, %v927, 0.0
        %948 = vadd.xlane.f32.xlu0 %v947
        %v949 = vpop.xlane.xlu0 %948
        %v950 = vsel %vm883, %v929, 0.0
        %951 = vadd.xlane.f32.xlu0 %v950
        %v952 = vpop.xlane.xlu0 %951
        %v953 = vsel %vm883, %v931, 0.0
        %954 = vadd.xlane.f32.xlu0 %v953
        %v955 = vpop.xlane.xlu0 %954
        %v956 = vrcp.pop %v934
        %v957 = vmul.f32 %v917, %v956
        %v958 = vrcp.pop %v937
        %v959 = vmul.f32 %v919, %v958
        %v960 = vrcp.pop %v940
        %v961 = vmul.f32 %v921, %v960
        %v962 = vrcp.pop %v943
        %v963 = vmul.f32 %v923, %v962
        %v964 = vrcp.pop %v946
        %v965 = vmul.f32 %v925, %v964
        %v966 = vrcp.pop %v949
        %v967 = vmul.f32 %v927, %v966
        %v968 = vrcp.pop %v952
        %v969 = vmul.f32 %v929, %v968
        %v970 = vrcp.pop %v955
        %v971 = vmul.f32 %v931, %v970
        %972 = vrot.lane.b32.xlu0 %v448, 64
        %v973 = vpop.permute.xlu0 %972
        %974 = vrot.lane.b32.xlu0 %v453, 64
        %v975 = vpop.permute.xlu0 %974
        %v979 = vsel %vm883, %v957, 0
        %v982 = vsel %vm883, %v959, 0
        %984 = vmatprep.subr.mxu0 0.0
        %985 = vmatpush1.msra.mxu0 %v973
        %986 = vmatprep.subr.mxu0 0.0
        %987 = vmatpush1.msra.mxu0 %v975
        %988 = vmatprep.subr.mxu0 0.0
        %989 = vmatpush1.msra.mxu0 0.0
        %990 = vmatprep.subr.mxu0 0.0
        %991 = vmatpush1.msra.mxu0 0.0
        %992 = vmatprep.subr.mxu0 0.0
        %993 = vmatpush1.msra.mxu0 0.0
        %994 = vmatprep.subr.mxu0 0.0
        %995 = vmatpush1.msra.mxu0 0.0
        %996 = vmatprep.subr.mxu0 0.0
        %997 = vmatpush1.msra.mxu0 0.0
        %998 = vmatprep.subr.mxu0 0.0
        %999 = vmatpush1.msra.mxu0 0.0
        %1000 = vmatprep.subr.mxu0 0.0
        %1001 = vmatpush1.msra.mxu0 0.0
        %1002 = vmatprep.subr.mxu0 0.0
        %1003 = vmatpush1.msra.mxu0 0.0
        %1004 = vmatprep.subr.mxu0 0.0
        %1005 = vmatpush1.msra.mxu0 0.0
        %1006 = vmatprep.subr.mxu0 0.0
        %1007 = vmatpush1.msra.mxu0 0.0
        %1008 = vmatprep.subr.mxu0 0.0
        %1009 = vmatpush1.msra.mxu0 0.0
        %1010 = vmatprep.subr.mxu0 0.0
        %1011 = vmatpush1.msra.mxu0 0.0
        %1012 = vmatprep.subr.mxu0 0.0
        %1013 = vmatpush1.msra.mxu0 0.0
        %1014 = vmatprep.subr.mxu0 0.0
        %1015 = vmatpush1.msra.mxu0 0.0
        %1016 = vmatprep.subr.mxu0 0.0
        %1017 = vmatpush1.msra.mxu0 0.0
        %1018 = vmatprep.subr.mxu0 0.0
        %1019 = vmatpush1.msra.mxu0 0.0
        %1020 = vmatprep.subr.mxu0 0.0
        %1021 = vmatpush1.msra.mxu0 0.0
        %1022 = vmatprep.subr.mxu0 0.0
        %1023 = vmatpush1.msra.mxu0 0.0
        %1024 = vmatprep.subr.mxu0 0.0
        %1025 = vmatpush1.msra.mxu0 0.0
        %1026 = vmatprep.subr.mxu0 0.0
        %1027 = vmatpush1.msra.mxu0 0.0
        %1028 = vmatprep.subr.mxu0 0.0
        %1029 = vmatpush1.msra.mxu0 0.0
        %1030 = vmatprep.subr.mxu0 0.0
        %1031 = vmatpush1.msra.mxu0 0.0
        %1032 = vmatprep.subr.mxu0 0.0
        %1033 = vmatpush1.msra.mxu0 0.0
        %1034 = vmatprep.subr.mxu0 0.0
        %1035 = vmatpush1.msra.mxu0 0.0
        %1036 = vmatprep.subr.mxu0 0.0
        %1037 = vmatpush1.msra.mxu0 0.0
        %1038 = vmatprep.subr.mxu0 0.0
        %1039 = vmatpush1.msra.mxu0 0.0
        %1040 = vmatprep.subr.mxu0 0.0
        %1041 = vmatpush1.msra.mxu0 0.0
        %1042 = vmatprep.subr.mxu0 0.0
        %1043 = vmatpush1.msra.mxu0 0.0
        %1044 = vmatprep.subr.mxu0 0.0
        %1045 = vmatpush1.msra.mxu0 0.0
        %1046 = vmatprep.subr.mxu0 0.0
        %1047 = vmatpush1.msra.mxu0 0.0
        %1048 = vmatprep.mubr.f32.mxu0 0.0
        %1049 = vmatmul.mubr.f32.gmra.mrb[0].mxu0 %v979
        %v1050 = vpop.f32.mrb[0].mxu0
        %v1051 = vadd.f32 0.0, %v1050
        %v1052 = vpop.f32.mrb[0].mxu0
        %1053 = vmatprep.mubr.f32.mxu0 0.0
        %1054 = vmatmul.mubr.f32.gmra.mrb[0].mxu0 %v982
        %v1055 = vpop.f32.mrb[0].mxu0
        %v1056 = vadd.f32 0.0, %v1055
        %v1057 = vpop.f32.mrb[0].mxu0
        %1058 = vdwg.mxu0
        %1059 = vrot.lane.b32.xlu0 %v458, 64
        %v1060 = vpop.permute.xlu0 %1059
        %1061 = vrot.lane.b32.xlu0 %v463, 64
        %v1062 = vpop.permute.xlu0 %1061
        %v1066 = vsel %vm883, %v961, 0
        %v1069 = vsel %vm883, %v963, 0
        %1071 = vmatprep.subr.mxu0 0.0
        %1072 = vmatpush1.msra.mxu0 %v1060
        %1073 = vmatprep.subr.mxu0 0.0
        %1074 = vmatpush1.msra.mxu0 %v1062
        %1075 = vmatprep.subr.mxu0 0.0
        %1076 = vmatpush1.msra.mxu0 0.0
        %1077 = vmatprep.subr.mxu0 0.0
        %1078 = vmatpush1.msra.mxu0 0.0
        %1079 = vmatprep.subr.mxu0 0.0
        %1080 = vmatpush1.msra.mxu0 0.0
        %1081 = vmatprep.subr.mxu0 0.0
        %1082 = vmatpush1.msra.mxu0 0.0
        %1083 = vmatprep.subr.mxu0 0.0
        %1084 = vmatpush1.msra.mxu0 0.0
        %1085 = vmatprep.subr.mxu0 0.0
        %1086 = vmatpush1.msra.mxu0 0.0
        %1087 = vmatprep.subr.mxu0 0.0
        %1088 = vmatpush1.msra.mxu0 0.0
        %1089 = vmatprep.subr.mxu0 0.0
        %1090 = vmatpush1.msra.mxu0 0.0
        %1091 = vmatprep.subr.mxu0 0.0
        %1092 = vmatpush1.msra.mxu0 0.0
        %1093 = vmatprep.subr.mxu0 0.0
        %1094 = vmatpush1.msra.mxu0 0.0
        %1095 = vmatprep.subr.mxu0 0.0
        %1096 = vmatpush1.msra.mxu0 0.0
        %1097 = vmatprep.subr.mxu0 0.0
        %1098 = vmatpush1.msra.mxu0 0.0
        %1099 = vmatprep.subr.mxu0 0.0
        %1100 = vmatpush1.msra.mxu0 0.0
        %1101 = vmatprep.subr.mxu0 0.0
        %1102 = vmatpush1.msra.mxu0 0.0
        %1103 = vmatprep.subr.mxu0 0.0
        %1104 = vmatpush1.msra.mxu0 0.0
        %1105 = vmatprep.subr.mxu0 0.0
        %1106 = vmatpush1.msra.mxu0 0.0
        %1107 = vmatprep.subr.mxu0 0.0
        %1108 = vmatpush1.msra.mxu0 0.0
        %1109 = vmatprep.subr.mxu0 0.0
        %1110 = vmatpush1.msra.mxu0 0.0
        %1111 = vmatprep.subr.mxu0 0.0
        %1112 = vmatpush1.msra.mxu0 0.0
        %1113 = vmatprep.subr.mxu0 0.0
        %1114 = vmatpush1.msra.mxu0 0.0
        %1115 = vmatprep.subr.mxu0 0.0
        %1116 = vmatpush1.msra.mxu0 0.0
        %1117 = vmatprep.subr.mxu0 0.0
        %1118 = vmatpush1.msra.mxu0 0.0
        %1119 = vmatprep.subr.mxu0 0.0
        %1120 = vmatpush1.msra.mxu0 0.0
        %1121 = vmatprep.subr.mxu0 0.0
        %1122 = vmatpush1.msra.mxu0 0.0
        %1123 = vmatprep.subr.mxu0 0.0
        %1124 = vmatpush1.msra.mxu0 0.0
        %1125 = vmatprep.subr.mxu0 0.0
        %1126 = vmatpush1.msra.mxu0 0.0
        %1127 = vmatprep.subr.mxu0 0.0
        %1128 = vmatpush1.msra.mxu0 0.0
        %1129 = vmatprep.subr.mxu0 0.0
        %1130 = vmatpush1.msra.mxu0 0.0
        %1131 = vmatprep.subr.mxu0 0.0
        %1132 = vmatpush1.msra.mxu0 0.0
        %1133 = vmatprep.subr.mxu0 0.0
        %1134 = vmatpush1.msra.mxu0 0.0
        %1135 = vmatprep.mubr.f32.mxu0 0.0
        %1136 = vmatmul.mubr.f32.gmra.mrb[0].mxu0 %v1066
        %v1137 = vpop.f32.mrb[0].mxu0
        %v1138 = vadd.f32 0.0, %v1137
        %v1139 = vpop.f32.mrb[0].mxu0
        %1140 = vmatprep.mubr.f32.mxu0 0.0
        %1141 = vmatmul.mubr.f32.gmra.mrb[0].mxu0 %v1069
        %v1142 = vpop.f32.mrb[0].mxu0
        %v1143 = vadd.f32 0.0, %v1142
        %v1144 = vpop.f32.mrb[0].mxu0
        %1145 = vdwg.mxu0
        %1146 = vrot.lane.b32.xlu0 %v468, 64
        %v1147 = vpop.permute.xlu0 %1146
        %1148 = vrot.lane.b32.xlu0 %v473, 64
        %v1149 = vpop.permute.xlu0 %1148
        %v1153 = vsel %vm883, %v965, 0
        %v1156 = vsel %vm883, %v967, 0
        %1158 = vmatprep.subr.mxu0 0.0
        %1159 = vmatpush1.msra.mxu0 %v1147
        %1160 = vmatprep.subr.mxu0 0.0
        %1161 = vmatpush1.msra.mxu0 %v1149
        %1162 = vmatprep.subr.mxu0 0.0
        %1163 = vmatpush1.msra.mxu0 0.0
        %1164 = vmatprep.subr.mxu0 0.0
        %1165 = vmatpush1.msra.mxu0 0.0
        %1166 = vmatprep.subr.mxu0 0.0
        %1167 = vmatpush1.msra.mxu0 0.0
        %1168 = vmatprep.subr.mxu0 0.0
        %1169 = vmatpush1.msra.mxu0 0.0
        %1170 = vmatprep.subr.mxu0 0.0
        %1171 = vmatpush1.msra.mxu0 0.0
        %1172 = vmatprep.subr.mxu0 0.0
        %1173 = vmatpush1.msra.mxu0 0.0
        %1174 = vmatprep.subr.mxu0 0.0
        %1175 = vmatpush1.msra.mxu0 0.0
        %1176 = vmatprep.subr.mxu0 0.0
        %1177 = vmatpush1.msra.mxu0 0.0
        %1178 = vmatprep.subr.mxu0 0.0
        %1179 = vmatpush1.msra.mxu0 0.0
        %1180 = vmatprep.subr.mxu0 0.0
        %1181 = vmatpush1.msra.mxu0 0.0
        %1182 = vmatprep.subr.mxu0 0.0
        %1183 = vmatpush1.msra.mxu0 0.0
        %1184 = vmatprep.subr.mxu0 0.0
        %1185 = vmatpush1.msra.mxu0 0.0
        %1186 = vmatprep.subr.mxu0 0.0
        %1187 = vmatpush1.msra.mxu0 0.0
        %1188 = vmatprep.subr.mxu0 0.0
        %1189 = vmatpush1.msra.mxu0 0.0
        %1190 = vmatprep.subr.mxu0 0.0
        %1191 = vmatpush1.msra.mxu0 0.0
        %1192 = vmatprep.subr.mxu0 0.0
        %1193 = vmatpush1.msra.mxu0 0.0
        %1194 = vmatprep.subr.mxu0 0.0
        %1195 = vmatpush1.msra.mxu0 0.0
        %1196 = vmatprep.subr.mxu0 0.0
        %1197 = vmatpush1.msra.mxu0 0.0
        %1198 = vmatprep.subr.mxu0 0.0
        %1199 = vmatpush1.msra.mxu0 0.0
        %1200 = vmatprep.subr.mxu0 0.0
        %1201 = vmatpush1.msra.mxu0 0.0
        %1202 = vmatprep.subr.mxu0 0.0
        %1203 = vmatpush1.msra.mxu0 0.0
        %1204 = vmatprep.subr.mxu0 0.0
        %1205 = vmatpush1.msra.mxu0 0.0
        %1206 = vmatprep.subr.mxu0 0.0
        %1207 = vmatpush1.msra.mxu0 0.0
        %1208 = vmatprep.subr.mxu0 0.0
        %1209 = vmatpush1.msra.mxu0 0.0
        %1210 = vmatprep.subr.mxu0 0.0
        %1211 = vmatpush1.msra.mxu0 0.0
        %1212 = vmatprep.subr.mxu0 0.0
        %1213 = vmatpush1.msra.mxu0 0.0
        %1214 = vmatprep.subr.mxu0 0.0
        %1215 = vmatpush1.msra.mxu0 0.0
        %1216 = vmatprep.subr.mxu0 0.0
        %1217 = vmatpush1.msra.mxu0 0.0
        %1218 = vmatprep.subr.mxu0 0.0
        %1219 = vmatpush1.msra.mxu0 0.0
        %1220 = vmatprep.subr.mxu0 0.0
        %1221 = vmatpush1.msra.mxu0 0.0
        %1222 = vmatprep.mubr.f32.mxu0 0.0
        %1223 = vmatmul.mubr.f32.gmra.mrb[0].mxu0 %v1153
        %v1224 = vpop.f32.mrb[0].mxu0
        %v1225 = vadd.f32 0.0, %v1224
        %v1226 = vpop.f32.mrb[0].mxu0
        %1227 = vmatprep.mubr.f32.mxu0 0.0
        %1228 = vmatmul.mubr.f32.gmra.mrb[0].mxu0 %v1156
        %v1229 = vpop.f32.mrb[0].mxu0
        %v1230 = vadd.f32 0.0, %v1229
        %v1231 = vpop.f32.mrb[0].mxu0
        %1232 = vdwg.mxu0
        %1233 = vrot.lane.b32.xlu0 %v478, 64
        %v1234 = vpop.permute.xlu0 %1233
        %1235 = vrot.lane.b32.xlu0 %v483, 64
        %v1236 = vpop.permute.xlu0 %1235
        %v1240 = vsel %vm883, %v969, 0
        %v1243 = vsel %vm883, %v971, 0
        %1245 = vmatprep.subr.mxu0 0.0
        %1246 = vmatpush1.msra.mxu0 %v1234
        %1247 = vmatprep.subr.mxu0 0.0
        %1248 = vmatpush1.msra.mxu0 %v1236
        %1249 = vmatprep.subr.mxu0 0.0
        %1250 = vmatpush1.msra.mxu0 0.0
        %1251 = vmatprep.subr.mxu0 0.0
        %1252 = vmatpush1.msra.mxu0 0.0
        %1253 = vmatprep.subr.mxu0 0.0
        %1254 = vmatpush1.msra.mxu0 0.0
        %1255 = vmatprep.subr.mxu0 0.0
        %1256 = vmatpush1.msra.mxu0 0.0
        %1257 = vmatprep.subr.mxu0 0.0
        %1258 = vmatpush1.msra.mxu0 0.0
        %1259 = vmatprep.subr.mxu0 0.0
        %1260 = vmatpush1.msra.mxu0 0.0
        %1261 = vmatprep.subr.mxu0 0.0
        %1262 = vmatpush1.msra.mxu0 0.0
        %1263 = vmatprep.subr.mxu0 0.0
        %1264 = vmatpush1.msra.mxu0 0.0
        %1265 = vmatprep.subr.mxu0 0.0
        %1266 = vmatpush1.msra.mxu0 0.0
        %1267 = vmatprep.subr.mxu0 0.0
        %1268 = vmatpush1.msra.mxu0 0.0
        %1269 = vmatprep.subr.mxu0 0.0
        %1270 = vmatpush1.msra.mxu0 0.0
        %1271 = vmatprep.subr.mxu0 0.0
        %1272 = vmatpush1.msra.mxu0 0.0
        %1273 = vmatprep.subr.mxu0 0.0
        %1274 = vmatpush1.msra.mxu0 0.0
        %1275 = vmatprep.subr.mxu0 0.0
        %1276 = vmatpush1.msra.mxu0 0.0
        %1277 = vmatprep.subr.mxu0 0.0
        %1278 = vmatpush1.msra.mxu0 0.0
        %1279 = vmatprep.subr.mxu0 0.0
        %1280 = vmatpush1.msra.mxu0 0.0
        %1281 = vmatprep.subr.mxu0 0.0
        %1282 = vmatpush1.msra.mxu0 0.0
        %1283 = vmatprep.subr.mxu0 0.0
        %1284 = vmatpush1.msra.mxu0 0.0
        %1285 = vmatprep.subr.mxu0 0.0
        %1286 = vmatpush1.msra.mxu0 0.0
        %1287 = vmatprep.subr.mxu0 0.0
        %1288 = vmatpush1.msra.mxu0 0.0
        %1289 = vmatprep.subr.mxu0 0.0
        %1290 = vmatpush1.msra.mxu0 0.0
        %1291 = vmatprep.subr.mxu0 0.0
        %1292 = vmatpush1.msra.mxu0 0.0
        %1293 = vmatprep.subr.mxu0 0.0
        %1294 = vmatpush1.msra.mxu0 0.0
        %1295 = vmatprep.subr.mxu0 0.0
        %1296 = vmatpush1.msra.mxu0 0.0
        %1297 = vmatprep.subr.mxu0 0.0
        %1298 = vmatpush1.msra.mxu0 0.0
        %1299 = vmatprep.subr.mxu0 0.0
        %1300 = vmatpush1.msra.mxu0 0.0
        %1301 = vmatprep.subr.mxu0 0.0
        %1302 = vmatpush1.msra.mxu0 0.0
        %1303 = vmatprep.subr.mxu0 0.0
        %1304 = vmatpush1.msra.mxu0 0.0
        %1305 = vmatprep.subr.mxu0 0.0
        %1306 = vmatpush1.msra.mxu0 0.0
        %1307 = vmatprep.subr.mxu0 0.0
        %1308 = vmatpush1.msra.mxu0 0.0
        %1309 = vmatprep.mubr.f32.mxu0 0.0
        %1310 = vmatmul.mubr.f32.gmra.mrb[0].mxu0 %v1240
        %v1311 = vpop.f32.mrb[0].mxu0
        %v1312 = vadd.f32 0.0, %v1311
        %v1313 = vpop.f32.mrb[0].mxu0
        %1314 = vmatprep.mubr.f32.mxu0 0.0
        %1315 = vmatmul.mubr.f32.gmra.mrb[0].mxu0 %v1243
        %v1316 = vpop.f32.mrb[0].mxu0
        %v1317 = vadd.f32 0.0, %v1316
        %v1318 = vpop.f32.mrb[0].mxu0
        %1319 = vdwg.mxu0
        %1320 = vrot.lane.b32.xlu0 %v502, 120
        %v1321 = vpop.permute.xlu0 %1320
        %1322 = vrot.lane.b32.xlu0 %v503, 120
        %v1323 = vpop.permute.xlu0 %1322
        %1324 = vrot.lane.b32.xlu0 %v448, 88
        %v1325 = vpop.permute.xlu0 %1324
        %1326 = vrot.lane.b32.xlu0 %v453, 88
        %v1327 = vpop.permute.xlu0 %1326
        %v1328 = vsel %vm516, %v1321, 0
        %v1330 = vsel %vm516, %v1323, 0
        %v1332 = vsel %vm516, %v1325, 0
        %v1334 = vsel %vm516, %v1327, 0
        %1336 = vmatprep.subr.mxu0 0.0
        %1337 = vmatpush1.xpose.msra.mxu0 %v1332
        %1338 = vmatprep.subr.mxu0 0.0
        %1339 = vmatpush1.xpose.msra.mxu0 %v1334
        %1340 = vmatprep.subr.mxu0 0.0
        %1341 = vmatpush1.xpose.msra.mxu0 0.0
        %1342 = vmatprep.subr.mxu0 0.0
        %1343 = vmatpush1.xpose.msra.mxu0 0.0
        %1344 = vmatprep.subr.mxu0 0.0
        %1345 = vmatpush1.xpose.msra.mxu0 0.0
        %1346 = vmatprep.subr.mxu0 0.0
        %1347 = vmatpush1.xpose.msra.mxu0 0.0
        %1348 = vmatprep.subr.mxu0 0.0
        %1349 = vmatpush1.xpose.msra.mxu0 0.0
        %1350 = vmatprep.subr.mxu0 0.0
        %1351 = vmatpush1.xpose.msra.mxu0 0.0
        %1352 = vmatprep.subr.mxu0 0.0
        %1353 = vmatpush1.xpose.msra.mxu0 0.0
        %1354 = vmatprep.subr.mxu0 0.0
        %1355 = vmatpush1.xpose.msra.mxu0 0.0
        %1356 = vmatprep.subr.mxu0 0.0
        %1357 = vmatpush1.xpose.msra.mxu0 0.0
        %1358 = vmatprep.subr.mxu0 0.0
        %1359 = vmatpush1.xpose.msra.mxu0 0.0
        %1360 = vmatprep.subr.mxu0 0.0
        %1361 = vmatpush1.xpose.msra.mxu0 0.0
        %1362 = vmatprep.subr.mxu0 0.0
        %1363 = vmatpush1.xpose.msra.mxu0 0.0
        %1364 = vmatprep.subr.mxu0 0.0
        %1365 = vmatpush1.xpose.msra.mxu0 0.0
        %1366 = vmatprep.subr.mxu0 0.0
        %1367 = vmatpush1.xpose.msra.mxu0 0.0
        %1368 = vmatprep.subr.mxu0 0.0
        %1369 = vmatpush1.xpose.msra.mxu0 0.0
        %1370 = vmatprep.subr.mxu0 0.0
        %1371 = vmatpush1.xpose.msra.mxu0 0.0
        %1372 = vmatprep.subr.mxu0 0.0
        %1373 = vmatpush1.xpose.msra.mxu0 0.0
        %1374 = vmatprep.subr.mxu0 0.0
        %1375 = vmatpush1.xpose.msra.mxu0 0.0
        %1376 = vmatprep.subr.mxu0 0.0
        %1377 = vmatpush1.xpose.msra.mxu0 0.0
        %1378 = vmatprep.subr.mxu0 0.0
        %1379 = vmatpush1.xpose.msra.mxu0 0.0
        %1380 = vmatprep.subr.mxu0 0.0
        %1381 = vmatpush1.xpose.msra.mxu0 0.0
        %1382 = vmatprep.subr.mxu0 0.0
        %1383 = vmatpush1.xpose.msra.mxu0 0.0
        %1384 = vmatprep.subr.mxu0 0.0
        %1385 = vmatpush1.xpose.msra.mxu0 0.0
        %1386 = vmatprep.subr.mxu0 0.0
        %1387 = vmatpush1.xpose.msra.mxu0 0.0
        %1388 = vmatprep.subr.mxu0 0.0
        %1389 = vmatpush1.xpose.msra.mxu0 0.0
        %1390 = vmatprep.subr.mxu0 0.0
        %1391 = vmatpush1.xpose.msra.mxu0 0.0
        %1392 = vmatprep.subr.mxu0 0.0
        %1393 = vmatpush1.xpose.msra.mxu0 0.0
        %1394 = vmatprep.subr.mxu0 0.0
        %1395 = vmatpush1.xpose.msra.mxu0 0.0
        %1396 = vmatprep.subr.mxu0 0.0
        %1397 = vmatpush1.xpose.msra.mxu0 0.0
        %1398 = vmatprep.subr.mxu0 0.0
        %1399 = vmatpush1.xpose.msra.mxu0 0.0
        %1400 = vmatprep.mubr.f32.mxu0 0.0
        %1401 = vmatmul.mubr.f32.gmra.mrb[0].mxu0 %v1328
        %v1402 = vpop.f32.mrb[0].mxu0
        %v1403 = vadd.f32 %v488, %v1402
        %v1404 = vpop.f32.mrb[0].mxu0
        %1405 = vmatprep.mubr.f32.mxu0 0.0
        %1406 = vmatmul.mubr.f32.gmra.mrb[0].mxu0 %v1330
        %v1407 = vpop.f32.mrb[0].mxu0
        %v1408 = vadd.f32 %v489, %v1407
        %v1409 = vpop.f32.mrb[0].mxu0
        %1410 = vdwg.mxu0
        %1411 = vrot.lane.b32.xlu0 %v504, 120
        %v1412 = vpop.permute.xlu0 %1411
        %1413 = vrot.lane.b32.xlu0 %v505, 120
        %v1414 = vpop.permute.xlu0 %1413
        %1415 = vrot.lane.b32.xlu0 %v458, 88
        %v1416 = vpop.permute.xlu0 %1415
        %1417 = vrot.lane.b32.xlu0 %v463, 88
        %v1418 = vpop.permute.xlu0 %1417
        %v1419 = vsel %vm516, %v1412, 0
        %v1421 = vsel %vm516, %v1414, 0
        %v1423 = vsel %vm516, %v1416, 0
        %v1425 = vsel %vm516, %v1418, 0
        %1427 = vmatprep.subr.mxu0 0.0
        %1428 = vmatpush1.xpose.msra.mxu0 %v1423
        %1429 = vmatprep.subr.mxu0 0.0
        %1430 = vmatpush1.xpose.msra.mxu0 %v1425
        %1431 = vmatprep.subr.mxu0 0.0
        %1432 = vmatpush1.xpose.msra.mxu0 0.0
        %1433 = vmatprep.subr.mxu0 0.0
        %1434 = vmatpush1.xpose.msra.mxu0 0.0
        %1435 = vmatprep.subr.mxu0 0.0
        %1436 = vmatpush1.xpose.msra.mxu0 0.0
        %1437 = vmatprep.subr.mxu0 0.0
        %1438 = vmatpush1.xpose.msra.mxu0 0.0
        %1439 = vmatprep.subr.mxu0 0.0
        %1440 = vmatpush1.xpose.msra.mxu0 0.0
        %1441 = vmatprep.subr.mxu0 0.0
        %1442 = vmatpush1.xpose.msra.mxu0 0.0
        %1443 = vmatprep.subr.mxu0 0.0
        %1444 = vmatpush1.xpose.msra.mxu0 0.0
        %1445 = vmatprep.subr.mxu0 0.0
        %1446 = vmatpush1.xpose.msra.mxu0 0.0
        %1447 = vmatprep.subr.mxu0 0.0
        %1448 = vmatpush1.xpose.msra.mxu0 0.0
        %1449 = vmatprep.subr.mxu0 0.0
        %1450 = vmatpush1.xpose.msra.mxu0 0.0
        %1451 = vmatprep.subr.mxu0 0.0
        %1452 = vmatpush1.xpose.msra.mxu0 0.0
        %1453 = vmatprep.subr.mxu0 0.0
        %1454 = vmatpush1.xpose.msra.mxu0 0.0
        %1455 = vmatprep.subr.mxu0 0.0
        %1456 = vmatpush1.xpose.msra.mxu0 0.0
        %1457 = vmatprep.subr.mxu0 0.0
        %1458 = vmatpush1.xpose.msra.mxu0 0.0
        %1459 = vmatprep.subr.mxu0 0.0
        %1460 = vmatpush1.xpose.msra.mxu0 0.0
        %1461 = vmatprep.subr.mxu0 0.0
        %1462 = vmatpush1.xpose.msra.mxu0 0.0
        %1463 = vmatprep.subr.mxu0 0.0
        %1464 = vmatpush1.xpose.msra.mxu0 0.0
        %1465 = vmatprep.subr.mxu0 0.0
        %1466 = vmatpush1.xpose.msra.mxu0 0.0
        %1467 = vmatprep.subr.mxu0 0.0
        %1468 = vmatpush1.xpose.msra.mxu0 0.0
        %1469 = vmatprep.subr.mxu0 0.0
        %1470 = vmatpush1.xpose.msra.mxu0 0.0
        %1471 = vmatprep.subr.mxu0 0.0
        %1472 = vmatpush1.xpose.msra.mxu0 0.0
        %1473 = vmatprep.subr.mxu0 0.0
        %1474 = vmatpush1.xpose.msra.mxu0 0.0
        %1475 = vmatprep.subr.mxu0 0.0
        %1476 = vmatpush1.xpose.msra.mxu0 0.0
        %1477 = vmatprep.subr.mxu0 0.0
        %1478 = vmatpush1.xpose.msra.mxu0 0.0
        %1479 = vmatprep.subr.mxu0 0.0
        %1480 = vmatpush1.xpose.msra.mxu0 0.0
        %1481 = vmatprep.subr.mxu0 0.0
        %1482 = vmatpush1.xpose.msra.mxu0 0.0
        %1483 = vmatprep.subr.mxu0 0.0
        %1484 = vmatpush1.xpose.msra.mxu0 0.0
        %1485 = vmatprep.subr.mxu0 0.0
        %1486 = vmatpush1.xpose.msra.mxu0 0.0
        %1487 = vmatprep.subr.mxu0 0.0
        %1488 = vmatpush1.xpose.msra.mxu0 0.0
        %1489 = vmatprep.subr.mxu0 0.0
        %1490 = vmatpush1.xpose.msra.mxu0 0.0
        %1491 = vmatprep.mubr.f32.mxu0 0.0
        %1492 = vmatmul.mubr.f32.gmra.mrb[0].mxu0 %v1419
        %v1493 = vpop.f32.mrb[0].mxu0
        %v1494 = vadd.f32 %v488, %v1493
        %v1495 = vpop.f32.mrb[0].mxu0
        %1496 = vmatprep.mubr.f32.mxu0 0.0
        %1497 = vmatmul.mubr.f32.gmra.mrb[0].mxu0 %v1421
        %v1498 = vpop.f32.mrb[0].mxu0
        %v1499 = vadd.f32 %v489, %v1498
        %v1500 = vpop.f32.mrb[0].mxu0
        %1501 = vdwg.mxu0
        %1502 = vrot.lane.b32.xlu0 %v506, 120
        %v1503 = vpop.permute.xlu0 %1502
        %1504 = vrot.lane.b32.xlu0 %v507, 120
        %v1505 = vpop.permute.xlu0 %1504
        %1506 = vrot.lane.b32.xlu0 %v468, 88
        %v1507 = vpop.permute.xlu0 %1506
        %1508 = vrot.lane.b32.xlu0 %v473, 88
        %v1509 = vpop.permute.xlu0 %1508
        %v1510 = vsel %vm516, %v1503, 0
        %v1512 = vsel %vm516, %v1505, 0
        %v1514 = vsel %vm516, %v1507, 0
        %v1516 = vsel %vm516, %v1509, 0
        %1518 = vmatprep.subr.mxu0 0.0
        %1519 = vmatpush1.xpose.msra.mxu0 %v1514
        %1520 = vmatprep.subr.mxu0 0.0
        %1521 = vmatpush1.xpose.msra.mxu0 %v1516
        %1522 = vmatprep.subr.mxu0 0.0
        %1523 = vmatpush1.xpose.msra.mxu0 0.0
        %1524 = vmatprep.subr.mxu0 0.0
        %1525 = vmatpush1.xpose.msra.mxu0 0.0
        %1526 = vmatprep.subr.mxu0 0.0
        %1527 = vmatpush1.xpose.msra.mxu0 0.0
        %1528 = vmatprep.subr.mxu0 0.0
        %1529 = vmatpush1.xpose.msra.mxu0 0.0
        %1530 = vmatprep.subr.mxu0 0.0
        %1531 = vmatpush1.xpose.msra.mxu0 0.0
        %1532 = vmatprep.subr.mxu0 0.0
        %1533 = vmatpush1.xpose.msra.mxu0 0.0
        %1534 = vmatprep.subr.mxu0 0.0
        %1535 = vmatpush1.xpose.msra.mxu0 0.0
        %1536 = vmatprep.subr.mxu0 0.0
        %1537 = vmatpush1.xpose.msra.mxu0 0.0
        %1538 = vmatprep.subr.mxu0 0.0
        %1539 = vmatpush1.xpose.msra.mxu0 0.0
        %1540 = vmatprep.subr.mxu0 0.0
        %1541 = vmatpush1.xpose.msra.mxu0 0.0
        %1542 = vmatprep.subr.mxu0 0.0
        %1543 = vmatpush1.xpose.msra.mxu0 0.0
        %1544 = vmatprep.subr.mxu0 0.0
        %1545 = vmatpush1.xpose.msra.mxu0 0.0
        %1546 = vmatprep.subr.mxu0 0.0
        %1547 = vmatpush1.xpose.msra.mxu0 0.0
        %1548 = vmatprep.subr.mxu0 0.0
        %1549 = vmatpush1.xpose.msra.mxu0 0.0
        %1550 = vmatprep.subr.mxu0 0.0
        %1551 = vmatpush1.xpose.msra.mxu0 0.0
        %1552 = vmatprep.subr.mxu0 0.0
        %1553 = vmatpush1.xpose.msra.mxu0 0.0
        %1554 = vmatprep.subr.mxu0 0.0
        %1555 = vmatpush1.xpose.msra.mxu0 0.0
        %1556 = vmatprep.subr.mxu0 0.0
        %1557 = vmatpush1.xpose.msra.mxu0 0.0
        %1558 = vmatprep.subr.mxu0 0.0
        %1559 = vmatpush1.xpose.msra.mxu0 0.0
        %1560 = vmatprep.subr.mxu0 0.0
        %1561 = vmatpush1.xpose.msra.mxu0 0.0
        %1562 = vmatprep.subr.mxu0 0.0
        %1563 = vmatpush1.xpose.msra.mxu0 0.0
        %1564 = vmatprep.subr.mxu0 0.0
        %1565 = vmatpush1.xpose.msra.mxu0 0.0
        %1566 = vmatprep.subr.mxu0 0.0
        %1567 = vmatpush1.xpose.msra.mxu0 0.0
        %1568 = vmatprep.subr.mxu0 0.0
        %1569 = vmatpush1.xpose.msra.mxu0 0.0
        %1570 = vmatprep.subr.mxu0 0.0
        %1571 = vmatpush1.xpose.msra.mxu0 0.0
        %1572 = vmatprep.subr.mxu0 0.0
        %1573 = vmatpush1.xpose.msra.mxu0 0.0
        %1574 = vmatprep.subr.mxu0 0.0
        %1575 = vmatpush1.xpose.msra.mxu0 0.0
        %1576 = vmatprep.subr.mxu0 0.0
        %1577 = vmatpush1.xpose.msra.mxu0 0.0
        %1578 = vmatprep.subr.mxu0 0.0
        %1579 = vmatpush1.xpose.msra.mxu0 0.0
        %1580 = vmatprep.subr.mxu0 0.0
        %1581 = vmatpush1.xpose.msra.mxu0 0.0
        %1582 = vmatprep.mubr.f32.mxu0 0.0
        %1583 = vmatmul.mubr.f32.gmra.mrb[0].mxu0 %v1510
        %v1584 = vpop.f32.mrb[0].mxu0
        %v1585 = vadd.f32 %v488, %v1584
        %v1586 = vpop.f32.mrb[0].mxu0
        %1587 = vmatprep.mubr.f32.mxu0 0.0
        %1588 = vmatmul.mubr.f32.gmra.mrb[0].mxu0 %v1512
        %v1589 = vpop.f32.mrb[0].mxu0
        %v1590 = vadd.f32 %v489, %v1589
        %v1591 = vpop.f32.mrb[0].mxu0
        %1592 = vdwg.mxu0
        %1593 = vrot.lane.b32.xlu0 %v508, 120
        %v1594 = vpop.permute.xlu0 %1593
        %1595 = vrot.lane.b32.xlu0 %v509, 120
        %v1596 = vpop.permute.xlu0 %1595
        %1597 = vrot.lane.b32.xlu0 %v478, 88
        %v1598 = vpop.permute.xlu0 %1597
        %1599 = vrot.lane.b32.xlu0 %v483, 88
        %v1600 = vpop.permute.xlu0 %1599
        %v1601 = vsel %vm516, %v1594, 0
        %v1603 = vsel %vm516, %v1596, 0
        %v1605 = vsel %vm516, %v1598, 0
        %v1607 = vsel %vm516, %v1600, 0
        %1609 = vmatprep.subr.mxu0 0.0
        %1610 = vmatpush1.xpose.msra.mxu0 %v1605
        %1611 = vmatprep.subr.mxu0 0.0
        %1612 = vmatpush1.xpose.msra.mxu0 %v1607
        %1613 = vmatprep.subr.mxu0 0.0
        %1614 = vmatpush1.xpose.msra.mxu0 0.0
        %1615 = vmatprep.subr.mxu0 0.0
        %1616 = vmatpush1.xpose.msra.mxu0 0.0
        %1617 = vmatprep.subr.mxu0 0.0
        %1618 = vmatpush1.xpose.msra.mxu0 0.0
        %1619 = vmatprep.subr.mxu0 0.0
        %1620 = vmatpush1.xpose.msra.mxu0 0.0
        %1621 = vmatprep.subr.mxu0 0.0
        %1622 = vmatpush1.xpose.msra.mxu0 0.0
        %1623 = vmatprep.subr.mxu0 0.0
        %1624 = vmatpush1.xpose.msra.mxu0 0.0
        %1625 = vmatprep.subr.mxu0 0.0
        %1626 = vmatpush1.xpose.msra.mxu0 0.0
        %1627 = vmatprep.subr.mxu0 0.0
        %1628 = vmatpush1.xpose.msra.mxu0 0.0
        %1629 = vmatprep.subr.mxu0 0.0
        %1630 = vmatpush1.xpose.msra.mxu0 0.0
        %1631 = vmatprep.subr.mxu0 0.0
        %1632 = vmatpush1.xpose.msra.mxu0 0.0
        %1633 = vmatprep.subr.mxu0 0.0
        %1634 = vmatpush1.xpose.msra.mxu0 0.0
        %1635 = vmatprep.subr.mxu0 0.0
        %1636 = vmatpush1.xpose.msra.mxu0 0.0
        %1637 = vmatprep.subr.mxu0 0.0
        %1638 = vmatpush1.xpose.msra.mxu0 0.0
        %1639 = vmatprep.subr.mxu0 0.0
        %1640 = vmatpush1.xpose.msra.mxu0 0.0
        %1641 = vmatprep.subr.mxu0 0.0
        %1642 = vmatpush1.xpose.msra.mxu0 0.0
        %1643 = vmatprep.subr.mxu0 0.0
        %1644 = vmatpush1.xpose.msra.mxu0 0.0
        %1645 = vmatprep.subr.mxu0 0.0
        %1646 = vmatpush1.xpose.msra.mxu0 0.0
        %1647 = vmatprep.subr.mxu0 0.0
        %1648 = vmatpush1.xpose.msra.mxu0 0.0
        %1649 = vmatprep.subr.mxu0 0.0
        %1650 = vmatpush1.xpose.msra.mxu0 0.0
        %1651 = vmatprep.subr.mxu0 0.0
        %1652 = vmatpush1.xpose.msra.mxu0 0.0
        %1653 = vmatprep.subr.mxu0 0.0
        %1654 = vmatpush1.xpose.msra.mxu0 0.0
        %1655 = vmatprep.subr.mxu0 0.0
        %1656 = vmatpush1.xpose.msra.mxu0 0.0
        %1657 = vmatprep.subr.mxu0 0.0
        %1658 = vmatpush1.xpose.msra.mxu0 0.0
        %1659 = vmatprep.subr.mxu0 0.0
        %1660 = vmatpush1.xpose.msra.mxu0 0.0
        %1661 = vmatprep.subr.mxu0 0.0
        %1662 = vmatpush1.xpose.msra.mxu0 0.0
        %1663 = vmatprep.subr.mxu0 0.0
        %1664 = vmatpush1.xpose.msra.mxu0 0.0
        %1665 = vmatprep.subr.mxu0 0.0
        %1666 = vmatpush1.xpose.msra.mxu0 0.0
        %1667 = vmatprep.subr.mxu0 0.0
        %1668 = vmatpush1.xpose.msra.mxu0 0.0
        %1669 = vmatprep.subr.mxu0 0.0
        %1670 = vmatpush1.xpose.msra.mxu0 0.0
        %1671 = vmatprep.subr.mxu0 0.0
        %1672 = vmatpush1.xpose.msra.mxu0 0.0
        %1673 = vmatprep.mubr.f32.mxu0 0.0
        %1674 = vmatmul.mubr.f32.gmra.mrb[0].mxu0 %v1601
        %v1675 = vpop.f32.mrb[0].mxu0
        %v1676 = vadd.f32 %v488, %v1675
        %v1677 = vpop.f32.mrb[0].mxu0
        %1678 = vmatprep.mubr.f32.mxu0 0.0
        %1679 = vmatmul.mubr.f32.gmra.mrb[0].mxu0 %v1603
        %v1680 = vpop.f32.mrb[0].mxu0
        %v1681 = vadd.f32 %v489, %v1680
        %v1682 = vpop.f32.mrb[0].mxu0
        %1683 = vdwg.mxu0
        %v1684 = vadd.f32 %v1403, %v494
        %v1685 = vadd.f32 %v1408, %v495
        %v1686 = vadd.f32 %v1494, %v496
        %v1687 = vadd.f32 %v1499, %v497
        %v1688 = vadd.f32 %v1585, %v498
        %v1689 = vadd.f32 %v1590, %v499
        %v1690 = vadd.f32 %v1676, %v500
        %v1691 = vadd.f32 %v1681, %v501
        %v1692 = vsel %vm883, %v1684, -inf
        %1693 = vmax.xlane.f32.xlu0 %v1692
        %v1694 = vpop.xlane.xlu0 %1693
        %v1695 = vsel %vm883, %v1685, -inf
        %1696 = vmax.xlane.f32.xlu0 %v1695
        %v1697 = vpop.xlane.xlu0 %1696
        %v1698 = vsel %vm883, %v1686, -inf
        %1699 = vmax.xlane.f32.xlu0 %v1698
        %v1700 = vpop.xlane.xlu0 %1699
        %v1701 = vsel %vm883, %v1687, -inf
        %1702 = vmax.xlane.f32.xlu0 %v1701
        %v1703 = vpop.xlane.xlu0 %1702
        %v1704 = vsel %vm883, %v1688, -inf
        %1705 = vmax.xlane.f32.xlu0 %v1704
        %v1706 = vpop.xlane.xlu0 %1705
        %v1707 = vsel %vm883, %v1689, -inf
        %1708 = vmax.xlane.f32.xlu0 %v1707
        %v1709 = vpop.xlane.xlu0 %1708
        %v1710 = vsel %vm883, %v1690, -inf
        %1711 = vmax.xlane.f32.xlu0 %v1710
        %v1712 = vpop.xlane.xlu0 %1711
        %v1713 = vsel %vm883, %v1691, -inf
        %1714 = vmax.xlane.f32.xlu0 %v1713
        %v1715 = vpop.xlane.xlu0 %1714
        %v1716 = vsub.f32 %v1684, %v1694
        %v1717 = vsub.f32 %v1685, %v1697
        %v1718 = vsub.f32 %v1686, %v1700
        %v1719 = vsub.f32 %v1687, %v1703
        %v1720 = vsub.f32 %v1688, %v1706
        %v1721 = vsub.f32 %v1689, %v1709
        %v1722 = vsub.f32 %v1690, %v1712
        %v1723 = vsub.f32 %v1691, %v1715
        %v1724 = vmul.f32 %v1716, 1.442695
        %v1725 = vpow.pop %v1724
        %v1726 = vmul.f32 %v1717, 1.442695
        %v1727 = vpow.pop %v1726
        %v1728 = vmul.f32 %v1718, 1.442695
        %v1729 = vpow.pop %v1728
        %v1730 = vmul.f32 %v1719, 1.442695
        %v1731 = vpow.pop %v1730
        %v1732 = vmul.f32 %v1720, 1.442695
        %v1733 = vpow.pop %v1732
        %v1734 = vmul.f32 %v1721, 1.442695
        %v1735 = vpow.pop %v1734
        %v1736 = vmul.f32 %v1722, 1.442695
        %v1737 = vpow.pop %v1736
        %v1738 = vmul.f32 %v1723, 1.442695
        %v1739 = vpow.pop %v1738
        %v1740 = vsel %vm883, %v1725, 0.0
        %1741 = vadd.xlane.f32.xlu0 %v1740
        %v1742 = vpop.xlane.xlu0 %1741
        %v1743 = vsel %vm883, %v1727, 0.0
        %1744 = vadd.xlane.f32.xlu0 %v1743
        %v1745 = vpop.xlane.xlu0 %1744
        %v1746 = vsel %vm883, %v1729, 0.0
        %1747 = vadd.xlane.f32.xlu0 %v1746
        %v1748 = vpop.xlane.xlu0 %1747
        %v1749 = vsel %vm883, %v1731, 0.0
        %1750 = vadd.xlane.f32.xlu0 %v1749
        %v1751 = vpop.xlane.xlu0 %1750
        %v1752 = vsel %vm883, %v1733, 0.0
        %1753 = vadd.xlane.f32.xlu0 %v1752
        %v1754 = vpop.xlane.xlu0 %1753
        %v1755 = vsel %vm883, %v1735, 0.0
        %1756 = vadd.xlane.f32.xlu0 %v1755
        %v1757 = vpop.xlane.xlu0 %1756
        %v1758 = vsel %vm883, %v1737, 0.0
        %1759 = vadd.xlane.f32.xlu0 %v1758
        %v1760 = vpop.xlane.xlu0 %1759
        %v1761 = vsel %vm883, %v1739, 0.0
        %1762 = vadd.xlane.f32.xlu0 %v1761
        %v1763 = vpop.xlane.xlu0 %1762
        %v1764 = vrcp.pop %v1742
        %v1765 = vmul.f32 %v1725, %v1764
        %v1766 = vrcp.pop %v1745
        %v1767 = vmul.f32 %v1727, %v1766
        %v1768 = vrcp.pop %v1748
        %v1769 = vmul.f32 %v1729, %v1768
        %v1770 = vrcp.pop %v1751
        %v1771 = vmul.f32 %v1731, %v1770
        %v1772 = vrcp.pop %v1754
        %v1773 = vmul.f32 %v1733, %v1772
        %v1774 = vrcp.pop %v1757
        %v1775 = vmul.f32 %v1735, %v1774
        %v1776 = vrcp.pop %v1760
        %v1777 = vmul.f32 %v1737, %v1776
        %v1778 = vrcp.pop %v1763
        %v1779 = vmul.f32 %v1739, %v1778
        %1780 = vrot.lane.b32.xlu0 %v448, 56
        %v1781 = vpop.permute.xlu0 %1780
        %1782 = vrot.lane.b32.xlu0 %v453, 56
        %v1783 = vpop.permute.xlu0 %1782
        %v1787 = vsel %vm883, %v1765, 0
        %v1790 = vsel %vm883, %v1767, 0
        %1792 = vmatprep.subr.mxu0 0.0
        %1793 = vmatpush1.msra.mxu0 %v1781
        %1794 = vmatprep.subr.mxu0 0.0
        %1795 = vmatpush1.msra.mxu0 %v1783
        %1796 = vmatprep.subr.mxu0 0.0
        %1797 = vmatpush1.msra.mxu0 0.0
        %1798 = vmatprep.subr.mxu0 0.0
        %1799 = vmatpush1.msra.mxu0 0.0
        %1800 = vmatprep.subr.mxu0 0.0
        %1801 = vmatpush1.msra.mxu0 0.0
        %1802 = vmatprep.subr.mxu0 0.0
        %1803 = vmatpush1.msra.mxu0 0.0
        %1804 = vmatprep.subr.mxu0 0.0
        %1805 = vmatpush1.msra.mxu0 0.0
        %1806 = vmatprep.subr.mxu0 0.0
        %1807 = vmatpush1.msra.mxu0 0.0
        %1808 = vmatprep.subr.mxu0 0.0
        %1809 = vmatpush1.msra.mxu0 0.0
        %1810 = vmatprep.subr.mxu0 0.0
        %1811 = vmatpush1.msra.mxu0 0.0
        %1812 = vmatprep.subr.mxu0 0.0
        %1813 = vmatpush1.msra.mxu0 0.0
        %1814 = vmatprep.subr.mxu0 0.0
        %1815 = vmatpush1.msra.mxu0 0.0
        %1816 = vmatprep.subr.mxu0 0.0
        %1817 = vmatpush1.msra.mxu0 0.0
        %1818 = vmatprep.subr.mxu0 0.0
        %1819 = vmatpush1.msra.mxu0 0.0
        %1820 = vmatprep.subr.mxu0 0.0
        %1821 = vmatpush1.msra.mxu0 0.0
        %1822 = vmatprep.subr.mxu0 0.0
        %1823 = vmatpush1.msra.mxu0 0.0
        %1824 = vmatprep.subr.mxu0 0.0
        %1825 = vmatpush1.msra.mxu0 0.0
        %1826 = vmatprep.subr.mxu0 0.0
        %1827 = vmatpush1.msra.mxu0 0.0
        %1828 = vmatprep.subr.mxu0 0.0
        %1829 = vmatpush1.msra.mxu0 0.0
        %1830 = vmatprep.subr.mxu0 0.0
        %1831 = vmatpush1.msra.mxu0 0.0
        %1832 = vmatprep.subr.mxu0 0.0
        %1833 = vmatpush1.msra.mxu0 0.0
        %1834 = vmatprep.subr.mxu0 0.0
        %1835 = vmatpush1.msra.mxu0 0.0
        %1836 = vmatprep.subr.mxu0 0.0
        %1837 = vmatpush1.msra.mxu0 0.0
        %1838 = vmatprep.subr.mxu0 0.0
        %1839 = vmatpush1.msra.mxu0 0.0
        %1840 = vmatprep.subr.mxu0 0.0
        %1841 = vmatpush1.msra.mxu0 0.0
        %1842 = vmatprep.subr.mxu0 0.0
        %1843 = vmatpush1.msra.mxu0 0.0
        %1844 = vmatprep.subr.mxu0 0.0
        %1845 = vmatpush1.msra.mxu0 0.0
        %1846 = vmatprep.subr.mxu0 0.0
        %1847 = vmatpush1.msra.mxu0 0.0
        %1848 = vmatprep.subr.mxu0 0.0
        %1849 = vmatpush1.msra.mxu0 0.0
        %1850 = vmatprep.subr.mxu0 0.0
        %1851 = vmatpush1.msra.mxu0 0.0
        %1852 = vmatprep.subr.mxu0 0.0
        %1853 = vmatpush1.msra.mxu0 0.0
        %1854 = vmatprep.subr.mxu0 0.0
        %1855 = vmatpush1.msra.mxu0 0.0
        %1856 = vmatprep.mubr.f32.mxu0 0.0
        %1857 = vmatmul.mubr.f32.gmra.mrb[0].mxu0 %v1787
        %v1858 = vpop.f32.mrb[0].mxu0
        %v1859 = vadd.f32 0.0, %v1858
        %v1860 = vpop.f32.mrb[0].mxu0
        %1861 = vmatprep.mubr.f32.mxu0 0.0
        %1862 = vmatmul.mubr.f32.gmra.mrb[0].mxu0 %v1790
        %v1863 = vpop.f32.mrb[0].mxu0
        %v1864 = vadd.f32 0.0, %v1863
        %v1865 = vpop.f32.mrb[0].mxu0
        %1866 = vdwg.mxu0
        %1867 = vrot.lane.b32.xlu0 %v458, 56
        %v1868 = vpop.permute.xlu0 %1867
        %1869 = vrot.lane.b32.xlu0 %v463, 56
        %v1870 = vpop.permute.xlu0 %1869
        %v1874 = vsel %vm883, %v1769, 0
        %v1877 = vsel %vm883, %v1771, 0
        %1879 = vmatprep.subr.mxu0 0.0
        %1880 = vmatpush1.msra.mxu0 %v1868
        %1881 = vmatprep.subr.mxu0 0.0
        %1882 = vmatpush1.msra.mxu0 %v1870
        %1883 = vmatprep.subr.mxu0 0.0
        %1884 = vmatpush1.msra.mxu0 0.0
        %1885 = vmatprep.subr.mxu0 0.0
        %1886 = vmatpush1.msra.mxu0 0.0
        %1887 = vmatprep.subr.mxu0 0.0
        %1888 = vmatpush1.msra.mxu0 0.0
        %1889 = vmatprep.subr.mxu0 0.0
        %1890 = vmatpush1.msra.mxu0 0.0
        %1891 = vmatprep.subr.mxu0 0.0
        %1892 = vmatpush1.msra.mxu0 0.0
        %1893 = vmatprep.subr.mxu0 0.0
        %1894 = vmatpush1.msra.mxu0 0.0
        %1895 = vmatprep.subr.mxu0 0.0
        %1896 = vmatpush1.msra.mxu0 0.0
        %1897 = vmatprep.subr.mxu0 0.0
        %1898 = vmatpush1.msra.mxu0 0.0
        %1899 = vmatprep.subr.mxu0 0.0
        %1900 = vmatpush1.msra.mxu0 0.0
        %1901 = vmatprep.subr.mxu0 0.0
        %1902 = vmatpush1.msra.mxu0 0.0
        %1903 = vmatprep.subr.mxu0 0.0
        %1904 = vmatpush1.msra.mxu0 0.0
        %1905 = vmatprep.subr.mxu0 0.0
        %1906 = vmatpush1.msra.mxu0 0.0
        %1907 = vmatprep.subr.mxu0 0.0
        %1908 = vmatpush1.msra.mxu0 0.0
        %1909 = vmatprep.subr.mxu0 0.0
        %1910 = vmatpush1.msra.mxu0 0.0
        %1911 = vmatprep.subr.mxu0 0.0
        %1912 = vmatpush1.msra.mxu0 0.0
        %1913 = vmatprep.subr.mxu0 0.0
        %1914 = vmatpush1.msra.mxu0 0.0
        %1915 = vmatprep.subr.mxu0 0.0
        %1916 = vmatpush1.msra.mxu0 0.0
        %1917 = vmatprep.subr.mxu0 0.0
        %1918 = vmatpush1.msra.mxu0 0.0
        %1919 = vmatprep.subr.mxu0 0.0
        %1920 = vmatpush1.msra.mxu0 0.0
        %1921 = vmatprep.subr.mxu0 0.0
        %1922 = vmatpush1.msra.mxu0 0.0
        %1923 = vmatprep.subr.mxu0 0.0
        %1924 = vmatpush1.msra.mxu0 0.0
        %1925 = vmatprep.subr.mxu0 0.0
        %1926 = vmatpush1.msra.mxu0 0.0
        %1927 = vmatprep.subr.mxu0 0.0
        %1928 = vmatpush1.msra.mxu0 0.0
        %1929 = vmatprep.subr.mxu0 0.0
        %1930 = vmatpush1.msra.mxu0 0.0
        %1931 = vmatprep.subr.mxu0 0.0
        %1932 = vmatpush1.msra.mxu0 0.0
        %1933 = vmatprep.subr.mxu0 0.0
        %1934 = vmatpush1.msra.mxu0 0.0
        %1935 = vmatprep.subr.mxu0 0.0
        %1936 = vmatpush1.msra.mxu0 0.0
        %1937 = vmatprep.subr.mxu0 0.0
        %1938 = vmatpush1.msra.mxu0 0.0
        %1939 = vmatprep.subr.mxu0 0.0
        %1940 = vmatpush1.msra.mxu0 0.0
        %1941 = vmatprep.subr.mxu0 0.0
        %1942 = vmatpush1.msra.mxu0 0.0
        %1943 = vmatprep.mubr.f32.mxu0 0.0
        %1944 = vmatmul.mubr.f32.gmra.mrb[0].mxu0 %v1874
        %v1945 = vpop.f32.mrb[0].mxu0
        %v1946 = vadd.f32 0.0, %v1945
        %v1947 = vpop.f32.mrb[0].mxu0
        %1948 = vmatprep.mubr.f32.mxu0 0.0
        %1949 = vmatmul.mubr.f32.gmra.mrb[0].mxu0 %v1877
        %v1950 = vpop.f32.mrb[0].mxu0
        %v1951 = vadd.f32 0.0, %v1950
        %v1952 = vpop.f32.mrb[0].mxu0
        %1953 = vdwg.mxu0
        %1954 = vrot.lane.b32.xlu0 %v468, 56
        %v1955 = vpop.permute.xlu0 %1954
        %1956 = vrot.lane.b32.xlu0 %v473, 56
        %v1957 = vpop.permute.xlu0 %1956
        %v1961 = vsel %vm883, %v1773, 0
        %v1964 = vsel %vm883, %v1775, 0
        %1966 = vmatprep.subr.mxu0 0.0
        %1967 = vmatpush1.msra.mxu0 %v1955
        %1968 = vmatprep.subr.mxu0 0.0
        %1969 = vmatpush1.msra.mxu0 %v1957
        %1970 = vmatprep.subr.mxu0 0.0
        %1971 = vmatpush1.msra.mxu0 0.0
        %1972 = vmatprep.subr.mxu0 0.0
        %1973 = vmatpush1.msra.mxu0 0.0
        %1974 = vmatprep.subr.mxu0 0.0
        %1975 = vmatpush1.msra.mxu0 0.0
        %1976 = vmatprep.subr.mxu0 0.0
        %1977 = vmatpush1.msra.mxu0 0.0
        %1978 = vmatprep.subr.mxu0 0.0
        %1979 = vmatpush1.msra.mxu0 0.0
        %1980 = vmatprep.subr.mxu0 0.0
        %1981 = vmatpush1.msra.mxu0 0.0
        %1982 = vmatprep.subr.mxu0 0.0
        %1983 = vmatpush1.msra.mxu0 0.0
        %1984 = vmatprep.subr.mxu0 0.0
        %1985 = vmatpush1.msra.mxu0 0.0
        %1986 = vmatprep.subr.mxu0 0.0
        %1987 = vmatpush1.msra.mxu0 0.0
        %1988 = vmatprep.subr.mxu0 0.0
        %1989 = vmatpush1.msra.mxu0 0.0
        %1990 = vmatprep.subr.mxu0 0.0
        %1991 = vmatpush1.msra.mxu0 0.0
        %1992 = vmatprep.subr.mxu0 0.0
        %1993 = vmatpush1.msra.mxu0 0.0
        %1994 = vmatprep.subr.mxu0 0.0
        %1995 = vmatpush1.msra.mxu0 0.0
        %1996 = vmatprep.subr.mxu0 0.0
        %1997 = vmatpush1.msra.mxu0 0.0
        %1998 = vmatprep.subr.mxu0 0.0
        %1999 = vmatpush1.msra.mxu0 0.0
        %2000 = vmatprep.subr.mxu0 0.0
        %2001 = vmatpush1.msra.mxu0 0.0
        %2002 = vmatprep.subr.mxu0 0.0
        %2003 = vmatpush1.msra.mxu0 0.0
        %2004 = vmatprep.subr.mxu0 0.0
        %2005 = vmatpush1.msra.mxu0 0.0
        %2006 = vmatprep.subr.mxu0 0.0
        %2007 = vmatpush1.msra.mxu0 0.0
        %2008 = vmatprep.subr.mxu0 0.0
        %2009 = vmatpush1.msra.mxu0 0.0
        %2010 = vmatprep.subr.mxu0 0.0
        %2011 = vmatpush1.msra.mxu0 0.0
        %2012 = vmatprep.subr.mxu0 0.0
        %2013 = vmatpush1.msra.mxu0 0.0
        %2014 = vmatprep.subr.mxu0 0.0
        %2015 = vmatpush1.msra.mxu0 0.0
        %2016 = vmatprep.subr.mxu0 0.0
        %2017 = vmatpush1.msra.mxu0 0.0
        %2018 = vmatprep.subr.mxu0 0.0
        %2019 = vmatpush1.msra.mxu0 0.0
        %2020 = vmatprep.subr.mxu0 0.0
        %2021 = vmatpush1.msra.mxu0 0.0
        %2022 = vmatprep.subr.mxu0 0.0
        %2023 = vmatpush1.msra.mxu0 0.0
        %2024 = vmatprep.subr.mxu0 0.0
        %2025 = vmatpush1.msra.mxu0 0.0
        %2026 = vmatprep.subr.mxu0 0.0
        %2027 = vmatpush1.msra.mxu0 0.0
        %2028 = vmatprep.subr.mxu0 0.0
        %2029 = vmatpush1.msra.mxu0 0.0
        %2030 = vmatprep.mubr.f32.mxu0 0.0
        %2031 = vmatmul.mubr.f32.gmra.mrb[0].mxu0 %v1961
        %v2032 = vpop.f32.mrb[0].mxu0
        %v2033 = vadd.f32 0.0, %v2032
        %v2034 = vpop.f32.mrb[0].mxu0
        %2035 = vmatprep.mubr.f32.mxu0 0.0
        %2036 = vmatmul.mubr.f32.gmra.mrb[0].mxu0 %v1964
        %v2037 = vpop.f32.mrb[0].mxu0
        %v2038 = vadd.f32 0.0, %v2037
        %v2039 = vpop.f32.mrb[0].mxu0
        %2040 = vdwg.mxu0
        %2041 = vrot.lane.b32.xlu0 %v478, 56
        %v2042 = vpop.permute.xlu0 %2041
        %2043 = vrot.lane.b32.xlu0 %v483, 56
        %v2044 = vpop.permute.xlu0 %2043
        %v2048 = vsel %vm883, %v1777, 0
        %v2051 = vsel %vm883, %v1779, 0
        %2053 = vmatprep.subr.mxu0 0.0
        %2054 = vmatpush1.msra.mxu0 %v2042
        %2055 = vmatprep.subr.mxu0 0.0
        %2056 = vmatpush1.msra.mxu0 %v2044
        %2057 = vmatprep.subr.mxu0 0.0
        %2058 = vmatpush1.msra.mxu0 0.0
        %2059 = vmatprep.subr.mxu0 0.0
        %2060 = vmatpush1.msra.mxu0 0.0
        %2061 = vmatprep.subr.mxu0 0.0
        %2062 = vmatpush1.msra.mxu0 0.0
        %2063 = vmatprep.subr.mxu0 0.0
        %2064 = vmatpush1.msra.mxu0 0.0
        %2065 = vmatprep.subr.mxu0 0.0
        %2066 = vmatpush1.msra.mxu0 0.0
        %2067 = vmatprep.subr.mxu0 0.0
        %2068 = vmatpush1.msra.mxu0 0.0
        %2069 = vmatprep.subr.mxu0 0.0
        %2070 = vmatpush1.msra.mxu0 0.0
        %2071 = vmatprep.subr.mxu0 0.0
        %2072 = vmatpush1.msra.mxu0 0.0
        %2073 = vmatprep.subr.mxu0 0.0
        %2074 = vmatpush1.msra.mxu0 0.0
        %2075 = vmatprep.subr.mxu0 0.0
        %2076 = vmatpush1.msra.mxu0 0.0
        %2077 = vmatprep.subr.mxu0 0.0
        %2078 = vmatpush1.msra.mxu0 0.0
        %2079 = vmatprep.subr.mxu0 0.0
        %2080 = vmatpush1.msra.mxu0 0.0
        %2081 = vmatprep.subr.mxu0 0.0
        %2082 = vmatpush1.msra.mxu0 0.0
        %2083 = vmatprep.subr.mxu0 0.0
        %2084 = vmatpush1.msra.mxu0 0.0
        %2085 = vmatprep.subr.mxu0 0.0
        %2086 = vmatpush1.msra.mxu0 0.0
        %2087 = vmatprep.subr.mxu0 0.0
        %2088 = vmatpush1.msra.mxu0 0.0
        %2089 = vmatprep.subr.mxu0 0.0
        %2090 = vmatpush1.msra.mxu0 0.0
        %2091 = vmatprep.subr.mxu0 0.0
        %2092 = vmatpush1.msra.mxu0 0.0
        %2093 = vmatprep.subr.mxu0 0.0
        %2094 = vmatpush1.msra.mxu0 0.0
        %2095 = vmatprep.subr.mxu0 0.0
        %2096 = vmatpush1.msra.mxu0 0.0
        %2097 = vmatprep.subr.mxu0 0.0
        %2098 = vmatpush1.msra.mxu0 0.0
        %2099 = vmatprep.subr.mxu0 0.0
        %2100 = vmatpush1.msra.mxu0 0.0
        %2101 = vmatprep.subr.mxu0 0.0
        %2102 = vmatpush1.msra.mxu0 0.0
        %2103 = vmatprep.subr.mxu0 0.0
        %2104 = vmatpush1.msra.mxu0 0.0
        %2105 = vmatprep.subr.mxu0 0.0
        %2106 = vmatpush1.msra.mxu0 0.0
        %2107 = vmatprep.subr.mxu0 0.0
        %2108 = vmatpush1.msra.mxu0 0.0
        %2109 = vmatprep.subr.mxu0 0.0
        %2110 = vmatpush1.msra.mxu0 0.0
        %2111 = vmatprep.subr.mxu0 0.0
        %2112 = vmatpush1.msra.mxu0 0.0
        %2113 = vmatprep.subr.mxu0 0.0
        %2114 = vmatpush1.msra.mxu0 0.0
        %2115 = vmatprep.subr.mxu0 0.0
        %2116 = vmatpush1.msra.mxu0 0.0
        %2117 = vmatprep.mubr.f32.mxu0 0.0
        %2118 = vmatmul.mubr.f32.gmra.mrb[0].mxu0 %v2048
        %v2119 = vpop.f32.mrb[0].mxu0
        %v2120 = vadd.f32 0.0, %v2119
        %v2121 = vpop.f32.mrb[0].mxu0
        %2122 = vmatprep.mubr.f32.mxu0 0.0
        %2123 = vmatmul.mubr.f32.gmra.mrb[0].mxu0 %v2051
        %v2124 = vpop.f32.mrb[0].mxu0
        %v2125 = vadd.f32 0.0, %v2124
        %v2126 = vpop.f32.mrb[0].mxu0
        %2127 = vdwg.mxu0
        %2128 = vrot.lane.b32.xlu0 %v502, 112
        %v2129 = vpop.permute.xlu0 %2128
        %2130 = vrot.lane.b32.xlu0 %v503, 112
        %v2131 = vpop.permute.xlu0 %2130
        %2132 = vrot.lane.b32.xlu0 %v448, 80
        %v2133 = vpop.permute.xlu0 %2132
        %2134 = vrot.lane.b32.xlu0 %v453, 80
        %v2135 = vpop.permute.xlu0 %2134
        %v2136 = vsel %vm516, %v2129, 0
        %v2138 = vsel %vm516, %v2131, 0
        %v2140 = vsel %vm516, %v2133, 0
        %v2142 = vsel %vm516, %v2135, 0
        %2144 = vmatprep.subr.mxu0 0.0
        %2145 = vmatpush1.xpose.msra.mxu0 %v2140
        %2146 = vmatprep.subr.mxu0 0.0
        %2147 = vmatpush1.xpose.msra.mxu0 %v2142
        %2148 = vmatprep.subr.mxu0 0.0
        %2149 = vmatpush1.xpose.msra.mxu0 0.0
        %2150 = vmatprep.subr.mxu0 0.0
        %2151 = vmatpush1.xpose.msra.mxu0 0.0
        %2152 = vmatprep.subr.mxu0 0.0
        %2153 = vmatpush1.xpose.msra.mxu0 0.0
        %2154 = vmatprep.subr.mxu0 0.0
        %2155 = vmatpush1.xpose.msra.mxu0 0.0
        %2156 = vmatprep.subr.mxu0 0.0
        %2157 = vmatpush1.xpose.msra.mxu0 0.0
        %2158 = vmatprep.subr.mxu0 0.0
        %2159 = vmatpush1.xpose.msra.mxu0 0.0
        %2160 = vmatprep.subr.mxu0 0.0
        %2161 = vmatpush1.xpose.msra.mxu0 0.0
        %2162 = vmatprep.subr.mxu0 0.0
        %2163 = vmatpush1.xpose.msra.mxu0 0.0
        %2164 = vmatprep.subr.mxu0 0.0
        %2165 = vmatpush1.xpose.msra.mxu0 0.0
        %2166 = vmatprep.subr.mxu0 0.0
        %2167 = vmatpush1.xpose.msra.mxu0 0.0
        %2168 = vmatprep.subr.mxu0 0.0
        %2169 = vmatpush1.xpose.msra.mxu0 0.0
        %2170 = vmatprep.subr.mxu0 0.0
        %2171 = vmatpush1.xpose.msra.mxu0 0.0
        %2172 = vmatprep.subr.mxu0 0.0
        %2173 = vmatpush1.xpose.msra.mxu0 0.0
        %2174 = vmatprep.subr.mxu0 0.0
        %2175 = vmatpush1.xpose.msra.mxu0 0.0
        %2176 = vmatprep.subr.mxu0 0.0
        %2177 = vmatpush1.xpose.msra.mxu0 0.0
        %2178 = vmatprep.subr.mxu0 0.0
        %2179 = vmatpush1.xpose.msra.mxu0 0.0
        %2180 = vmatprep.subr.mxu0 0.0
        %2181 = vmatpush1.xpose.msra.mxu0 0.0
        %2182 = vmatprep.subr.mxu0 0.0
        %2183 = vmatpush1.xpose.msra.mxu0 0.0
        %2184 = vmatprep.subr.mxu0 0.0
        %2185 = vmatpush1.xpose.msra.mxu0 0.0
        %2186 = vmatprep.subr.mxu0 0.0
        %2187 = vmatpush1.xpose.msra.mxu0 0.0
        %2188 = vmatprep.subr.mxu0 0.0
        %2189 = vmatpush1.xpose.msra.mxu0 0.0
        %2190 = vmatprep.subr.mxu0 0.0
        %2191 = vmatpush1.xpose.msra.mxu0 0.0
        %2192 = vmatprep.subr.mxu0 0.0
        %2193 = vmatpush1.xpose.msra.mxu0 0.0
        %2194 = vmatprep.subr.mxu0 0.0
        %2195 = vmatpush1.xpose.msra.mxu0 0.0
        %2196 = vmatprep.subr.mxu0 0.0
        %2197 = vmatpush1.xpose.msra.mxu0 0.0
        %2198 = vmatprep.subr.mxu0 0.0
        %2199 = vmatpush1.xpose.msra.mxu0 0.0
        %2200 = vmatprep.subr.mxu0 0.0
        %2201 = vmatpush1.xpose.msra.mxu0 0.0
        %2202 = vmatprep.subr.mxu0 0.0
        %2203 = vmatpush1.xpose.msra.mxu0 0.0
        %2204 = vmatprep.subr.mxu0 0.0
        %2205 = vmatpush1.xpose.msra.mxu0 0.0
        %2206 = vmatprep.subr.mxu0 0.0
        %2207 = vmatpush1.xpose.msra.mxu0 0.0
        %2208 = vmatprep.mubr.f32.mxu0 0.0
        %2209 = vmatmul.mubr.f32.gmra.mrb[0].mxu0 %v2136
        %v2210 = vpop.f32.mrb[0].mxu0
        %v2211 = vadd.f32 %v490, %v2210
        %v2212 = vpop.f32.mrb[0].mxu0
        %2213 = vmatprep.mubr.f32.mxu0 0.0
        %2214 = vmatmul.mubr.f32.gmra.mrb[0].mxu0 %v2138
        %v2215 = vpop.f32.mrb[0].mxu0
        %v2216 = vadd.f32 %v491, %v2215
        %v2217 = vpop.f32.mrb[0].mxu0
        %2218 = vdwg.mxu0
        %2219 = vrot.lane.b32.xlu0 %v504, 112
        %v2220 = vpop.permute.xlu0 %2219
        %2221 = vrot.lane.b32.xlu0 %v505, 112
        %v2222 = vpop.permute.xlu0 %2221
        %2223 = vrot.lane.b32.xlu0 %v458, 80
        %v2224 = vpop.permute.xlu0 %2223
        %2225 = vrot.lane.b32.xlu0 %v463, 80
        %v2226 = vpop.permute.xlu0 %2225
        %v2227 = vsel %vm516, %v2220, 0
        %v2229 = vsel %vm516, %v2222, 0
        %v2231 = vsel %vm516, %v2224, 0
        %v2233 = vsel %vm516, %v2226, 0
        %2235 = vmatprep.subr.mxu0 0.0
        %2236 = vmatpush1.xpose.msra.mxu0 %v2231
        %2237 = vmatprep.subr.mxu0 0.0
        %2238 = vmatpush1.xpose.msra.mxu0 %v2233
        %2239 = vmatprep.subr.mxu0 0.0
        %2240 = vmatpush1.xpose.msra.mxu0 0.0
        %2241 = vmatprep.subr.mxu0 0.0
        %2242 = vmatpush1.xpose.msra.mxu0 0.0
        %2243 = vmatprep.subr.mxu0 0.0
        %2244 = vmatpush1.xpose.msra.mxu0 0.0
        %2245 = vmatprep.subr.mxu0 0.0
        %2246 = vmatpush1.xpose.msra.mxu0 0.0
        %2247 = vmatprep.subr.mxu0 0.0
        %2248 = vmatpush1.xpose.msra.mxu0 0.0
        %2249 = vmatprep.subr.mxu0 0.0
        %2250 = vmatpush1.xpose.msra.mxu0 0.0
        %2251 = vmatprep.subr.mxu0 0.0
        %2252 = vmatpush1.xpose.msra.mxu0 0.0
        %2253 = vmatprep.subr.mxu0 0.0
        %2254 = vmatpush1.xpose.msra.mxu0 0.0
        %2255 = vmatprep.subr.mxu0 0.0
        %2256 = vmatpush1.xpose.msra.mxu0 0.0
        %2257 = vmatprep.subr.mxu0 0.0
        %2258 = vmatpush1.xpose.msra.mxu0 0.0
        %2259 = vmatprep.subr.mxu0 0.0
        %2260 = vmatpush1.xpose.msra.mxu0 0.0
        %2261 = vmatprep.subr.mxu0 0.0
        %2262 = vmatpush1.xpose.msra.mxu0 0.0
        %2263 = vmatprep.subr.mxu0 0.0
        %2264 = vmatpush1.xpose.msra.mxu0 0.0
        %2265 = vmatprep.subr.mxu0 0.0
        %2266 = vmatpush1.xpose.msra.mxu0 0.0
        %2267 = vmatprep.subr.mxu0 0.0
        %2268 = vmatpush1.xpose.msra.mxu0 0.0
        %2269 = vmatprep.subr.mxu0 0.0
        %2270 = vmatpush1.xpose.msra.mxu0 0.0
        %2271 = vmatprep.subr.mxu0 0.0
        %2272 = vmatpush1.xpose.msra.mxu0 0.0
        %2273 = vmatprep.subr.mxu0 0.0
        %2274 = vmatpush1.xpose.msra.mxu0 0.0
        %2275 = vmatprep.subr.mxu0 0.0
        %2276 = vmatpush1.xpose.msra.mxu0 0.0
        %2277 = vmatprep.subr.mxu0 0.0
        %2278 = vmatpush1.xpose.msra.mxu0 0.0
        %2279 = vmatprep.subr.mxu0 0.0
        %2280 = vmatpush1.xpose.msra.mxu0 0.0
        %2281 = vmatprep.subr.mxu0 0.0
        %2282 = vmatpush1.xpose.msra.mxu0 0.0
        %2283 = vmatprep.subr.mxu0 0.0
        %2284 = vmatpush1.xpose.msra.mxu0 0.0
        %2285 = vmatprep.subr.mxu0 0.0
        %2286 = vmatpush1.xpose.msra.mxu0 0.0
        %2287 = vmatprep.subr.mxu0 0.0
        %2288 = vmatpush1.xpose.msra.mxu0 0.0
        %2289 = vmatprep.subr.mxu0 0.0
        %2290 = vmatpush1.xpose.msra.mxu0 0.0
        %2291 = vmatprep.subr.mxu0 0.0
        %2292 = vmatpush1.xpose.msra.mxu0 0.0
        %2293 = vmatprep.subr.mxu0 0.0
        %2294 = vmatpush1.xpose.msra.mxu0 0.0
        %2295 = vmatprep.subr.mxu0 0.0
        %2296 = vmatpush1.xpose.msra.mxu0 0.0
        %2297 = vmatprep.subr.mxu0 0.0
        %2298 = vmatpush1.xpose.msra.mxu0 0.0
        %2299 = vmatprep.mubr.f32.mxu0 0.0
        %2300 = vmatmul.mubr.f32.gmra.mrb[0].mxu0 %v2227
        %v2301 = vpop.f32.mrb[0].mxu0
        %v2302 = vadd.f32 %v490, %v2301
        %v2303 = vpop.f32.mrb[0].mxu0
        %2304 = vmatprep.mubr.f32.mxu0 0.0
        %2305 = vmatmul.mubr.f32.gmra.mrb[0].mxu0 %v2229
        %v2306 = vpop.f32.mrb[0].mxu0
        %v2307 = vadd.f32 %v491, %v2306
        %v2308 = vpop.f32.mrb[0].mxu0
        %2309 = vdwg.mxu0
        %2310 = vrot.lane.b32.xlu0 %v506, 112
        %v2311 = vpop.permute.xlu0 %2310
        %2312 = vrot.lane.b32.xlu0 %v507, 112
        %v2313 = vpop.permute.xlu0 %2312
        %2314 = vrot.lane.b32.xlu0 %v468, 80
        %v2315 = vpop.permute.xlu0 %2314
        %2316 = vrot.lane.b32.xlu0 %v473, 80
        %v2317 = vpop.permute.xlu0 %2316
        %v2318 = vsel %vm516, %v2311, 0
        %v2320 = vsel %vm516, %v2313, 0
        %v2322 = vsel %vm516, %v2315, 0
        %v2324 = vsel %vm516, %v2317, 0
        %2326 = vmatprep.subr.mxu0 0.0
        %2327 = vmatpush1.xpose.msra.mxu0 %v2322
        %2328 = vmatprep.subr.mxu0 0.0
        %2329 = vmatpush1.xpose.msra.mxu0 %v2324
        %2330 = vmatprep.subr.mxu0 0.0
        %2331 = vmatpush1.xpose.msra.mxu0 0.0
        %2332 = vmatprep.subr.mxu0 0.0
        %2333 = vmatpush1.xpose.msra.mxu0 0.0
        %2334 = vmatprep.subr.mxu0 0.0
        %2335 = vmatpush1.xpose.msra.mxu0 0.0
        %2336 = vmatprep.subr.mxu0 0.0
        %2337 = vmatpush1.xpose.msra.mxu0 0.0
        %2338 = vmatprep.subr.mxu0 0.0
        %2339 = vmatpush1.xpose.msra.mxu0 0.0
        %2340 = vmatprep.subr.mxu0 0.0
        %2341 = vmatpush1.xpose.msra.mxu0 0.0
        %2342 = vmatprep.subr.mxu0 0.0
        %2343 = vmatpush1.xpose.msra.mxu0 0.0
        %2344 = vmatprep.subr.mxu0 0.0
        %2345 = vmatpush1.xpose.msra.mxu0 0.0
        %2346 = vmatprep.subr.mxu0 0.0
        %2347 = vmatpush1.xpose.msra.mxu0 0.0
        %2348 = vmatprep.subr.mxu0 0.0
        %2349 = vmatpush1.xpose.msra.mxu0 0.0
        %2350 = vmatprep.subr.mxu0 0.0
        %2351 = vmatpush1.xpose.msra.mxu0 0.0
        %2352 = vmatprep.subr.mxu0 0.0
        %2353 = vmatpush1.xpose.msra.mxu0 0.0
        %2354 = vmatprep.subr.mxu0 0.0
        %2355 = vmatpush1.xpose.msra.mxu0 0.0
        %2356 = vmatprep.subr.mxu0 0.0
        %2357 = vmatpush1.xpose.msra.mxu0 0.0
        %2358 = vmatprep.subr.mxu0 0.0
        %2359 = vmatpush1.xpose.msra.mxu0 0.0
        %2360 = vmatprep.subr.mxu0 0.0
        %2361 = vmatpush1.xpose.msra.mxu0 0.0
        %2362 = vmatprep.subr.mxu0 0.0
        %2363 = vmatpush1.xpose.msra.mxu0 0.0
        %2364 = vmatprep.subr.mxu0 0.0
        %2365 = vmatpush1.xpose.msra.mxu0 0.0
        %2366 = vmatprep.subr.mxu0 0.0
        %2367 = vmatpush1.xpose.msra.mxu0 0.0
        %2368 = vmatprep.subr.mxu0 0.0
        %2369 = vmatpush1.xpose.msra.mxu0 0.0
        %2370 = vmatprep.subr.mxu0 0.0
        %2371 = vmatpush1.xpose.msra.mxu0 0.0
        %2372 = vmatprep.subr.mxu0 0.0
        %2373 = vmatpush1.xpose.msra.mxu0 0.0
        %2374 = vmatprep.subr.mxu0 0.0
        %2375 = vmatpush1.xpose.msra.mxu0 0.0
        %2376 = vmatprep.subr.mxu0 0.0
        %2377 = vmatpush1.xpose.msra.mxu0 0.0
        %2378 = vmatprep.subr.mxu0 0.0
        %2379 = vmatpush1.xpose.msra.mxu0 0.0
        %2380 = vmatprep.subr.mxu0 0.0
        %2381 = vmatpush1.xpose.msra.mxu0 0.0
        %2382 = vmatprep.subr.mxu0 0.0
        %2383 = vmatpush1.xpose.msra.mxu0 0.0
        %2384 = vmatprep.subr.mxu0 0.0
        %2385 = vmatpush1.xpose.msra.mxu0 0.0
        %2386 = vmatprep.subr.mxu0 0.0
        %2387 = vmatpush1.xpose.msra.mxu0 0.0
        %2388 = vmatprep.subr.mxu0 0.0
        %2389 = vmatpush1.xpose.msra.mxu0 0.0
        %2390 = vmatprep.mubr.f32.mxu0 0.0
        %2391 = vmatmul.mubr.f32.gmra.mrb[0].mxu0 %v2318
        %v2392 = vpop.f32.mrb[0].mxu0
        %v2393 = vadd.f32 %v490, %v2392
        %v2394 = vpop.f32.mrb[0].mxu0
        %2395 = vmatprep.mubr.f32.mxu0 0.0
        %2396 = vmatmul.mubr.f32.gmra.mrb[0].mxu0 %v2320
        %v2397 = vpop.f32.mrb[0].mxu0
        %v2398 = vadd.f32 %v491, %v2397
        %v2399 = vpop.f32.mrb[0].mxu0
        %2400 = vdwg.mxu0
        %2401 = vrot.lane.b32.xlu0 %v508, 112
        %v2402 = vpop.permute.xlu0 %2401
        %2403 = vrot.lane.b32.xlu0 %v509, 112
        %v2404 = vpop.permute.xlu0 %2403
        %2405 = vrot.lane.b32.xlu0 %v478, 80
        %v2406 = vpop.permute.xlu0 %2405
        %2407 = vrot.lane.b32.xlu0 %v483, 80
        %v2408 = vpop.permute.xlu0 %2407
        %v2409 = vsel %vm516, %v2402, 0
        %v2411 = vsel %vm516, %v2404, 0
        %v2413 = vsel %vm516, %v2406, 0
        %v2415 = vsel %vm516, %v2408, 0
        %2417 = vmatprep.subr.mxu0 0.0
        %2418 = vmatpush1.xpose.msra.mxu0 %v2413
        %2419 = vmatprep.subr.mxu0 0.0
        %2420 = vmatpush1.xpose.msra.mxu0 %v2415
        %2421 = vmatprep.subr.mxu0 0.0
        %2422 = vmatpush1.xpose.msra.mxu0 0.0
        %2423 = vmatprep.subr.mxu0 0.0
        %2424 = vmatpush1.xpose.msra.mxu0 0.0
        %2425 = vmatprep.subr.mxu0 0.0
        %2426 = vmatpush1.xpose.msra.mxu0 0.0
        %2427 = vmatprep.subr.mxu0 0.0
        %2428 = vmatpush1.xpose.msra.mxu0 0.0
        %2429 = vmatprep.subr.mxu0 0.0
        %2430 = vmatpush1.xpose.msra.mxu0 0.0
        %2431 = vmatprep.subr.mxu0 0.0
        %2432 = vmatpush1.xpose.msra.mxu0 0.0
        %2433 = vmatprep.subr.mxu0 0.0
        %2434 = vmatpush1.xpose.msra.mxu0 0.0
        %2435 = vmatprep.subr.mxu0 0.0
        %2436 = vmatpush1.xpose.msra.mxu0 0.0
        %2437 = vmatprep.subr.mxu0 0.0
        %2438 = vmatpush1.xpose.msra.mxu0 0.0
        %2439 = vmatprep.subr.mxu0 0.0
        %2440 = vmatpush1.xpose.msra.mxu0 0.0
        %2441 = vmatprep.subr.mxu0 0.0
        %2442 = vmatpush1.xpose.msra.mxu0 0.0
        %2443 = vmatprep.subr.mxu0 0.0
        %2444 = vmatpush1.xpose.msra.mxu0 0.0
        %2445 = vmatprep.subr.mxu0 0.0
        %2446 = vmatpush1.xpose.msra.mxu0 0.0
        %2447 = vmatprep.subr.mxu0 0.0
        %2448 = vmatpush1.xpose.msra.mxu0 0.0
        %2449 = vmatprep.subr.mxu0 0.0
        %2450 = vmatpush1.xpose.msra.mxu0 0.0
        %2451 = vmatprep.subr.mxu0 0.0
        %2452 = vmatpush1.xpose.msra.mxu0 0.0
        %2453 = vmatprep.subr.mxu0 0.0
        %2454 = vmatpush1.xpose.msra.mxu0 0.0
        %2455 = vmatprep.subr.mxu0 0.0
        %2456 = vmatpush1.xpose.msra.mxu0 0.0
        %2457 = vmatprep.subr.mxu0 0.0
        %2458 = vmatpush1.xpose.msra.mxu0 0.0
        %2459 = vmatprep.subr.mxu0 0.0
        %2460 = vmatpush1.xpose.msra.mxu0 0.0
        %2461 = vmatprep.subr.mxu0 0.0
        %2462 = vmatpush1.xpose.msra.mxu0 0.0
        %2463 = vmatprep.subr.mxu0 0.0
        %2464 = vmatpush1.xpose.msra.mxu0 0.0
        %2465 = vmatprep.subr.mxu0 0.0
        %2466 = vmatpush1.xpose.msra.mxu0 0.0
        %2467 = vmatprep.subr.mxu0 0.0
        %2468 = vmatpush1.xpose.msra.mxu0 0.0
        %2469 = vmatprep.subr.mxu0 0.0
        %2470 = vmatpush1.xpose.msra.mxu0 0.0
        %2471 = vmatprep.subr.mxu0 0.0
        %2472 = vmatpush1.xpose.msra.mxu0 0.0
        %2473 = vmatprep.subr.mxu0 0.0
        %2474 = vmatpush1.xpose.msra.mxu0 0.0
        %2475 = vmatprep.subr.mxu0 0.0
        %2476 = vmatpush1.xpose.msra.mxu0 0.0
        %2477 = vmatprep.subr.mxu0 0.0
        %2478 = vmatpush1.xpose.msra.mxu0 0.0
        %2479 = vmatprep.subr.mxu0 0.0
        %2480 = vmatpush1.xpose.msra.mxu0 0.0
        %2481 = vmatprep.mubr.f32.mxu0 0.0
        %2482 = vmatmul.mubr.f32.gmra.mrb[0].mxu0 %v2409
        %v2483 = vpop.f32.mrb[0].mxu0
        %v2484 = vadd.f32 %v490, %v2483
        %v2485 = vpop.f32.mrb[0].mxu0
        %2486 = vmatprep.mubr.f32.mxu0 0.0
        %2487 = vmatmul.mubr.f32.gmra.mrb[0].mxu0 %v2411
        %v2488 = vpop.f32.mrb[0].mxu0
        %v2489 = vadd.f32 %v491, %v2488
        %v2490 = vpop.f32.mrb[0].mxu0
        %2491 = vdwg.mxu0
        %v2492 = vadd.f32 %v2211, %v494
        %v2493 = vadd.f32 %v2216, %v495
        %v2494 = vadd.f32 %v2302, %v496
        %v2495 = vadd.f32 %v2307, %v497
        %v2496 = vadd.f32 %v2393, %v498
        %v2497 = vadd.f32 %v2398, %v499
        %v2498 = vadd.f32 %v2484, %v500
        %v2499 = vadd.f32 %v2489, %v501
        %v2500 = vsel %vm883, %v2492, -inf
        %2501 = vmax.xlane.f32.xlu0 %v2500
        %v2502 = vpop.xlane.xlu0 %2501
        %v2503 = vsel %vm883, %v2493, -inf
        %2504 = vmax.xlane.f32.xlu0 %v2503
        %v2505 = vpop.xlane.xlu0 %2504
        %v2506 = vsel %vm883, %v2494, -inf
        %2507 = vmax.xlane.f32.xlu0 %v2506
        %v2508 = vpop.xlane.xlu0 %2507
        %v2509 = vsel %vm883, %v2495, -inf
        %2510 = vmax.xlane.f32.xlu0 %v2509
        %v2511 = vpop.xlane.xlu0 %2510
        %v2512 = vsel %vm883, %v2496, -inf
        %2513 = vmax.xlane.f32.xlu0 %v2512
        %v2514 = vpop.xlane.xlu0 %2513
        %v2515 = vsel %vm883, %v2497, -inf
        %2516 = vmax.xlane.f32.xlu0 %v2515
        %v2517 = vpop.xlane.xlu0 %2516
        %v2518 = vsel %vm883, %v2498, -inf
        %2519 = vmax.xlane.f32.xlu0 %v2518
        %v2520 = vpop.xlane.xlu0 %2519
        %v2521 = vsel %vm883, %v2499, -inf
        %2522 = vmax.xlane.f32.xlu0 %v2521
        %v2523 = vpop.xlane.xlu0 %2522
        %v2524 = vsub.f32 %v2492, %v2502
        %v2525 = vsub.f32 %v2493, %v2505
        %v2526 = vsub.f32 %v2494, %v2508
        %v2527 = vsub.f32 %v2495, %v2511
        %v2528 = vsub.f32 %v2496, %v2514
        %v2529 = vsub.f32 %v2497, %v2517
        %v2530 = vsub.f32 %v2498, %v2520
        %v2531 = vsub.f32 %v2499, %v2523
        %v2532 = vmul.f32 %v2524, 1.442695
        %v2533 = vpow.pop %v2532
        %v2534 = vmul.f32 %v2525, 1.442695
        %v2535 = vpow.pop %v2534
        %v2536 = vmul.f32 %v2526, 1.442695
        %v2537 = vpow.pop %v2536
        %v2538 = vmul.f32 %v2527, 1.442695
        %v2539 = vpow.pop %v2538
        %v2540 = vmul.f32 %v2528, 1.442695
        %v2541 = vpow.pop %v2540
        %v2542 = vmul.f32 %v2529, 1.442695
        %v2543 = vpow.pop %v2542
        %v2544 = vmul.f32 %v2530, 1.442695
        %v2545 = vpow.pop %v2544
        %v2546 = vmul.f32 %v2531, 1.442695
        %v2547 = vpow.pop %v2546
        %v2548 = vsel %vm883, %v2533, 0.0
        %2549 = vadd.xlane.f32.xlu0 %v2548
        %v2550 = vpop.xlane.xlu0 %2549
        %v2551 = vsel %vm883, %v2535, 0.0
        %2552 = vadd.xlane.f32.xlu0 %v2551
        %v2553 = vpop.xlane.xlu0 %2552
        %v2554 = vsel %vm883, %v2537, 0.0
        %2555 = vadd.xlane.f32.xlu0 %v2554
        %v2556 = vpop.xlane.xlu0 %2555
        %v2557 = vsel %vm883, %v2539, 0.0
        %2558 = vadd.xlane.f32.xlu0 %v2557
        %v2559 = vpop.xlane.xlu0 %2558
        %v2560 = vsel %vm883, %v2541, 0.0
        %2561 = vadd.xlane.f32.xlu0 %v2560
        %v2562 = vpop.xlane.xlu0 %2561
        %v2563 = vsel %vm883, %v2543, 0.0
        %2564 = vadd.xlane.f32.xlu0 %v2563
        %v2565 = vpop.xlane.xlu0 %2564
        %v2566 = vsel %vm883, %v2545, 0.0
        %2567 = vadd.xlane.f32.xlu0 %v2566
        %v2568 = vpop.xlane.xlu0 %2567
        %v2569 = vsel %vm883, %v2547, 0.0
        %2570 = vadd.xlane.f32.xlu0 %v2569
        %v2571 = vpop.xlane.xlu0 %2570
        %v2572 = vrcp.pop %v2550
        %v2573 = vmul.f32 %v2533, %v2572
        %v2574 = vrcp.pop %v2553
        %v2575 = vmul.f32 %v2535, %v2574
        %v2576 = vrcp.pop %v2556
        %v2577 = vmul.f32 %v2537, %v2576
        %v2578 = vrcp.pop %v2559
        %v2579 = vmul.f32 %v2539, %v2578
        %v2580 = vrcp.pop %v2562
        %v2581 = vmul.f32 %v2541, %v2580
        %v2582 = vrcp.pop %v2565
        %v2583 = vmul.f32 %v2543, %v2582
        %v2584 = vrcp.pop %v2568
        %v2585 = vmul.f32 %v2545, %v2584
        %v2586 = vrcp.pop %v2571
        %v2587 = vmul.f32 %v2547, %v2586
        %2588 = vrot.lane.b32.xlu0 %v448, 48
        %v2589 = vpop.permute.xlu0 %2588
        %2590 = vrot.lane.b32.xlu0 %v453, 48
        %v2591 = vpop.permute.xlu0 %2590
        %v2595 = vsel %vm883, %v2573, 0
        %v2598 = vsel %vm883, %v2575, 0
        %2600 = vmatprep.subr.mxu0 0.0
        %2601 = vmatpush1.msra.mxu0 %v2589
        %2602 = vmatprep.subr.mxu0 0.0
        %2603 = vmatpush1.msra.mxu0 %v2591
        %2604 = vmatprep.subr.mxu0 0.0
        %2605 = vmatpush1.msra.mxu0 0.0
        %2606 = vmatprep.subr.mxu0 0.0
        %2607 = vmatpush1.msra.mxu0 0.0
        %2608 = vmatprep.subr.mxu0 0.0
        %2609 = vmatpush1.msra.mxu0 0.0
        %2610 = vmatprep.subr.mxu0 0.0
        %2611 = vmatpush1.msra.mxu0 0.0
        %2612 = vmatprep.subr.mxu0 0.0
        %2613 = vmatpush1.msra.mxu0 0.0
        %2614 = vmatprep.subr.mxu0 0.0
        %2615 = vmatpush1.msra.mxu0 0.0
        %2616 = vmatprep.subr.mxu0 0.0
        %2617 = vmatpush1.msra.mxu0 0.0
        %2618 = vmatprep.subr.mxu0 0.0
        %2619 = vmatpush1.msra.mxu0 0.0
        %2620 = vmatprep.subr.mxu0 0.0
        %2621 = vmatpush1.msra.mxu0 0.0
        %2622 = vmatprep.subr.mxu0 0.0
        %2623 = vmatpush1.msra.mxu0 0.0
        %2624 = vmatprep.subr.mxu0 0.0
        %2625 = vmatpush1.msra.mxu0 0.0
        %2626 = vmatprep.subr.mxu0 0.0
        %2627 = vmatpush1.msra.mxu0 0.0
        %2628 = vmatprep.subr.mxu0 0.0
        %2629 = vmatpush1.msra.mxu0 0.0
        %2630 = vmatprep.subr.mxu0 0.0
        %2631 = vmatpush1.msra.mxu0 0.0
        %2632 = vmatprep.subr.mxu0 0.0
        %2633 = vmatpush1.msra.mxu0 0.0
        %2634 = vmatprep.subr.mxu0 0.0
        %2635 = vmatpush1.msra.mxu0 0.0
        %2636 = vmatprep.subr.mxu0 0.0
        %2637 = vmatpush1.msra.mxu0 0.0
        %2638 = vmatprep.subr.mxu0 0.0
        %2639 = vmatpush1.msra.mxu0 0.0
        %2640 = vmatprep.subr.mxu0 0.0
        %2641 = vmatpush1.msra.mxu0 0.0
        %2642 = vmatprep.subr.mxu0 0.0
        %2643 = vmatpush1.msra.mxu0 0.0
        %2644 = vmatprep.subr.mxu0 0.0
        %2645 = vmatpush1.msra.mxu0 0.0
        %2646 = vmatprep.subr.mxu0 0.0
        %2647 = vmatpush1.msra.mxu0 0.0
        %2648 = vmatprep.subr.mxu0 0.0
        %2649 = vmatpush1.msra.mxu0 0.0
        %2650 = vmatprep.subr.mxu0 0.0
        %2651 = vmatpush1.msra.mxu0 0.0
        %2652 = vmatprep.subr.mxu0 0.0
        %2653 = vmatpush1.msra.mxu0 0.0
        %2654 = vmatprep.subr.mxu0 0.0
        %2655 = vmatpush1.msra.mxu0 0.0
        %2656 = vmatprep.subr.mxu0 0.0
        %2657 = vmatpush1.msra.mxu0 0.0
        %2658 = vmatprep.subr.mxu0 0.0
        %2659 = vmatpush1.msra.mxu0 0.0
        %2660 = vmatprep.subr.mxu0 0.0
        %2661 = vmatpush1.msra.mxu0 0.0
        %2662 = vmatprep.subr.mxu0 0.0
        %2663 = vmatpush1.msra.mxu0 0.0
        %2664 = vmatprep.mubr.f32.mxu0 0.0
        %2665 = vmatmul.mubr.f32.gmra.mrb[0].mxu0 %v2595
        %v2666 = vpop.f32.mrb[0].mxu0
        %v2667 = vadd.f32 0.0, %v2666
        %v2668 = vpop.f32.mrb[0].mxu0
        %2669 = vmatprep.mubr.f32.mxu0 0.0
        %2670 = vmatmul.mubr.f32.gmra.mrb[0].mxu0 %v2598
        %v2671 = vpop.f32.mrb[0].mxu0
        %v2672 = vadd.f32 0.0, %v2671
        %v2673 = vpop.f32.mrb[0].mxu0
        %2674 = vdwg.mxu0
        %2675 = vrot.lane.b32.xlu0 %v458, 48
        %v2676 = vpop.permute.xlu0 %2675
        %2677 = vrot.lane.b32.xlu0 %v463, 48
        %v2678 = vpop.permute.xlu0 %2677
        %v2682 = vsel %vm883, %v2577, 0
        %v2685 = vsel %vm883, %v2579, 0
        %2687 = vmatprep.subr.mxu0 0.0
        %2688 = vmatpush1.msra.mxu0 %v2676
        %2689 = vmatprep.subr.mxu0 0.0
        %2690 = vmatpush1.msra.mxu0 %v2678
        %2691 = vmatprep.subr.mxu0 0.0
        %2692 = vmatpush1.msra.mxu0 0.0
        %2693 = vmatprep.subr.mxu0 0.0
        %2694 = vmatpush1.msra.mxu0 0.0
        %2695 = vmatprep.subr.mxu0 0.0
        %2696 = vmatpush1.msra.mxu0 0.0
        %2697 = vmatprep.subr.mxu0 0.0
        %2698 = vmatpush1.msra.mxu0 0.0
        %2699 = vmatprep.subr.mxu0 0.0
        %2700 = vmatpush1.msra.mxu0 0.0
        %2701 = vmatprep.subr.mxu0 0.0
        %2702 = vmatpush1.msra.mxu0 0.0
        %2703 = vmatprep.subr.mxu0 0.0
        %2704 = vmatpush1.msra.mxu0 0.0
        %2705 = vmatprep.subr.mxu0 0.0
        %2706 = vmatpush1.msra.mxu0 0.0
        %2707 = vmatprep.subr.mxu0 0.0
        %2708 = vmatpush1.msra.mxu0 0.0
        %2709 = vmatprep.subr.mxu0 0.0
        %2710 = vmatpush1.msra.mxu0 0.0
        %2711 = vmatprep.subr.mxu0 0.0
        %2712 = vmatpush1.msra.mxu0 0.0
        %2713 = vmatprep.subr.mxu0 0.0
        %2714 = vmatpush1.msra.mxu0 0.0
        %2715 = vmatprep.subr.mxu0 0.0
        %2716 = vmatpush1.msra.mxu0 0.0
        %2717 = vmatprep.subr.mxu0 0.0
        %2718 = vmatpush1.msra.mxu0 0.0
        %2719 = vmatprep.subr.mxu0 0.0
        %2720 = vmatpush1.msra.mxu0 0.0
        %2721 = vmatprep.subr.mxu0 0.0
        %2722 = vmatpush1.msra.mxu0 0.0
        %2723 = vmatprep.subr.mxu0 0.0
        %2724 = vmatpush1.msra.mxu0 0.0
        %2725 = vmatprep.subr.mxu0 0.0
        %2726 = vmatpush1.msra.mxu0 0.0
        %2727 = vmatprep.subr.mxu0 0.0
        %2728 = vmatpush1.msra.mxu0 0.0
        %2729 = vmatprep.subr.mxu0 0.0
        %2730 = vmatpush1.msra.mxu0 0.0
        %2731 = vmatprep.subr.mxu0 0.0
        %2732 = vmatpush1.msra.mxu0 0.0
        %2733 = vmatprep.subr.mxu0 0.0
        %2734 = vmatpush1.msra.mxu0 0.0
        %2735 = vmatprep.subr.mxu0 0.0
        %2736 = vmatpush1.msra.mxu0 0.0
        %2737 = vmatprep.subr.mxu0 0.0
        %2738 = vmatpush1.msra.mxu0 0.0
        %2739 = vmatprep.subr.mxu0 0.0
        %2740 = vmatpush1.msra.mxu0 0.0
        %2741 = vmatprep.subr.mxu0 0.0
        %2742 = vmatpush1.msra.mxu0 0.0
        %2743 = vmatprep.subr.mxu0 0.0
        %2744 = vmatpush1.msra.mxu0 0.0
        %2745 = vmatprep.subr.mxu0 0.0
        %2746 = vmatpush1.msra.mxu0 0.0
        %2747 = vmatprep.subr.mxu0 0.0
        %2748 = vmatpush1.msra.mxu0 0.0
        %2749 = vmatprep.subr.mxu0 0.0
        %2750 = vmatpush1.msra.mxu0 0.0
        %2751 = vmatprep.mubr.f32.mxu0 0.0
        %2752 = vmatmul.mubr.f32.gmra.mrb[0].mxu0 %v2682
        %v2753 = vpop.f32.mrb[0].mxu0
        %v2754 = vadd.f32 0.0, %v2753
        %v2755 = vpop.f32.mrb[0].mxu0
        %2756 = vmatprep.mubr.f32.mxu0 0.0
        %2757 = vmatmul.mubr.f32.gmra.mrb[0].mxu0 %v2685
        %v2758 = vpop.f32.mrb[0].mxu0
        %v2759 = vadd.f32 0.0, %v2758
        %v2760 = vpop.f32.mrb[0].mxu0
        %2761 = vdwg.mxu0
        %2762 = vrot.lane.b32.xlu0 %v468, 48
        %v2763 = vpop.permute.xlu0 %2762
        %2764 = vrot.lane.b32.xlu0 %v473, 48
        %v2765 = vpop.permute.xlu0 %2764
        %v2769 = vsel %vm883, %v2581, 0
        %v2772 = vsel %vm883, %v2583, 0
        %2774 = vmatprep.subr.mxu0 0.0
        %2775 = vmatpush1.msra.mxu0 %v2763
        %2776 = vmatprep.subr.mxu0 0.0
        %2777 = vmatpush1.msra.mxu0 %v2765
        %2778 = vmatprep.subr.mxu0 0.0
        %2779 = vmatpush1.msra.mxu0 0.0
        %2780 = vmatprep.subr.mxu0 0.0
        %2781 = vmatpush1.msra.mxu0 0.0
        %2782 = vmatprep.subr.mxu0 0.0
        %2783 = vmatpush1.msra.mxu0 0.0
        %2784 = vmatprep.subr.mxu0 0.0
        %2785 = vmatpush1.msra.mxu0 0.0
        %2786 = vmatprep.subr.mxu0 0.0
        %2787 = vmatpush1.msra.mxu0 0.0
        %2788 = vmatprep.subr.mxu0 0.0
        %2789 = vmatpush1.msra.mxu0 0.0
        %2790 = vmatprep.subr.mxu0 0.0
        %2791 = vmatpush1.msra.mxu0 0.0
        %2792 = vmatprep.subr.mxu0 0.0
        %2793 = vmatpush1.msra.mxu0 0.0
        %2794 = vmatprep.subr.mxu0 0.0
        %2795 = vmatpush1.msra.mxu0 0.0
        %2796 = vmatprep.subr.mxu0 0.0
        %2797 = vmatpush1.msra.mxu0 0.0
        %2798 = vmatprep.subr.mxu0 0.0
        %2799 = vmatpush1.msra.mxu0 0.0
        %2800 = vmatprep.subr.mxu0 0.0
        %2801 = vmatpush1.msra.mxu0 0.0
        %2802 = vmatprep.subr.mxu0 0.0
        %2803 = vmatpush1.msra.mxu0 0.0
        %2804 = vmatprep.subr.mxu0 0.0
        %2805 = vmatpush1.msra.mxu0 0.0
        %2806 = vmatprep.subr.mxu0 0.0
        %2807 = vmatpush1.msra.mxu0 0.0
        %2808 = vmatprep.subr.mxu0 0.0
        %2809 = vmatpush1.msra.mxu0 0.0
        %2810 = vmatprep.subr.mxu0 0.0
        %2811 = vmatpush1.msra.mxu0 0.0
        %2812 = vmatprep.subr.mxu0 0.0
        %2813 = vmatpush1.msra.mxu0 0.0
        %2814 = vmatprep.subr.mxu0 0.0
        %2815 = vmatpush1.msra.mxu0 0.0
        %2816 = vmatprep.subr.mxu0 0.0
        %2817 = vmatpush1.msra.mxu0 0.0
        %2818 = vmatprep.subr.mxu0 0.0
        %2819 = vmatpush1.msra.mxu0 0.0
        %2820 = vmatprep.subr.mxu0 0.0
        %2821 = vmatpush1.msra.mxu0 0.0
        %2822 = vmatprep.subr.mxu0 0.0
        %2823 = vmatpush1.msra.mxu0 0.0
        %2824 = vmatprep.subr.mxu0 0.0
        %2825 = vmatpush1.msra.mxu0 0.0
        %2826 = vmatprep.subr.mxu0 0.0
        %2827 = vmatpush1.msra.mxu0 0.0
        %2828 = vmatprep.subr.mxu0 0.0
        %2829 = vmatpush1.msra.mxu0 0.0
        %2830 = vmatprep.subr.mxu0 0.0
        %2831 = vmatpush1.msra.mxu0 0.0
        %2832 = vmatprep.subr.mxu0 0.0
        %2833 = vmatpush1.msra.mxu0 0.0
        %2834 = vmatprep.subr.mxu0 0.0
        %2835 = vmatpush1.msra.mxu0 0.0
        %2836 = vmatprep.subr.mxu0 0.0
        %2837 = vmatpush1.msra.mxu0 0.0
        %2838 = vmatprep.mubr.f32.mxu0 0.0
        %2839 = vmatmul.mubr.f32.gmra.mrb[0].mxu0 %v2769
        %v2840 = vpop.f32.mrb[0].mxu0
        %v2841 = vadd.f32 0.0, %v2840
        %v2842 = vpop.f32.mrb[0].mxu0
        %2843 = vmatprep.mubr.f32.mxu0 0.0
        %2844 = vmatmul.mubr.f32.gmra.mrb[0].mxu0 %v2772
        %v2845 = vpop.f32.mrb[0].mxu0
        %v2846 = vadd.f32 0.0, %v2845
        %v2847 = vpop.f32.mrb[0].mxu0
        %2848 = vdwg.mxu0
        %2849 = vrot.lane.b32.xlu0 %v478, 48
        %v2850 = vpop.permute.xlu0 %2849
        %2851 = vrot.lane.b32.xlu0 %v483, 48
        %v2852 = vpop.permute.xlu0 %2851
        %v2856 = vsel %vm883, %v2585, 0
        %v2859 = vsel %vm883, %v2587, 0
        %2861 = vmatprep.subr.mxu0 0.0
        %2862 = vmatpush1.msra.mxu0 %v2850
        %2863 = vmatprep.subr.mxu0 0.0
        %2864 = vmatpush1.msra.mxu0 %v2852
        %2865 = vmatprep.subr.mxu0 0.0
        %2866 = vmatpush1.msra.mxu0 0.0
        %2867 = vmatprep.subr.mxu0 0.0
        %2868 = vmatpush1.msra.mxu0 0.0
        %2869 = vmatprep.subr.mxu0 0.0
        %2870 = vmatpush1.msra.mxu0 0.0
        %2871 = vmatprep.subr.mxu0 0.0
        %2872 = vmatpush1.msra.mxu0 0.0
        %2873 = vmatprep.subr.mxu0 0.0
        %2874 = vmatpush1.msra.mxu0 0.0
        %2875 = vmatprep.subr.mxu0 0.0
        %2876 = vmatpush1.msra.mxu0 0.0
        %2877 = vmatprep.subr.mxu0 0.0
        %2878 = vmatpush1.msra.mxu0 0.0
        %2879 = vmatprep.subr.mxu0 0.0
        %2880 = vmatpush1.msra.mxu0 0.0
        %2881 = vmatprep.subr.mxu0 0.0
        %2882 = vmatpush1.msra.mxu0 0.0
        %2883 = vmatprep.subr.mxu0 0.0
        %2884 = vmatpush1.msra.mxu0 0.0
        %2885 = vmatprep.subr.mxu0 0.0
        %2886 = vmatpush1.msra.mxu0 0.0
        %2887 = vmatprep.subr.mxu0 0.0
        %2888 = vmatpush1.msra.mxu0 0.0
        %2889 = vmatprep.subr.mxu0 0.0
        %2890 = vmatpush1.msra.mxu0 0.0
        %2891 = vmatprep.subr.mxu0 0.0
        %2892 = vmatpush1.msra.mxu0 0.0
        %2893 = vmatprep.subr.mxu0 0.0
        %2894 = vmatpush1.msra.mxu0 0.0
        %2895 = vmatprep.subr.mxu0 0.0
        %2896 = vmatpush1.msra.mxu0 0.0
        %2897 = vmatprep.subr.mxu0 0.0
        %2898 = vmatpush1.msra.mxu0 0.0
        %2899 = vmatprep.subr.mxu0 0.0
        %2900 = vmatpush1.msra.mxu0 0.0
        %2901 = vmatprep.subr.mxu0 0.0
        %2902 = vmatpush1.msra.mxu0 0.0
        %2903 = vmatprep.subr.mxu0 0.0
        %2904 = vmatpush1.msra.mxu0 0.0
        %2905 = vmatprep.subr.mxu0 0.0
        %2906 = vmatpush1.msra.mxu0 0.0
        %2907 = vmatprep.subr.mxu0 0.0
        %2908 = vmatpush1.msra.mxu0 0.0
        %2909 = vmatprep.subr.mxu0 0.0
        %2910 = vmatpush1.msra.mxu0 0.0
        %2911 = vmatprep.subr.mxu0 0.0
        %2912 = vmatpush1.msra.mxu0 0.0
        %2913 = vmatprep.subr.mxu0 0.0
        %2914 = vmatpush1.msra.mxu0 0.0
        %2915 = vmatprep.subr.mxu0 0.0
        %2916 = vmatpush1.msra.mxu0 0.0
        %2917 = vmatprep.subr.mxu0 0.0
        %2918 = vmatpush1.msra.mxu0 0.0
        %2919 = vmatprep.subr.mxu0 0.0
        %2920 = vmatpush1.msra.mxu0 0.0
        %2921 = vmatprep.subr.mxu0 0.0
        %2922 = vmatpush1.msra.mxu0 0.0
        %2923 = vmatprep.subr.mxu0 0.0
        %2924 = vmatpush1.msra.mxu0 0.0
        %2925 = vmatprep.mubr.f32.mxu0 0.0
        %2926 = vmatmul.mubr.f32.gmra.mrb[0].mxu0 %v2856
        %v2927 = vpop.f32.mrb[0].mxu0
        %v2928 = vadd.f32 0.0, %v2927
        %v2929 = vpop.f32.mrb[0].mxu0
        %2930 = vmatprep.mubr.f32.mxu0 0.0
        %2931 = vmatmul.mubr.f32.gmra.mrb[0].mxu0 %v2859
        %v2932 = vpop.f32.mrb[0].mxu0
        %v2933 = vadd.f32 0.0, %v2932
        %v2934 = vpop.f32.mrb[0].mxu0
        %2935 = vdwg.mxu0
        %2936 = vrot.lane.b32.xlu0 %v502, 104
        %v2937 = vpop.permute.xlu0 %2936
        %2938 = vrot.lane.b32.xlu0 %v503, 104
        %v2939 = vpop.permute.xlu0 %2938
        %2940 = vrot.lane.b32.xlu0 %v448, 72
        %v2941 = vpop.permute.xlu0 %2940
        %2942 = vrot.lane.b32.xlu0 %v453, 72
        %v2943 = vpop.permute.xlu0 %2942
        %v2944 = vsel %vm516, %v2937, 0
        %v2946 = vsel %vm516, %v2939, 0
        %v2948 = vsel %vm516, %v2941, 0
        %v2950 = vsel %vm516, %v2943, 0
        %2952 = vmatprep.subr.mxu0 0.0
        %2953 = vmatpush1.xpose.msra.mxu0 %v2948
        %2954 = vmatprep.subr.mxu0 0.0
        %2955 = vmatpush1.xpose.msra.mxu0 %v2950
        %2956 = vmatprep.subr.mxu0 0.0
        %2957 = vmatpush1.xpose.msra.mxu0 0.0
        %2958 = vmatprep.subr.mxu0 0.0
        %2959 = vmatpush1.xpose.msra.mxu0 0.0
        %2960 = vmatprep.subr.mxu0 0.0
        %2961 = vmatpush1.xpose.msra.mxu0 0.0
        %2962 = vmatprep.subr.mxu0 0.0
        %2963 = vmatpush1.xpose.msra.mxu0 0.0
        %2964 = vmatprep.subr.mxu0 0.0
        %2965 = vmatpush1.xpose.msra.mxu0 0.0
        %2966 = vmatprep.subr.mxu0 0.0
        %2967 = vmatpush1.xpose.msra.mxu0 0.0
        %2968 = vmatprep.subr.mxu0 0.0
        %2969 = vmatpush1.xpose.msra.mxu0 0.0
        %2970 = vmatprep.subr.mxu0 0.0
        %2971 = vmatpush1.xpose.msra.mxu0 0.0
        %2972 = vmatprep.subr.mxu0 0.0
        %2973 = vmatpush1.xpose.msra.mxu0 0.0
        %2974 = vmatprep.subr.mxu0 0.0
        %2975 = vmatpush1.xpose.msra.mxu0 0.0
        %2976 = vmatprep.subr.mxu0 0.0
        %2977 = vmatpush1.xpose.msra.mxu0 0.0
        %2978 = vmatprep.subr.mxu0 0.0
        %2979 = vmatpush1.xpose.msra.mxu0 0.0
        %2980 = vmatprep.subr.mxu0 0.0
        %2981 = vmatpush1.xpose.msra.mxu0 0.0
        %2982 = vmatprep.subr.mxu0 0.0
        %2983 = vmatpush1.xpose.msra.mxu0 0.0
        %2984 = vmatprep.subr.mxu0 0.0
        %2985 = vmatpush1.xpose.msra.mxu0 0.0
        %2986 = vmatprep.subr.mxu0 0.0
        %2987 = vmatpush1.xpose.msra.mxu0 0.0
        %2988 = vmatprep.subr.mxu0 0.0
        %2989 = vmatpush1.xpose.msra.mxu0 0.0
        %2990 = vmatprep.subr.mxu0 0.0
        %2991 = vmatpush1.xpose.msra.mxu0 0.0
        %2992 = vmatprep.subr.mxu0 0.0
        %2993 = vmatpush1.xpose.msra.mxu0 0.0
        %2994 = vmatprep.subr.mxu0 0.0
        %2995 = vmatpush1.xpose.msra.mxu0 0.0
        %2996 = vmatprep.subr.mxu0 0.0
        %2997 = vmatpush1.xpose.msra.mxu0 0.0
        %2998 = vmatprep.subr.mxu0 0.0
        %2999 = vmatpush1.xpose.msra.mxu0 0.0
        %3000 = vmatprep.subr.mxu0 0.0
        %3001 = vmatpush1.xpose.msra.mxu0 0.0
        %3002 = vmatprep.subr.mxu0 0.0
        %3003 = vmatpush1.xpose.msra.mxu0 0.0
        %3004 = vmatprep.subr.mxu0 0.0
        %3005 = vmatpush1.xpose.msra.mxu0 0.0
        %3006 = vmatprep.subr.mxu0 0.0
        %3007 = vmatpush1.xpose.msra.mxu0 0.0
        %3008 = vmatprep.subr.mxu0 0.0
        %3009 = vmatpush1.xpose.msra.mxu0 0.0
        %3010 = vmatprep.subr.mxu0 0.0
        %3011 = vmatpush1.xpose.msra.mxu0 0.0
        %3012 = vmatprep.subr.mxu0 0.0
        %3013 = vmatpush1.xpose.msra.mxu0 0.0
        %3014 = vmatprep.subr.mxu0 0.0
        %3015 = vmatpush1.xpose.msra.mxu0 0.0
        %3016 = vmatprep.mubr.f32.mxu0 0.0
        %3017 = vmatmul.mubr.f32.gmra.mrb[0].mxu0 %v2944
        %v3018 = vpop.f32.mrb[0].mxu0
        %v3019 = vadd.f32 %v492, %v3018
        %v3020 = vpop.f32.mrb[0].mxu0
        %3021 = vmatprep.mubr.f32.mxu0 0.0
        %3022 = vmatmul.mubr.f32.gmra.mrb[0].mxu0 %v2946
        %v3023 = vpop.f32.mrb[0].mxu0
        %v3024 = vadd.f32 %v493, %v3023
        %v3025 = vpop.f32.mrb[0].mxu0
        %3026 = vdwg.mxu0
        %3027 = vrot.lane.b32.xlu0 %v504, 104
        %v3028 = vpop.permute.xlu0 %3027
        %3029 = vrot.lane.b32.xlu0 %v505, 104
        %v3030 = vpop.permute.xlu0 %3029
        %3031 = vrot.lane.b32.xlu0 %v458, 72
        %v3032 = vpop.permute.xlu0 %3031
        %3033 = vrot.lane.b32.xlu0 %v463, 72
        %v3034 = vpop.permute.xlu0 %3033
        %v3035 = vsel %vm516, %v3028, 0
        %v3037 = vsel %vm516, %v3030, 0
        %v3039 = vsel %vm516, %v3032, 0
        %v3041 = vsel %vm516, %v3034, 0
        %3043 = vmatprep.subr.mxu0 0.0
        %3044 = vmatpush1.xpose.msra.mxu0 %v3039
        %3045 = vmatprep.subr.mxu0 0.0
        %3046 = vmatpush1.xpose.msra.mxu0 %v3041
        %3047 = vmatprep.subr.mxu0 0.0
        %3048 = vmatpush1.xpose.msra.mxu0 0.0
        %3049 = vmatprep.subr.mxu0 0.0
        %3050 = vmatpush1.xpose.msra.mxu0 0.0
        %3051 = vmatprep.subr.mxu0 0.0
        %3052 = vmatpush1.xpose.msra.mxu0 0.0
        %3053 = vmatprep.subr.mxu0 0.0
        %3054 = vmatpush1.xpose.msra.mxu0 0.0
        %3055 = vmatprep.subr.mxu0 0.0
        %3056 = vmatpush1.xpose.msra.mxu0 0.0
        %3057 = vmatprep.subr.mxu0 0.0
        %3058 = vmatpush1.xpose.msra.mxu0 0.0
        %3059 = vmatprep.subr.mxu0 0.0
        %3060 = vmatpush1.xpose.msra.mxu0 0.0
        %3061 = vmatprep.subr.mxu0 0.0
        %3062 = vmatpush1.xpose.msra.mxu0 0.0
        %3063 = vmatprep.subr.mxu0 0.0
        %3064 = vmatpush1.xpose.msra.mxu0 0.0
        %3065 = vmatprep.subr.mxu0 0.0
        %3066 = vmatpush1.xpose.msra.mxu0 0.0
        %3067 = vmatprep.subr.mxu0 0.0
        %3068 = vmatpush1.xpose.msra.mxu0 0.0
        %3069 = vmatprep.subr.mxu0 0.0
        %3070 = vmatpush1.xpose.msra.mxu0 0.0
        %3071 = vmatprep.subr.mxu0 0.0
        %3072 = vmatpush1.xpose.msra.mxu0 0.0
        %3073 = vmatprep.subr.mxu0 0.0
        %3074 = vmatpush1.xpose.msra.mxu0 0.0
        %3075 = vmatprep.subr.mxu0 0.0
        %3076 = vmatpush1.xpose.msra.mxu0 0.0
        %3077 = vmatprep.subr.mxu0 0.0
        %3078 = vmatpush1.xpose.msra.mxu0 0.0
        %3079 = vmatprep.subr.mxu0 0.0
        %3080 = vmatpush1.xpose.msra.mxu0 0.0
        %3081 = vmatprep.subr.mxu0 0.0
        %3082 = vmatpush1.xpose.msra.mxu0 0.0
        %3083 = vmatprep.subr.mxu0 0.0
        %3084 = vmatpush1.xpose.msra.mxu0 0.0
        %3085 = vmatprep.subr.mxu0 0.0
        %3086 = vmatpush1.xpose.msra.mxu0 0.0
        %3087 = vmatprep.subr.mxu0 0.0
        %3088 = vmatpush1.xpose.msra.mxu0 0.0
        %3089 = vmatprep.subr.mxu0 0.0
        %3090 = vmatpush1.xpose.msra.mxu0 0.0
        %3091 = vmatprep.subr.mxu0 0.0
        %3092 = vmatpush1.xpose.msra.mxu0 0.0
        %3093 = vmatprep.subr.mxu0 0.0
        %3094 = vmatpush1.xpose.msra.mxu0 0.0
        %3095 = vmatprep.subr.mxu0 0.0
        %3096 = vmatpush1.xpose.msra.mxu0 0.0
        %3097 = vmatprep.subr.mxu0 0.0
        %3098 = vmatpush1.xpose.msra.mxu0 0.0
        %3099 = vmatprep.subr.mxu0 0.0
        %3100 = vmatpush1.xpose.msra.mxu0 0.0
        %3101 = vmatprep.subr.mxu0 0.0
        %3102 = vmatpush1.xpose.msra.mxu0 0.0
        %3103 = vmatprep.subr.mxu0 0.0
        %3104 = vmatpush1.xpose.msra.mxu0 0.0
        %3105 = vmatprep.subr.mxu0 0.0
        %3106 = vmatpush1.xpose.msra.mxu0 0.0
        %3107 = vmatprep.mubr.f32.mxu0 0.0
        %3108 = vmatmul.mubr.f32.gmra.mrb[0].mxu0 %v3035
        %v3109 = vpop.f32.mrb[0].mxu0
        %v3110 = vadd.f32 %v492, %v3109
        %v3111 = vpop.f32.mrb[0].mxu0
        %3112 = vmatprep.mubr.f32.mxu0 0.0
        %3113 = vmatmul.mubr.f32.gmra.mrb[0].mxu0 %v3037
        %v3114 = vpop.f32.mrb[0].mxu0
        %v3115 = vadd.f32 %v493, %v3114
        %v3116 = vpop.f32.mrb[0].mxu0
        %3117 = vdwg.mxu0
        %3118 = vrot.lane.b32.xlu0 %v506, 104
        %v3119 = vpop.permute.xlu0 %3118
        %3120 = vrot.lane.b32.xlu0 %v507, 104
        %v3121 = vpop.permute.xlu0 %3120
        %3122 = vrot.lane.b32.xlu0 %v468, 72
        %v3123 = vpop.permute.xlu0 %3122
        %3124 = vrot.lane.b32.xlu0 %v473, 72
        %v3125 = vpop.permute.xlu0 %3124
        %v3126 = vsel %vm516, %v3119, 0
        %v3128 = vsel %vm516, %v3121, 0
        %v3130 = vsel %vm516, %v3123, 0
        %v3132 = vsel %vm516, %v3125, 0
        %3134 = vmatprep.subr.mxu0 0.0
        %3135 = vmatpush1.xpose.msra.mxu0 %v3130
        %3136 = vmatprep.subr.mxu0 0.0
        %3137 = vmatpush1.xpose.msra.mxu0 %v3132
        %3138 = vmatprep.subr.mxu0 0.0
        %3139 = vmatpush1.xpose.msra.mxu0 0.0
        %3140 = vmatprep.subr.mxu0 0.0
        %3141 = vmatpush1.xpose.msra.mxu0 0.0
        %3142 = vmatprep.subr.mxu0 0.0
        %3143 = vmatpush1.xpose.msra.mxu0 0.0
        %3144 = vmatprep.subr.mxu0 0.0
        %3145 = vmatpush1.xpose.msra.mxu0 0.0
        %3146 = vmatprep.subr.mxu0 0.0
        %3147 = vmatpush1.xpose.msra.mxu0 0.0
        %3148 = vmatprep.subr.mxu0 0.0
        %3149 = vmatpush1.xpose.msra.mxu0 0.0
        %3150 = vmatprep.subr.mxu0 0.0
        %3151 = vmatpush1.xpose.msra.mxu0 0.0
        %3152 = vmatprep.subr.mxu0 0.0
        %3153 = vmatpush1.xpose.msra.mxu0 0.0
        %3154 = vmatprep.subr.mxu0 0.0
        %3155 = vmatpush1.xpose.msra.mxu0 0.0
        %3156 = vmatprep.subr.mxu0 0.0
        %3157 = vmatpush1.xpose.msra.mxu0 0.0
        %3158 = vmatprep.subr.mxu0 0.0
        %3159 = vmatpush1.xpose.msra.mxu0 0.0
        %3160 = vmatprep.subr.mxu0 0.0
        %3161 = vmatpush1.xpose.msra.mxu0 0.0
        %3162 = vmatprep.subr.mxu0 0.0
        %3163 = vmatpush1.xpose.msra.mxu0 0.0
        %3164 = vmatprep.subr.mxu0 0.0
        %3165 = vmatpush1.xpose.msra.mxu0 0.0
        %3166 = vmatprep.subr.mxu0 0.0
        %3167 = vmatpush1.xpose.msra.mxu0 0.0
        %3168 = vmatprep.subr.mxu0 0.0
        %3169 = vmatpush1.xpose.msra.mxu0 0.0
        %3170 = vmatprep.subr.mxu0 0.0
        %3171 = vmatpush1.xpose.msra.mxu0 0.0
        %3172 = vmatprep.subr.mxu0 0.0
        %3173 = vmatpush1.xpose.msra.mxu0 0.0
        %3174 = vmatprep.subr.mxu0 0.0
        %3175 = vmatpush1.xpose.msra.mxu0 0.0
        %3176 = vmatprep.subr.mxu0 0.0
        %3177 = vmatpush1.xpose.msra.mxu0 0.0
        %3178 = vmatprep.subr.mxu0 0.0
        %3179 = vmatpush1.xpose.msra.mxu0 0.0
        %3180 = vmatprep.subr.mxu0 0.0
        %3181 = vmatpush1.xpose.msra.mxu0 0.0
        %3182 = vmatprep.subr.mxu0 0.0
        %3183 = vmatpush1.xpose.msra.mxu0 0.0
        %3184 = vmatprep.subr.mxu0 0.0
        %3185 = vmatpush1.xpose.msra.mxu0 0.0
        %3186 = vmatprep.subr.mxu0 0.0
        %3187 = vmatpush1.xpose.msra.mxu0 0.0
        %3188 = vmatprep.subr.mxu0 0.0
        %3189 = vmatpush1.xpose.msra.mxu0 0.0
        %3190 = vmatprep.subr.mxu0 0.0
        %3191 = vmatpush1.xpose.msra.mxu0 0.0
        %3192 = vmatprep.subr.mxu0 0.0
        %3193 = vmatpush1.xpose.msra.mxu0 0.0
        %3194 = vmatprep.subr.mxu0 0.0
        %3195 = vmatpush1.xpose.msra.mxu0 0.0
        %3196 = vmatprep.subr.mxu0 0.0
        %3197 = vmatpush1.xpose.msra.mxu0 0.0
        %3198 = vmatprep.mubr.f32.mxu0 0.0
        %3199 = vmatmul.mubr.f32.gmra.mrb[0].mxu0 %v3126
        %v3200 = vpop.f32.mrb[0].mxu0
        %v3201 = vadd.f32 %v492, %v3200
        %v3202 = vpop.f32.mrb[0].mxu0
        %3203 = vmatprep.mubr.f32.mxu0 0.0
        %3204 = vmatmul.mubr.f32.gmra.mrb[0].mxu0 %v3128
        %v3205 = vpop.f32.mrb[0].mxu0
        %v3206 = vadd.f32 %v493, %v3205
        %v3207 = vpop.f32.mrb[0].mxu0
        %3208 = vdwg.mxu0
        %3209 = vrot.lane.b32.xlu0 %v508, 104
        %v3210 = vpop.permute.xlu0 %3209
        %3211 = vrot.lane.b32.xlu0 %v509, 104
        %v3212 = vpop.permute.xlu0 %3211
        %3213 = vrot.lane.b32.xlu0 %v478, 72
        %v3214 = vpop.permute.xlu0 %3213
        %3215 = vrot.lane.b32.xlu0 %v483, 72
        %v3216 = vpop.permute.xlu0 %3215
        %v3217 = vsel %vm516, %v3210, 0
        %v3219 = vsel %vm516, %v3212, 0
        %v3221 = vsel %vm516, %v3214, 0
        %v3223 = vsel %vm516, %v3216, 0
        %3225 = vmatprep.subr.mxu0 0.0
        %3226 = vmatpush1.xpose.msra.mxu0 %v3221
        %3227 = vmatprep.subr.mxu0 0.0
        %3228 = vmatpush1.xpose.msra.mxu0 %v3223
        %3229 = vmatprep.subr.mxu0 0.0
        %3230 = vmatpush1.xpose.msra.mxu0 0.0
        %3231 = vmatprep.subr.mxu0 0.0
        %3232 = vmatpush1.xpose.msra.mxu0 0.0
        %3233 = vmatprep.subr.mxu0 0.0
        %3234 = vmatpush1.xpose.msra.mxu0 0.0
        %3235 = vmatprep.subr.mxu0 0.0
        %3236 = vmatpush1.xpose.msra.mxu0 0.0
        %3237 = vmatprep.subr.mxu0 0.0
        %3238 = vmatpush1.xpose.msra.mxu0 0.0
        %3239 = vmatprep.subr.mxu0 0.0
        %3240 = vmatpush1.xpose.msra.mxu0 0.0
        %3241 = vmatprep.subr.mxu0 0.0
        %3242 = vmatpush1.xpose.msra.mxu0 0.0
        %3243 = vmatprep.subr.mxu0 0.0
        %3244 = vmatpush1.xpose.msra.mxu0 0.0
        %3245 = vmatprep.subr.mxu0 0.0
        %3246 = vmatpush1.xpose.msra.mxu0 0.0
        %3247 = vmatprep.subr.mxu0 0.0
        %3248 = vmatpush1.xpose.msra.mxu0 0.0
        %3249 = vmatprep.subr.mxu0 0.0
        %3250 = vmatpush1.xpose.msra.mxu0 0.0
        %3251 = vmatprep.subr.mxu0 0.0
        %3252 = vmatpush1.xpose.msra.mxu0 0.0
        %3253 = vmatprep.subr.mxu0 0.0
        %3254 = vmatpush1.xpose.msra.mxu0 0.0
        %3255 = vmatprep.subr.mxu0 0.0
        %3256 = vmatpush1.xpose.msra.mxu0 0.0
        %3257 = vmatprep.subr.mxu0 0.0
        %3258 = vmatpush1.xpose.msra.mxu0 0.0
        %3259 = vmatprep.subr.mxu0 0.0
        %3260 = vmatpush1.xpose.msra.mxu0 0.0
        %3261 = vmatprep.subr.mxu0 0.0
        %3262 = vmatpush1.xpose.msra.mxu0 0.0
        %3263 = vmatprep.subr.mxu0 0.0
        %3264 = vmatpush1.xpose.msra.mxu0 0.0
        %3265 = vmatprep.subr.mxu0 0.0
        %3266 = vmatpush1.xpose.msra.mxu0 0.0
        %3267 = vmatprep.subr.mxu0 0.0
        %3268 = vmatpush1.xpose.msra.mxu0 0.0
        %3269 = vmatprep.subr.mxu0 0.0
        %3270 = vmatpush1.xpose.msra.mxu0 0.0
        %3271 = vmatprep.subr.mxu0 0.0
        %3272 = vmatpush1.xpose.msra.mxu0 0.0
        %3273 = vmatprep.subr.mxu0 0.0
        %3274 = vmatpush1.xpose.msra.mxu0 0.0
        %3275 = vmatprep.subr.mxu0 0.0
        %3276 = vmatpush1.xpose.msra.mxu0 0.0
        %3277 = vmatprep.subr.mxu0 0.0
        %3278 = vmatpush1.xpose.msra.mxu0 0.0
        %3279 = vmatprep.subr.mxu0 0.0
        %3280 = vmatpush1.xpose.msra.mxu0 0.0
        %3281 = vmatprep.subr.mxu0 0.0
        %3282 = vmatpush1.xpose.msra.mxu0 0.0
        %3283 = vmatprep.subr.mxu0 0.0
        %3284 = vmatpush1.xpose.msra.mxu0 0.0
        %3285 = vmatprep.subr.mxu0 0.0
        %3286 = vmatpush1.xpose.msra.mxu0 0.0
        %3287 = vmatprep.subr.mxu0 0.0
        %3288 = vmatpush1.xpose.msra.mxu0 0.0
        %3289 = vmatprep.mubr.f32.mxu0 0.0
        %3290 = vmatmul.mubr.f32.gmra.mrb[0].mxu0 %v3217
        %v3291 = vpop.f32.mrb[0].mxu0
        %v3292 = vadd.f32 %v492, %v3291
        %v3293 = vpop.f32.mrb[0].mxu0
        %3294 = vmatprep.mubr.f32.mxu0 0.0
        %3295 = vmatmul.mubr.f32.gmra.mrb[0].mxu0 %v3219
        %v3296 = vpop.f32.mrb[0].mxu0
        %v3297 = vadd.f32 %v493, %v3296
        %v3298 = vpop.f32.mrb[0].mxu0
        %3299 = vdwg.mxu0
        %v3300 = vadd.f32 %v3019, %v494
        %v3301 = vadd.f32 %v3024, %v495
        %v3302 = vadd.f32 %v3110, %v496
        %v3303 = vadd.f32 %v3115, %v497
        %v3304 = vadd.f32 %v3201, %v498
        %v3305 = vadd.f32 %v3206, %v499
        %v3306 = vadd.f32 %v3292, %v500
        %v3307 = vadd.f32 %v3297, %v501
        %v3308 = vsel %vm883, %v3300, -inf
        %3309 = vmax.xlane.f32.xlu0 %v3308
        %v3310 = vpop.xlane.xlu0 %3309
        %v3311 = vsel %vm883, %v3301, -inf
        %3312 = vmax.xlane.f32.xlu0 %v3311
        %v3313 = vpop.xlane.xlu0 %3312
        %v3314 = vsel %vm883, %v3302, -inf
        %3315 = vmax.xlane.f32.xlu0 %v3314
        %v3316 = vpop.xlane.xlu0 %3315
        %v3317 = vsel %vm883, %v3303, -inf
        %3318 = vmax.xlane.f32.xlu0 %v3317
        %v3319 = vpop.xlane.xlu0 %3318
        %v3320 = vsel %vm883, %v3304, -inf
        %3321 = vmax.xlane.f32.xlu0 %v3320
        %v3322 = vpop.xlane.xlu0 %3321
        %v3323 = vsel %vm883, %v3305, -inf
        %3324 = vmax.xlane.f32.xlu0 %v3323
        %v3325 = vpop.xlane.xlu0 %3324
        %v3326 = vsel %vm883, %v3306, -inf
        %3327 = vmax.xlane.f32.xlu0 %v3326
        %v3328 = vpop.xlane.xlu0 %3327
        %v3329 = vsel %vm883, %v3307, -inf
        %3330 = vmax.xlane.f32.xlu0 %v3329
        %v3331 = vpop.xlane.xlu0 %3330
        %v3332 = vsub.f32 %v3300, %v3310
        %v3333 = vsub.f32 %v3301, %v3313
        %v3334 = vsub.f32 %v3302, %v3316
        %v3335 = vsub.f32 %v3303, %v3319
        %v3336 = vsub.f32 %v3304, %v3322
        %v3337 = vsub.f32 %v3305, %v3325
        %v3338 = vsub.f32 %v3306, %v3328
        %v3339 = vsub.f32 %v3307, %v3331
        %v3340 = vmul.f32 %v3332, 1.442695
        %v3341 = vpow.pop %v3340
        %v3342 = vmul.f32 %v3333, 1.442695
        %v3343 = vpow.pop %v3342
        %v3344 = vmul.f32 %v3334, 1.442695
        %v3345 = vpow.pop %v3344
        %v3346 = vmul.f32 %v3335, 1.442695
        %v3347 = vpow.pop %v3346
        %v3348 = vmul.f32 %v3336, 1.442695
        %v3349 = vpow.pop %v3348
        %v3350 = vmul.f32 %v3337, 1.442695
        %v3351 = vpow.pop %v3350
        %v3352 = vmul.f32 %v3338, 1.442695
        %v3353 = vpow.pop %v3352
        %v3354 = vmul.f32 %v3339, 1.442695
        %v3355 = vpow.pop %v3354
        %v3356 = vsel %vm883, %v3341, 0.0
        %3357 = vadd.xlane.f32.xlu0 %v3356
        %v3358 = vpop.xlane.xlu0 %3357
        %v3359 = vsel %vm883, %v3343, 0.0
        %3360 = vadd.xlane.f32.xlu0 %v3359
        %v3361 = vpop.xlane.xlu0 %3360
        %v3362 = vsel %vm883, %v3345, 0.0
        %3363 = vadd.xlane.f32.xlu0 %v3362
        %v3364 = vpop.xlane.xlu0 %3363
        %v3365 = vsel %vm883, %v3347, 0.0
        %3366 = vadd.xlane.f32.xlu0 %v3365
        %v3367 = vpop.xlane.xlu0 %3366
        %v3368 = vsel %vm883, %v3349, 0.0
        %3369 = vadd.xlane.f32.xlu0 %v3368
        %v3370 = vpop.xlane.xlu0 %3369
        %v3371 = vsel %vm883, %v3351, 0.0
        %3372 = vadd.xlane.f32.xlu0 %v3371
        %v3373 = vpop.xlane.xlu0 %3372
        %v3374 = vsel %vm883, %v3353, 0.0
        %3375 = vadd.xlane.f32.xlu0 %v3374
        %v3376 = vpop.xlane.xlu0 %3375
        %v3377 = vsel %vm883, %v3355, 0.0
        %3378 = vadd.xlane.f32.xlu0 %v3377
        %v3379 = vpop.xlane.xlu0 %3378
        %v3380 = vrcp.pop %v3358
        %v3381 = vmul.f32 %v3341, %v3380
        %v3382 = vrcp.pop %v3361
        %v3383 = vmul.f32 %v3343, %v3382
        %v3384 = vrcp.pop %v3364
        %v3385 = vmul.f32 %v3345, %v3384
        %v3386 = vrcp.pop %v3367
        %v3387 = vmul.f32 %v3347, %v3386
        %v3388 = vrcp.pop %v3370
        %v3389 = vmul.f32 %v3349, %v3388
        %v3390 = vrcp.pop %v3373
        %v3391 = vmul.f32 %v3351, %v3390
        %v3392 = vrcp.pop %v3376
        %v3393 = vmul.f32 %v3353, %v3392
        %v3394 = vrcp.pop %v3379
        %v3395 = vmul.f32 %v3355, %v3394
        %3396 = vrot.lane.b32.xlu0 %v448, 40
        %v3397 = vpop.permute.xlu0 %3396
        %3398 = vrot.lane.b32.xlu0 %v453, 40
        %v3399 = vpop.permute.xlu0 %3398
        %v3403 = vsel %vm883, %v3381, 0
        %v3406 = vsel %vm883, %v3383, 0
        %3408 = vmatprep.subr.mxu0 0.0
        %3409 = vmatpush1.msra.mxu0 %v3397
        %3410 = vmatprep.subr.mxu0 0.0
        %3411 = vmatpush1.msra.mxu0 %v3399
        %3412 = vmatprep.subr.mxu0 0.0
        %3413 = vmatpush1.msra.mxu0 0.0
        %3414 = vmatprep.subr.mxu0 0.0
        %3415 = vmatpush1.msra.mxu0 0.0
        %3416 = vmatprep.subr.mxu0 0.0
        %3417 = vmatpush1.msra.mxu0 0.0
        %3418 = vmatprep.subr.mxu0 0.0
        %3419 = vmatpush1.msra.mxu0 0.0
        %3420 = vmatprep.subr.mxu0 0.0
        %3421 = vmatpush1.msra.mxu0 0.0
        %3422 = vmatprep.subr.mxu0 0.0
        %3423 = vmatpush1.msra.mxu0 0.0
        %3424 = vmatprep.subr.mxu0 0.0
        %3425 = vmatpush1.msra.mxu0 0.0
        %3426 = vmatprep.subr.mxu0 0.0
        %3427 = vmatpush1.msra.mxu0 0.0
        %3428 = vmatprep.subr.mxu0 0.0
        %3429 = vmatpush1.msra.mxu0 0.0
        %3430 = vmatprep.subr.mxu0 0.0
        %3431 = vmatpush1.msra.mxu0 0.0
        %3432 = vmatprep.subr.mxu0 0.0
        %3433 = vmatpush1.msra.mxu0 0.0
        %3434 = vmatprep.subr.mxu0 0.0
        %3435 = vmatpush1.msra.mxu0 0.0
        %3436 = vmatprep.subr.mxu0 0.0
        %3437 = vmatpush1.msra.mxu0 0.0
        %3438 = vmatprep.subr.mxu0 0.0
        %3439 = vmatpush1.msra.mxu0 0.0
        %3440 = vmatprep.subr.mxu0 0.0
        %3441 = vmatpush1.msra.mxu0 0.0
        %3442 = vmatprep.subr.mxu0 0.0
        %3443 = vmatpush1.msra.mxu0 0.0
        %3444 = vmatprep.subr.mxu0 0.0
        %3445 = vmatpush1.msra.mxu0 0.0
        %3446 = vmatprep.subr.mxu0 0.0
        %3447 = vmatpush1.msra.mxu0 0.0
        %3448 = vmatprep.subr.mxu0 0.0
        %3449 = vmatpush1.msra.mxu0 0.0
        %3450 = vmatprep.subr.mxu0 0.0
        %3451 = vmatpush1.msra.mxu0 0.0
        %3452 = vmatprep.subr.mxu0 0.0
        %3453 = vmatpush1.msra.mxu0 0.0
        %3454 = vmatprep.subr.mxu0 0.0
        %3455 = vmatpush1.msra.mxu0 0.0
        %3456 = vmatprep.subr.mxu0 0.0
        %3457 = vmatpush1.msra.mxu0 0.0
        %3458 = vmatprep.subr.mxu0 0.0
        %3459 = vmatpush1.msra.mxu0 0.0
        %3460 = vmatprep.subr.mxu0 0.0
        %3461 = vmatpush1.msra.mxu0 0.0
        %3462 = vmatprep.subr.mxu0 0.0
        %3463 = vmatpush1.msra.mxu0 0.0
        %3464 = vmatprep.subr.mxu0 0.0
        %3465 = vmatpush1.msra.mxu0 0.0
        %3466 = vmatprep.subr.mxu0 0.0
        %3467 = vmatpush1.msra.mxu0 0.0
        %3468 = vmatprep.subr.mxu0 0.0
        %3469 = vmatpush1.msra.mxu0 0.0
        %3470 = vmatprep.subr.mxu0 0.0
        %3471 = vmatpush1.msra.mxu0 0.0
        %3472 = vmatprep.mubr.f32.mxu0 0.0
        %3473 = vmatmul.mubr.f32.gmra.mrb[0].mxu0 %v3403
        %v3474 = vpop.f32.mrb[0].mxu0
        %v3475 = vadd.f32 0.0, %v3474
        %v3476 = vpop.f32.mrb[0].mxu0
        %3477 = vmatprep.mubr.f32.mxu0 0.0
        %3478 = vmatmul.mubr.f32.gmra.mrb[0].mxu0 %v3406
        %v3479 = vpop.f32.mrb[0].mxu0
        %v3480 = vadd.f32 0.0, %v3479
        %v3481 = vpop.f32.mrb[0].mxu0
        %3482 = vdwg.mxu0
        %3483 = vrot.lane.b32.xlu0 %v458, 40
        %v3484 = vpop.permute.xlu0 %3483
        %3485 = vrot.lane.b32.xlu0 %v463, 40
        %v3486 = vpop.permute.xlu0 %3485
        %v3490 = vsel %vm883, %v3385, 0
        %v3493 = vsel %vm883, %v3387, 0
        %3495 = vmatprep.subr.mxu0 0.0
        %3496 = vmatpush1.msra.mxu0 %v3484
        %3497 = vmatprep.subr.mxu0 0.0
        %3498 = vmatpush1.msra.mxu0 %v3486
        %3499 = vmatprep.subr.mxu0 0.0
        %3500 = vmatpush1.msra.mxu0 0.0
        %3501 = vmatprep.subr.mxu0 0.0
        %3502 = vmatpush1.msra.mxu0 0.0
        %3503 = vmatprep.subr.mxu0 0.0
        %3504 = vmatpush1.msra.mxu0 0.0
        %3505 = vmatprep.subr.mxu0 0.0
        %3506 = vmatpush1.msra.mxu0 0.0
        %3507 = vmatprep.subr.mxu0 0.0
        %3508 = vmatpush1.msra.mxu0 0.0
        %3509 = vmatprep.subr.mxu0 0.0
        %3510 = vmatpush1.msra.mxu0 0.0
        %3511 = vmatprep.subr.mxu0 0.0
        %3512 = vmatpush1.msra.mxu0 0.0
        %3513 = vmatprep.subr.mxu0 0.0
        %3514 = vmatpush1.msra.mxu0 0.0
        %3515 = vmatprep.subr.mxu0 0.0
        %3516 = vmatpush1.msra.mxu0 0.0
        %3517 = vmatprep.subr.mxu0 0.0
        %3518 = vmatpush1.msra.mxu0 0.0
        %3519 = vmatprep.subr.mxu0 0.0
        %3520 = vmatpush1.msra.mxu0 0.0
        %3521 = vmatprep.subr.mxu0 0.0
        %3522 = vmatpush1.msra.mxu0 0.0
        %3523 = vmatprep.subr.mxu0 0.0
        %3524 = vmatpush1.msra.mxu0 0.0
        %3525 = vmatprep.subr.mxu0 0.0
        %3526 = vmatpush1.msra.mxu0 0.0
        %3527 = vmatprep.subr.mxu0 0.0
        %3528 = vmatpush1.msra.mxu0 0.0
        %3529 = vmatprep.subr.mxu0 0.0
        %3530 = vmatpush1.msra.mxu0 0.0
        %3531 = vmatprep.subr.mxu0 0.0
        %3532 = vmatpush1.msra.mxu0 0.0
        %3533 = vmatprep.subr.mxu0 0.0
        %3534 = vmatpush1.msra.mxu0 0.0
        %3535 = vmatprep.subr.mxu0 0.0
        %3536 = vmatpush1.msra.mxu0 0.0
        %3537 = vmatprep.subr.mxu0 0.0
        %3538 = vmatpush1.msra.mxu0 0.0
        %3539 = vmatprep.subr.mxu0 0.0
        %3540 = vmatpush1.msra.mxu0 0.0
        %3541 = vmatprep.subr.mxu0 0.0
        %3542 = vmatpush1.msra.mxu0 0.0
        %3543 = vmatprep.subr.mxu0 0.0
        %3544 = vmatpush1.msra.mxu0 0.0
        %3545 = vmatprep.subr.mxu0 0.0
        %3546 = vmatpush1.msra.mxu0 0.0
        %3547 = vmatprep.subr.mxu0 0.0
        %3548 = vmatpush1.msra.mxu0 0.0
        %3549 = vmatprep.subr.mxu0 0.0
        %3550 = vmatpush1.msra.mxu0 0.0
        %3551 = vmatprep.subr.mxu0 0.0
        %3552 = vmatpush1.msra.mxu0 0.0
        %3553 = vmatprep.subr.mxu0 0.0
        %3554 = vmatpush1.msra.mxu0 0.0
        %3555 = vmatprep.subr.mxu0 0.0
        %3556 = vmatpush1.msra.mxu0 0.0
        %3557 = vmatprep.subr.mxu0 0.0
        %3558 = vmatpush1.msra.mxu0 0.0
        %3559 = vmatprep.mubr.f32.mxu0 0.0
        %3560 = vmatmul.mubr.f32.gmra.mrb[0].mxu0 %v3490
        %v3561 = vpop.f32.mrb[0].mxu0
        %v3562 = vadd.f32 0.0, %v3561
        %v3563 = vpop.f32.mrb[0].mxu0
        %3564 = vmatprep.mubr.f32.mxu0 0.0
        %3565 = vmatmul.mubr.f32.gmra.mrb[0].mxu0 %v3493
        %v3566 = vpop.f32.mrb[0].mxu0
        %v3567 = vadd.f32 0.0, %v3566
        %v3568 = vpop.f32.mrb[0].mxu0
        %3569 = vdwg.mxu0
        %3570 = vrot.lane.b32.xlu0 %v468, 40
        %v3571 = vpop.permute.xlu0 %3570
        %3572 = vrot.lane.b32.xlu0 %v473, 40
        %v3573 = vpop.permute.xlu0 %3572
        %v3577 = vsel %vm883, %v3389, 0
        %v3580 = vsel %vm883, %v3391, 0
        %3582 = vmatprep.subr.mxu0 0.0
        %3583 = vmatpush1.msra.mxu0 %v3571
        %3584 = vmatprep.subr.mxu0 0.0
        %3585 = vmatpush1.msra.mxu0 %v3573
        %3586 = vmatprep.subr.mxu0 0.0
        %3587 = vmatpush1.msra.mxu0 0.0
        %3588 = vmatprep.subr.mxu0 0.0
        %3589 = vmatpush1.msra.mxu0 0.0
        %3590 = vmatprep.subr.mxu0 0.0
        %3591 = vmatpush1.msra.mxu0 0.0
        %3592 = vmatprep.subr.mxu0 0.0
        %3593 = vmatpush1.msra.mxu0 0.0
        %3594 = vmatprep.subr.mxu0 0.0
        %3595 = vmatpush1.msra.mxu0 0.0
        %3596 = vmatprep.subr.mxu0 0.0
        %3597 = vmatpush1.msra.mxu0 0.0
        %3598 = vmatprep.subr.mxu0 0.0
        %3599 = vmatpush1.msra.mxu0 0.0
        %3600 = vmatprep.subr.mxu0 0.0
        %3601 = vmatpush1.msra.mxu0 0.0
        %3602 = vmatprep.subr.mxu0 0.0
        %3603 = vmatpush1.msra.mxu0 0.0
        %3604 = vmatprep.subr.mxu0 0.0
        %3605 = vmatpush1.msra.mxu0 0.0
        %3606 = vmatprep.subr.mxu0 0.0
        %3607 = vmatpush1.msra.mxu0 0.0
        %3608 = vmatprep.subr.mxu0 0.0
        %3609 = vmatpush1.msra.mxu0 0.0
        %3610 = vmatprep.subr.mxu0 0.0
        %3611 = vmatpush1.msra.mxu0 0.0
        %3612 = vmatprep.subr.mxu0 0.0
        %3613 = vmatpush1.msra.mxu0 0.0
        %3614 = vmatprep.subr.mxu0 0.0
        %3615 = vmatpush1.msra.mxu0 0.0
        %3616 = vmatprep.subr.mxu0 0.0
        %3617 = vmatpush1.msra.mxu0 0.0
        %3618 = vmatprep.subr.mxu0 0.0
        %3619 = vmatpush1.msra.mxu0 0.0
        %3620 = vmatprep.subr.mxu0 0.0
        %3621 = vmatpush1.msra.mxu0 0.0
        %3622 = vmatprep.subr.mxu0 0.0
        %3623 = vmatpush1.msra.mxu0 0.0
        %3624 = vmatprep.subr.mxu0 0.0
        %3625 = vmatpush1.msra.mxu0 0.0
        %3626 = vmatprep.subr.mxu0 0.0
        %3627 = vmatpush1.msra.mxu0 0.0
        %3628 = vmatprep.subr.mxu0 0.0
        %3629 = vmatpush1.msra.mxu0 0.0
        %3630 = vmatprep.subr.mxu0 0.0
        %3631 = vmatpush1.msra.mxu0 0.0
        %3632 = vmatprep.subr.mxu0 0.0
        %3633 = vmatpush1.msra.mxu0 0.0
        %3634 = vmatprep.subr.mxu0 0.0
        %3635 = vmatpush1.msra.mxu0 0.0
        %3636 = vmatprep.subr.mxu0 0.0
        %3637 = vmatpush1.msra.mxu0 0.0
        %3638 = vmatprep.subr.mxu0 0.0
        %3639 = vmatpush1.msra.mxu0 0.0
        %3640 = vmatprep.subr.mxu0 0.0
        %3641 = vmatpush1.msra.mxu0 0.0
        %3642 = vmatprep.subr.mxu0 0.0
        %3643 = vmatpush1.msra.mxu0 0.0
        %3644 = vmatprep.subr.mxu0 0.0
        %3645 = vmatpush1.msra.mxu0 0.0
        %3646 = vmatprep.mubr.f32.mxu0 0.0
        %3647 = vmatmul.mubr.f32.gmra.mrb[0].mxu0 %v3577
        %v3648 = vpop.f32.mrb[0].mxu0
        %v3649 = vadd.f32 0.0, %v3648
        %v3650 = vpop.f32.mrb[0].mxu0
        %3651 = vmatprep.mubr.f32.mxu0 0.0
        %3652 = vmatmul.mubr.f32.gmra.mrb[0].mxu0 %v3580
        %v3653 = vpop.f32.mrb[0].mxu0
        %v3654 = vadd.f32 0.0, %v3653
        %v3655 = vpop.f32.mrb[0].mxu0
        %3656 = vdwg.mxu0
        %3657 = vrot.lane.b32.xlu0 %v478, 40
        %v3658 = vpop.permute.xlu0 %3657
        %3659 = vrot.lane.b32.xlu0 %v483, 40
        %v3660 = vpop.permute.xlu0 %3659
        %v3664 = vsel %vm883, %v3393, 0
        %v3667 = vsel %vm883, %v3395, 0
        %3669 = vmatprep.subr.mxu0 0.0
        %3670 = vmatpush1.msra.mxu0 %v3658
        %3671 = vmatprep.subr.mxu0 0.0
        %3672 = vmatpush1.msra.mxu0 %v3660
        %3673 = vmatprep.subr.mxu0 0.0
        %3674 = vmatpush1.msra.mxu0 0.0
        %3675 = vmatprep.subr.mxu0 0.0
        %3676 = vmatpush1.msra.mxu0 0.0
        %3677 = vmatprep.subr.mxu0 0.0
        %3678 = vmatpush1.msra.mxu0 0.0
        %3679 = vmatprep.subr.mxu0 0.0
        %3680 = vmatpush1.msra.mxu0 0.0
        %3681 = vmatprep.subr.mxu0 0.0
        %3682 = vmatpush1.msra.mxu0 0.0
        %3683 = vmatprep.subr.mxu0 0.0
        %3684 = vmatpush1.msra.mxu0 0.0
        %3685 = vmatprep.subr.mxu0 0.0
        %3686 = vmatpush1.msra.mxu0 0.0
        %3687 = vmatprep.subr.mxu0 0.0
        %3688 = vmatpush1.msra.mxu0 0.0
        %3689 = vmatprep.subr.mxu0 0.0
        %3690 = vmatpush1.msra.mxu0 0.0
        %3691 = vmatprep.subr.mxu0 0.0
        %3692 = vmatpush1.msra.mxu0 0.0
        %3693 = vmatprep.subr.mxu0 0.0
        %3694 = vmatpush1.msra.mxu0 0.0
        %3695 = vmatprep.subr.mxu0 0.0
        %3696 = vmatpush1.msra.mxu0 0.0
        %3697 = vmatprep.subr.mxu0 0.0
        %3698 = vmatpush1.msra.mxu0 0.0
        %3699 = vmatprep.subr.mxu0 0.0
        %3700 = vmatpush1.msra.mxu0 0.0
        %3701 = vmatprep.subr.mxu0 0.0
        %3702 = vmatpush1.msra.mxu0 0.0
        %3703 = vmatprep.subr.mxu0 0.0
        %3704 = vmatpush1.msra.mxu0 0.0
        %3705 = vmatprep.subr.mxu0 0.0
        %3706 = vmatpush1.msra.mxu0 0.0
        %3707 = vmatprep.subr.mxu0 0.0
        %3708 = vmatpush1.msra.mxu0 0.0
        %3709 = vmatprep.subr.mxu0 0.0
        %3710 = vmatpush1.msra.mxu0 0.0
        %3711 = vmatprep.subr.mxu0 0.0
        %3712 = vmatpush1.msra.mxu0 0.0
        %3713 = vmatprep.subr.mxu0 0.0
        %3714 = vmatpush1.msra.mxu0 0.0
        %3715 = vmatprep.subr.mxu0 0.0
        %3716 = vmatpush1.msra.mxu0 0.0
        %3717 = vmatprep.subr.mxu0 0.0
        %3718 = vmatpush1.msra.mxu0 0.0
        %3719 = vmatprep.subr.mxu0 0.0
        %3720 = vmatpush1.msra.mxu0 0.0
        %3721 = vmatprep.subr.mxu0 0.0
        %3722 = vmatpush1.msra.mxu0 0.0
        %3723 = vmatprep.subr.mxu0 0.0
        %3724 = vmatpush1.msra.mxu0 0.0
        %3725 = vmatprep.subr.mxu0 0.0
        %3726 = vmatpush1.msra.mxu0 0.0
        %3727 = vmatprep.subr.mxu0 0.0
        %3728 = vmatpush1.msra.mxu0 0.0
        %3729 = vmatprep.subr.mxu0 0.0
        %3730 = vmatpush1.msra.mxu0 0.0
        %3731 = vmatprep.subr.mxu0 0.0
        %3732 = vmatpush1.msra.mxu0 0.0
        %3733 = vmatprep.mubr.f32.mxu0 0.0
        %3734 = vmatmul.mubr.f32.gmra.mrb[0].mxu0 %v3664
        %v3735 = vpop.f32.mrb[0].mxu0
        %v3736 = vadd.f32 0.0, %v3735
        %v3737 = vpop.f32.mrb[0].mxu0
        %3738 = vmatprep.mubr.f32.mxu0 0.0
        %3739 = vmatmul.mubr.f32.gmra.mrb[0].mxu0 %v3667
        %v3740 = vpop.f32.mrb[0].mxu0
        %v3741 = vadd.f32 0.0, %v3740
        %v3742 = vpop.f32.mrb[0].mxu0
        %3743 = vdwg.mxu0
        %3752 = vrot.lane.b32.xlu0 %v1859, 8
        %v3753 = vpop.permute.xlu0 %3752
        %3754 = vrot.lane.b32.xlu0 %v1864, 8
        %v3755 = vpop.permute.xlu0 %3754
        %3756 = vrot.lane.b32.xlu0 %v1946, 8
        %v3757 = vpop.permute.xlu0 %3756
        %3758 = vrot.lane.b32.xlu0 %v1951, 8
        %v3759 = vpop.permute.xlu0 %3758
        %3760 = vrot.lane.b32.xlu0 %v2033, 8
        %v3761 = vpop.permute.xlu0 %3760
        %3762 = vrot.lane.b32.xlu0 %v2038, 8
        %v3763 = vpop.permute.xlu0 %3762
        %3764 = vrot.lane.b32.xlu0 %v2120, 8
        %v3765 = vpop.permute.xlu0 %3764
        %3766 = vrot.lane.b32.xlu0 %v2125, 8
        %v3767 = vpop.permute.xlu0 %3766
        %3784 = vrot.lane.b32.xlu0 %v2667, 16
        %v3785 = vpop.permute.xlu0 %3784
        %3786 = vrot.lane.b32.xlu0 %v2672, 16
        %v3787 = vpop.permute.xlu0 %3786
        %3788 = vrot.lane.b32.xlu0 %v2754, 16
        %v3789 = vpop.permute.xlu0 %3788
        %3790 = vrot.lane.b32.xlu0 %v2759, 16
        %v3791 = vpop.permute.xlu0 %3790
        %3792 = vrot.lane.b32.xlu0 %v2841, 16
        %v3793 = vpop.permute.xlu0 %3792
        %3794 = vrot.lane.b32.xlu0 %v2846, 16
        %v3795 = vpop.permute.xlu0 %3794
        %3796 = vrot.lane.b32.xlu0 %v2928, 16
        %v3797 = vpop.permute.xlu0 %3796
        %3798 = vrot.lane.b32.xlu0 %v2933, 16
        %v3799 = vpop.permute.xlu0 %3798
        %3816 = vrot.lane.b32.xlu0 %v3475, 24
        %v3817 = vpop.permute.xlu0 %3816
        %3818 = vrot.lane.b32.xlu0 %v3480, 24
        %v3819 = vpop.permute.xlu0 %3818
        %3820 = vrot.lane.b32.xlu0 %v3562, 24
        %v3821 = vpop.permute.xlu0 %3820
        %3822 = vrot.lane.b32.xlu0 %v3567, 24
        %v3823 = vpop.permute.xlu0 %3822
        %3824 = vrot.lane.b32.xlu0 %v3649, 24
        %v3825 = vpop.permute.xlu0 %3824
        %3826 = vrot.lane.b32.xlu0 %v3654, 24
        %v3827 = vpop.permute.xlu0 %3826
        %3828 = vrot.lane.b32.xlu0 %v3736, 24
        %v3829 = vpop.permute.xlu0 %3828
        %3830 = vrot.lane.b32.xlu0 %v3741, 24
        %v3831 = vpop.permute.xlu0 %3830
        %v3840 = vsel %vm516, %v1051, %v3753
        %v3841 = vsel %vm516, %v1056, %v3755
        %v3842 = vsel %vm516, %v1138, %v3757
        %v3843 = vsel %vm516, %v1143, %v3759
        %v3844 = vsel %vm516, %v1225, %v3761
        %v3845 = vsel %vm516, %v1230, %v3763
        %v3846 = vsel %vm516, %v1312, %v3765
        %v3847 = vsel %vm516, %v1317, %v3767
        %v3848 = vsel %vm883, %v3840, %v3785
        %v3849 = vsel %vm883, %v3841, %v3787
        %v3850 = vsel %vm883, %v3842, %v3789
        %v3851 = vsel %vm883, %v3843, %v3791
        %v3852 = vsel %vm883, %v3844, %v3793
        %v3853 = vsel %vm883, %v3845, %v3795
        %v3854 = vsel %vm883, %v3846, %v3797
        %v3855 = vsel %vm883, %v3847, %v3799
        %vm3856 = vcmask 195584
        %v3857 = vsel %vm3856, %v3848, %v3817
        %v3858 = vsel %vm3856, %v3849, %v3819
        %v3859 = vsel %vm3856, %v3850, %v3821
        %v3860 = vsel %vm3856, %v3851, %v3823
        %v3861 = vsel %vm3856, %v3852, %v3825
        %v3862 = vsel %vm3856, %v3853, %v3827
        %v3863 = vsel %vm3856, %v3854, %v3829
        %v3864 = vsel %vm3856, %v3855, %v3831
        %v3865 = vld [vmem:[#allocation2] sm:$0xff]
        %v3866 = vld [vmem:[#allocation2 + $0x8] sm:$0xff]
        %v3867 = vld [vmem:[#allocation2 + $0x10] sm:$0xff]
        %v3868 = vld [vmem:[#allocation2 + $0x18] sm:$0xff]
        %v3869 = vld [vmem:[%s4] sm:$0x1]
        %v3871 = vlaneseq
        %v3872 = vshrl.u32 %v3871, 7
        %v3873 = vsub.s32 0, %v3872
        %v3874 = vrot.slane %v3869, %v3873
        %v3877 = vsel %vm356, %v3857, 0
        %v3880 = vsel %vm356, %v3858, 0
        %v3883 = vsel %vm356, %v3859, 0
        %v3886 = vsel %vm356, %v3860, 0
        %v3889 = vsel %vm356, %v3861, 0
        %v3892 = vsel %vm356, %v3862, 0
        %v3895 = vsel %vm356, %v3863, 0
        %v3898 = vsel %vm356, %v3864, 0
        %3900 = vmatprep.subr.mxu0 0.0
        %3901 = vmatpush1.msra.mxu0 %v3865
        %3902 = vmatprep.subr.mxu0 0.0
        %3903 = vmatpush1.msra.mxu0 %v3866
        %3904 = vmatprep.subr.mxu0 0.0
        %3905 = vmatpush1.msra.mxu0 %v3867
        %3906 = vmatprep.subr.mxu0 0.0
        %3907 = vmatpush1.msra.mxu0 %v3868
        %3908 = vmatprep.subr.mxu0 0.0
        %3909 = vmatpush1.msra.mxu0 0.0
        %3910 = vmatprep.subr.mxu0 0.0
        %3911 = vmatpush1.msra.mxu0 0.0
        %3912 = vmatprep.subr.mxu0 0.0
        %3913 = vmatpush1.msra.mxu0 0.0
        %3914 = vmatprep.subr.mxu0 0.0
        %3915 = vmatpush1.msra.mxu0 0.0
        %3916 = vmatprep.subr.mxu0 0.0
        %3917 = vmatpush1.msra.mxu0 0.0
        %3918 = vmatprep.subr.mxu0 0.0
        %3919 = vmatpush1.msra.mxu0 0.0
        %3920 = vmatprep.subr.mxu0 0.0
        %3921 = vmatpush1.msra.mxu0 0.0
        %3922 = vmatprep.subr.mxu0 0.0
        %3923 = vmatpush1.msra.mxu0 0.0
        %3924 = vmatprep.subr.mxu0 0.0
        %3925 = vmatpush1.msra.mxu0 0.0
        %3926 = vmatprep.subr.mxu0 0.0
        %3927 = vmatpush1.msra.mxu0 0.0
        %3928 = vmatprep.subr.mxu0 0.0
        %3929 = vmatpush1.msra.mxu0 0.0
        %3930 = vmatprep.subr.mxu0 0.0
        %3931 = vmatpush1.msra.mxu0 0.0
        %3932 = vmatprep.subr.mxu0 0.0
        %3933 = vmatpush1.msra.mxu0 0.0
        %3934 = vmatprep.subr.mxu0 0.0
        %3935 = vmatpush1.msra.mxu0 0.0
        %3936 = vmatprep.subr.mxu0 0.0
        %3937 = vmatpush1.msra.mxu0 0.0
        %3938 = vmatprep.subr.mxu0 0.0
        %3939 = vmatpush1.msra.mxu0 0.0
        %3940 = vmatprep.subr.mxu0 0.0
        %3941 = vmatpush1.msra.mxu0 0.0
        %3942 = vmatprep.subr.mxu0 0.0
        %3943 = vmatpush1.msra.mxu0 0.0
        %3944 = vmatprep.subr.mxu0 0.0
        %3945 = vmatpush1.msra.mxu0 0.0
        %3946 = vmatprep.subr.mxu0 0.0
        %3947 = vmatpush1.msra.mxu0 0.0
        %3948 = vmatprep.subr.mxu0 0.0
        %3949 = vmatpush1.msra.mxu0 0.0
        %3950 = vmatprep.subr.mxu0 0.0
        %3951 = vmatpush1.msra.mxu0 0.0
        %3952 = vmatprep.subr.mxu0 0.0
        %3953 = vmatpush1.msra.mxu0 0.0
        %3954 = vmatprep.subr.mxu0 0.0
        %3955 = vmatpush1.msra.mxu0 0.0
        %3956 = vmatprep.subr.mxu0 0.0
        %3957 = vmatpush1.msra.mxu0 0.0
        %3958 = vmatprep.subr.mxu0 0.0
        %3959 = vmatpush1.msra.mxu0 0.0
        %3960 = vmatprep.subr.mxu0 0.0
        %3961 = vmatpush1.msra.mxu0 0.0
        %3962 = vmatprep.subr.mxu0 0.0
        %3963 = vmatpush1.msra.mxu0 0.0
        %3964 = vmatprep.mubr.f32.mxu0 0.0
        %3965 = vmatmul.mubr.f32.gmra.mrb[0].mxu0 %v3877
        %v3966 = vpop.f32.mrb[0].mxu0
        %v3967 = vadd.f32 %v3874, %v3966
        %v3968 = vpop.f32.mrb[0].mxu0
        %3969 = vmatprep.mubr.f32.mxu0 0.0
        %3970 = vmatmul.mubr.f32.gmra.mrb[0].mxu0 %v3880
        %v3971 = vpop.f32.mrb[0].mxu0
        %v3972 = vadd.f32 %v3874, %v3971
        %v3973 = vpop.f32.mrb[0].mxu0
        %3974 = vmatprep.mubr.f32.mxu0 0.0
        %3975 = vmatmul.mubr.f32.gmra.mrb[0].mxu0 %v3883
        %v3976 = vpop.f32.mrb[0].mxu0
        %v3977 = vadd.f32 %v3874, %v3976
        %v3978 = vpop.f32.mrb[0].mxu0
        %3979 = vmatprep.mubr.f32.mxu0 0.0
        %3980 = vmatmul.mubr.f32.gmra.mrb[0].mxu0 %v3886
        %v3981 = vpop.f32.mrb[0].mxu0
        %v3982 = vadd.f32 %v3874, %v3981
        %v3983 = vpop.f32.mrb[0].mxu0
        %3984 = vmatprep.mubr.f32.mxu0 0.0
        %3985 = vmatmul.mubr.f32.gmra.mrb[0].mxu0 %v3889
        %v3986 = vpop.f32.mrb[0].mxu0
        %v3987 = vadd.f32 %v3874, %v3986
        %v3988 = vpop.f32.mrb[0].mxu0
        %3989 = vmatprep.mubr.f32.mxu0 0.0
        %3990 = vmatmul.mubr.f32.gmra.mrb[0].mxu0 %v3892
        %v3991 = vpop.f32.mrb[0].mxu0
        %v3992 = vadd.f32 %v3874, %v3991
        %v3993 = vpop.f32.mrb[0].mxu0
        %3994 = vmatprep.mubr.f32.mxu0 0.0
        %3995 = vmatmul.mubr.f32.gmra.mrb[0].mxu0 %v3895
        %v3996 = vpop.f32.mrb[0].mxu0
        %v3997 = vadd.f32 %v3874, %v3996
        %v3998 = vpop.f32.mrb[0].mxu0
        %3999 = vmatprep.mubr.f32.mxu0 0.0
        %4000 = vmatmul.mubr.f32.gmra.mrb[0].mxu0 %v3898
        %v4001 = vpop.f32.mrb[0].mxu0
        %v4002 = vadd.f32 %v3874, %v4001
        %v4003 = vpop.f32.mrb[0].mxu0
        %4004 = vdwg.mxu0
        %4005 = vst.msk [vmem:[%s335] sm:$0xff] %vm356, %v3967
        %4006 = vst.msk [vmem:[%s335 + $0x8] sm:$0xff] %vm356, %v3972
        %4007 = vst.msk [vmem:[%s335 + $0x10] sm:$0xff] %vm356, %v3977
        %4008 = vst.msk [vmem:[%s335 + $0x18] sm:$0xff] %vm356, %v3982
        %4009 = vst.msk [vmem:[%s335 + $0x20] sm:$0xff] %vm356, %v3987
        %4010 = vst.msk [vmem:[%s335 + $0x28] sm:$0xff] %vm356, %v3992
        %4011 = vst.msk [vmem:[%s335 + $0x30] sm:$0xff] %vm356, %v3997
        %4012 = vst.msk [vmem:[%s335 + $0x38] sm:$0xff] %vm356, %v4002
        %s4013 = smul.u32 8, %s20
        %p4014 = scmp.lt.s32.totalorder %s4013, 15
        %s4015 = scalar_select %p4014, %s4013, 15
        %s4016 = smul.addr %s4015, 8
        %s4017 = scalar_lea.vmem %s7, %s4016
        // Predicated region
        $region57: #{tpu_custom_call.1} parent=47 // pred_check
          %p4018 = pneg %p195
        $region58: #{tpu_custom_call.1} parent=47 // pred_check_branch
          %4020 = sbr.rel (%p4018) target = $region60
        $region59: #{tpu_custom_call.1} parent=47 // pred_region
          %s4021 = smul.u32 8, %s20
        $region60: #{tpu_custom_call.1} parent=47 // pred_fallthru
          _
      $region48: #{tpu_custom_call.1} parent=5 // pred_fallthru
        _
      %p4022 = scmp.le.s32.totalorder 2, %s15
      // Predicated region
      $region61: #{tpu_custom_call.1} parent=5 // pred_check
        %p4023 = pneg %p4022
      $region62: #{tpu_custom_call.1} parent=5 // pred_check_branch
        %4025 = sbr.rel (%p4023) target = $region64
      $region63: #{tpu_custom_call.1} parent=5 // pred_region
        %s4026 = ssub.s32 %s15, 2
        // Predicated region
        $region65: #{tpu_custom_call.1} parent=63 // pred_check
          %p4027 = pneg %p201
        $region66: #{tpu_custom_call.1} parent=63 // pred_check_branch
          %4029 = sbr.rel (%p4027) target = $region68
        $region67: #{tpu_custom_call.1} parent=63 // pred_region
          %s4030 = smul.u32 8, %s21
          %p4031 = scmp.lt.s32.totalorder %s4030, 15
          %s4032 = scalar_select %p4031, %s4030, 15
          %s4033 = smul.addr %s4032, 8
          %s4034 = scalar_lea.vmem %s7, %s4033
        $region68: #{tpu_custom_call.1} parent=63 // pred_fallthru
          _
      $region64: #{tpu_custom_call.1} parent=5 // pred_fallthru
        _
    $region6: #{tpu_custom_call.1} parent=1 // loop_footer
      %s19 = sadd.s32 1, %s15
    $region7: #{tpu_custom_call.1} parent=1 // loop_footer_branch
      %14 = sbr.rel target = $region3
    $region8: #{tpu_custom_call.1} parent=1 // loop_exit
      _
    %4035 = vsyncpa [#allocation3], 1
    %s4036 = scalar_lea.sflag [#allocation3], 1
    %4037 = vsyncpa %s4036, 1
    %4038 = vsyncpa [#allocation5], 1

</llo_original>
